<compile_context>
chip_gen: v7x
topology: tpu7x:2x2x1
jax: 0.10.0
libtpu: 0.0.40
codegen_flags: <defaults>
</compile_context>

<pallas_src>
import jax
import jax.numpy as jnp
from jax.experimental import pallas as pl
from jax.experimental.pallas import tpu as pltpu

_PRELU_ALPHA = 0.25   # PyTorch nn.PReLU() default (single shared parameter)
_NC_PAD = 128         # lane-dense padding for the tiny num_classes outputs


# ----------------------------------------------------------------------------
# Fused forward kernel (one grid step == one batch tile of Bt images)
# ----------------------------------------------------------------------------
def _fused_kernel(
    x_ref,                                  # [Bt, C, H*W]       f32
    wcat_ref, bcat_ref,                     # [3, 1536], [1,1536] f32 (stub@fc, concat)
    cw1, cb1, cw2, cb2, cw3, cb3, cw4, cb4,  # classifier (BN folded), w bf16 / b f32
    dw1, db1, dw2, db2, dw3, db3,            # classifier2 (BN folded), w bf16 / b f32
    out_cat_ref,                            # [Bt, 1, 1536]      f32
    heads_ref,                              # [Bt, 1, 512]       f32 (final|p1|p2|p3 x128)
):
    bt = x_ref.shape[0]

    # ---- global average pool (adaptive avg pool to 1x1): lane reduce --------
    feat = jnp.mean(x_ref[...], axis=-1)                           # [Bt, 3]

    # ---- all three backbone-stub + fc branches as one dot -> out_cat --------
    out_cat = (jnp.dot(feat, wcat_ref[...],
                       preferred_element_type=jnp.float32)
               + bcat_ref[...])                                     # [Bt, 1536]
    out_cat_ref[:, 0, :] = out_cat                                  # writeback only

    def prelu(h):
        return jnp.where(h >= 0.0, h, _PRELU_ALPHA * h)

    def linear(h, w_ref, b_ref):
        w = w_ref[...]
        return jnp.dot(h.astype(w.dtype), w,
                       preferred_element_type=jnp.float32) + b_ref[...]

    # ---- classifier: Lin(1536,512) PReLU [BN] Lin(512,256) PReLU [BN]
    #                  Lin(256,64) PReLU Lin(64,nc->128)  (BN folded at init) -
    h = prelu(linear(out_cat, cw1, cb1))
    h = prelu(linear(h, cw2, cb2))
    h = prelu(linear(h, cw3, cb3))
    final = linear(h, cw4, cb4)                                     # [Bt, 128]

    # ---- classifier2 (shared weights) on the batch*branch stacked M dim -----
    s = jnp.concatenate(
        [out_cat[:, 0:512], out_cat[:, 512:1024], out_cat[:, 1024:1536]],
        axis=0)                                                     # [3*Bt, 512]
    g = prelu(linear(s, dw1, db1))
    g = prelu(linear(g, dw2, db2))
    preds = linear(g, dw3, db3)                                     # [3*Bt, 128]

    # one lane-dense head slab: [final | pred1 | pred2 | pred3] (128 lanes each)
    heads = jnp.concatenate(
        [final, preds[0:bt], preds[bt:2 * bt], preds[2 * bt:3 * bt]], axis=1)
    heads_ref[:, 0, :] = heads                                      # [Bt, 512]


# ----------------------------------------------------------------------------
# Deterministic parameter init (PyTorch-style defaults) + exact folds
# ----------------------------------------------------------------------------
def _linear_params(key, in_dim, out_dim):
    kw, kb = jax.random.split(key)
    bound = 1.0 / (in_dim ** 0.5)
    w = jax.random.uniform(kw, (in_dim, out_dim), jnp.float32, -bound, bound)
    b = jax.random.uniform(kb, (1, out_dim), jnp.float32, -bound, bound)
    return w, b


def _bn_eval_scale_shift(dim, eps=1e-5):
    # PyTorch-default eval-mode BatchNorm1d buffers (gamma=1, beta=0, mean=0, var=1).
    gamma = jnp.ones((dim,), jnp.float32)
    beta = jnp.zeros((dim,), jnp.float32)
    mean = jnp.zeros((dim,), jnp.float32)
    var = jnp.ones((dim,), jnp.float32)
    scale = gamma / jnp.sqrt(var + eps)
    shift = beta - mean * scale
    return scale, shift


def _fold_bn_into_next_linear(dim, w_next, b_next):
    # BN(x) @ W + b == x @ (scale[:,None]*W) + (shift @ W + b)   (exact in eval)
    scale, shift = _bn_eval_scale_shift(dim)
    w_f = scale[:, None] * w_next
    b_f = shift[None, :] @ w_next + b_next
    return w_f, b_f


def _pad_head(w, b, nc_pad=_NC_PAD):
    # Zero-pad the tiny num_classes output dim to 128 lanes (lane-dense writes).
    in_dim, nc = w.shape
    w_p = jnp.zeros((in_dim, nc_pad), w.dtype).at[:, :nc].set(w)
    b_p = jnp.zeros((1, nc_pad), b.dtype).at[:, :nc].set(b)
    return w_p, b_p


class EnsembleModelPallas:
    def __init__(self, key, num_classes=2, matmul_dtype=jnp.bfloat16):
        assert num_classes <= _NC_PAD
        ks = jax.random.split(key, 13)
        self.num_classes = num_classes

        # TODO(synk): real torchvision backbones (inception_v3 / efficientnet_v2_s /
        # resnet34) are stubbed by GAP + Linear to the correct feature dims.
        s1w, s1b = _linear_params(ks[0], 3, 2048)
        s2w, s2b = _linear_params(ks[1], 3, 1280)
        s3w, s3b = _linear_params(ks[2], 3, 512)
        f1w, f1b = _linear_params(ks[3], 2048, 512)
        f2w, f2b = _linear_params(ks[4], 1280, 512)
        f3w, f3b = _linear_params(ks[5], 512, 512)
        # stub @ fc composition (exact: no nonlinearity in between)
        bw1, bb1 = s1w @ f1w, s1b @ f1w + f1b                       # [3,512],[1,512]
        bw2, bb2 = s2w @ f2w, s2b @ f2w + f2b
        bw3, bb3 = s3w @ f3w, s3b @ f3w + f3b
        # pre-concatenate the three branches -> one [3,1536] weight / [1,1536] bias
        self.w_cat = jnp.concatenate([bw1, bw2, bw3], axis=1)
        self.b_cat = jnp.concatenate([bb1, bb2, bb3], axis=1)

        # classifier: Flatten, Dropout, Lin(1536,512), PReLU, BN(512),
        #             Lin(512,256), PReLU, BN(256), Lin(256,64), PReLU, Lin(64,nc)
        c1w, c1b = _linear_params(ks[6], 512 * 3, 512)
        c2w, c2b = _linear_params(ks[7], 512, 256)
        c3w, c3b = _linear_params(ks[8], 256, 64)
        c4w, c4b = _linear_params(ks[9], 64, num_classes)
        c2w, c2b = _fold_bn_into_next_linear(512, c2w, c2b)
        c3w, c3b = _fold_bn_into_next_linear(256, c3w, c3b)
        c4w, c4b = _pad_head(c4w, c4b)

        # classifier2: Flatten, Dropout, Lin(512,256), PReLU, BN(256),
        #              Lin(256,64), PReLU, Lin(64,nc)
        d1w, d1b = _linear_params(ks[10], 512, 256)
        d2w, d2b = _linear_params(ks[11], 256, 64)
        d3w, d3b = _linear_params(ks[12], 64, num_classes)
        d2w, d2b = _fold_bn_into_next_linear(256, d2w, d2b)
        d3w, d3b = _pad_head(d3w, d3b)

        cast = lambda w: w.astype(matmul_dtype)   # MXU-native dtype, f32 accum
        self.cls_w = (cast(c1w), cast(c2w), cast(c3w), cast(c4w))
        self.cls_b = (c1b, c2b, c3b, c4b)
        self.cls2_w = (cast(d1w), cast(d2w), cast(d3w))
        self.cls2_b = (d1b, d2b, d3b)

    # ------------------------------------------------------------------------
    def forward(self, x, batch_tile=None):
        B, C, H, W = x.shape
        HW = H * W
        nc = self.num_classes

        # batch tile: whole batch by default; pad batch to a multiple of Bt.
        Bt = int(batch_tile) if batch_tile is not None else B
        Bt = max(1, min(Bt, B))
        Bp = ((B + Bt - 1) // Bt) * Bt

        xr = x.reshape(B, C, HW).astype(jnp.float32)
        if Bp != B:
            xr = jnp.concatenate(
                [xr, jnp.zeros((Bp - B, C, HW), jnp.float32)], axis=0)

        weights = [
            self.w_cat, self.b_cat,
            self.cls_w[0], self.cls_b[0], self.cls_w[1], self.cls_b[1],
            self.cls_w[2], self.cls_b[2], self.cls_w[3], self.cls_b[3],
            self.cls2_w[0], self.cls2_b[0], self.cls2_w[1], self.cls2_b[1],
            self.cls2_w[2], self.cls2_b[2],
        ]

        def resident(shape):
            # constant block index across the batch grid -> DMA'd once,
            # kept VMEM-resident for every grid step.
            return pl.BlockSpec(shape, lambda b, _n=len(shape): (0,) * _n)

        in_specs = [pl.BlockSpec((Bt, C, HW), lambda b: (b, 0, 0))]
        in_specs += [resident(w.shape) for w in weights]

        out_cat_p, heads_p = pl.pallas_call(
            _fused_kernel,
            grid=(Bp // Bt,),
            in_specs=in_specs,
            out_specs=(
                pl.BlockSpec((Bt, 1, 512 * 3), lambda b: (b, 0, 0)),
                pl.BlockSpec((Bt, 1, 4 * _NC_PAD), lambda b: (b, 0, 0)),
            ),
            out_shape=(
                jax.ShapeDtypeStruct((Bp, 1, 512 * 3), jnp.float32),
                jax.ShapeDtypeStruct((Bp, 1, 4 * _NC_PAD), jnp.float32),
            ),
            compiler_params=pltpu.CompilerParams(
                dimension_semantics=("parallel",)),   # batch axis -> 2 TCs on v7x
        )(xr, *weights)

        out_cat = out_cat_p[:B, 0, :]                               # [B, 1536]
        heads = heads_p[:B, 0, :]                                   # [B, 512]
        final_output = heads[:, 0 * _NC_PAD:0 * _NC_PAD + nc]
        pred1 = heads[:, 1 * _NC_PAD:1 * _NC_PAD + nc]
        pred2 = heads[:, 2 * _NC_PAD:2 * _NC_PAD + nc]
        pred3 = heads[:, 3 * _NC_PAD:3 * _NC_PAD + nc]
        # torch .view(1, 512*3, 1, 1) (implies B=1); generalised per-row here.
        combined = out_cat.reshape(B, 512 * 3, 1, 1)
        return final_output, pred1, pred2, pred3, combined


# ----------------------------------------------------------------------------
# Pure-JAX reference (same folded/cast params) for correctness checking
# ----------------------------------------------------------------------------
def _reference_forward(model, x):
    B, C, H, W = x.shape
    nc = model.num_classes
    feat = jnp.mean(x.reshape(B, C, H * W).astype(jnp.float32), axis=-1)  # [B,3]
    out_cat = jnp.dot(feat, model.w_cat,
                      preferred_element_type=jnp.float32) + model.b_cat  # [B,1536]
    out1 = out_cat[:, 0:512]
    out2 = out_cat[:, 512:1024]
    out3 = out_cat[:, 1024:1536]

    prelu = lambda h: jnp.where(h >= 0.0, h, _PRELU_ALPHA * h)
    lin = lambda h, w, b: jnp.dot(h.astype(w.dtype), w,
                                  preferred_element_type=jnp.float32) + b

    h = prelu(lin(out_cat, model.cls_w[0], model.cls_b[0]))
    h = prelu(lin(h, model.cls_w[1], model.cls_b[1]))
    h = prelu(lin(h, model.cls_w[2], model.cls_b[2]))
    final = lin(h, model.cls_w[3], model.cls_b[3])[:, :nc]

    def cls2(o):
        g = prelu(lin(o, model.cls2_w[0], model.cls2_b[0]))
        g = prelu(lin(g, model.cls2_w[1], model.cls2_b[1]))
        return lin(g, model.cls2_w[2], model.cls2_b[2])[:, :nc]

    return (final, cls2(out1), cls2(out2), cls2(out3),
            out_cat.reshape(B, 512 * 3, 1, 1))


# ----------------------------------------------------------------------------
if __name__ == "__main__":
    key = jax.random.PRNGKey(0)
    pkey, xkey, xkey_b = jax.random.split(key, 3)

    num_classes = 2
    model = EnsembleModelPallas(pkey, num_classes=num_classes)

    # ---- faithful case: torch's .view(1, 512*3, 1, 1) implies batch == 1 ----
    x1 = jax.random.normal(xkey, (1, 3, 32, 32), jnp.float32)
    outs = jax.block_until_ready(model.forward(x1))
    final_output, pred1, pred2, pred3, combined = outs

    assert final_output.shape == (1, num_classes)
    assert pred1.shape == (1, num_classes)
    assert pred2.shape == (1, num_classes)
    assert pred3.shape == (1, num_classes)
    assert combined.shape == (1, 512 * 3, 1, 1)
    assert all(bool(jnp.all(jnp.isfinite(o))) for o in outs)

    refs = jax.block_until_ready(_reference_forward(model, x1))
    for got, want in zip(outs, refs):
        assert got.shape == want.shape
        assert bool(jnp.allclose(got, want, rtol=5e-3, atol=5e-3)), (got, want)

    # ---- batched smoke test: grid over the batch, weights VMEM-resident ----
    xb = jax.random.normal(xkey_b, (4, 3, 32, 32), jnp.float32)
    outs_b = jax.block_until_ready(model.forward(xb, batch_tile=2))
    refs_b = jax.block_until_ready(_reference_forward(model, xb))
    for got, want in zip(outs_b, refs_b):
        assert got.shape == want.shape
        assert bool(jnp.all(jnp.isfinite(got)))
        assert bool(jnp.allclose(got, want, rtol=5e-3, atol=5e-3)), (got, want)

    print("KERNEL_OK")
</pallas_src>

<mosaic_0001>
module attributes {stable_mosaic.version = 11 : i64} {
  func.func @_fused_kernel(%arg0: i32, %arg1: memref<1x3x1024xf32, #tpu.memory_space<vmem>>, %arg2: memref<3x1536xf32, #tpu.memory_space<vmem>>, %arg3: memref<1x1536xf32, #tpu.memory_space<vmem>>, %arg4: memref<1536x512xbf16, #tpu.memory_space<vmem>>, %arg5: memref<1x512xf32, #tpu.memory_space<vmem>>, %arg6: memref<512x256xbf16, #tpu.memory_space<vmem>>, %arg7: memref<1x256xf32, #tpu.memory_space<vmem>>, %arg8: memref<256x64xbf16, #tpu.memory_space<vmem>>, %arg9: memref<1x64xf32, #tpu.memory_space<vmem>>, %arg10: memref<64x128xbf16, #tpu.memory_space<vmem>>, %arg11: memref<1x128xf32, #tpu.memory_space<vmem>>, %arg12: memref<512x256xbf16, #tpu.memory_space<vmem>>, %arg13: memref<1x256xf32, #tpu.memory_space<vmem>>, %arg14: memref<256x64xbf16, #tpu.memory_space<vmem>>, %arg15: memref<1x64xf32, #tpu.memory_space<vmem>>, %arg16: memref<64x128xbf16, #tpu.memory_space<vmem>>, %arg17: memref<1x128xf32, #tpu.memory_space<vmem>>, %arg18: memref<1x1x1536xf32, #tpu.memory_space<vmem>>, %arg19: memref<1x1x512xf32, #tpu.memory_space<vmem>>) attributes {dimension_semantics = [#tpu.dimension_semantics<parallel>], iteration_bounds = array<i64: 1>, scalar_prefetch = 0 : i64, scratch_operands = 0 : i64, tpu.core_type = #tpu.core_type<tc>, window_params = [{transform_indices = @transform_0, window_bounds = array<i64: 1, 3, 1024>}, {pipeline_mode = #tpu.pipeline_mode<synchronous>, transform_indices = @transform_1, window_bounds = array<i64: 3, 1536>}, {pipeline_mode = #tpu.pipeline_mode<synchronous>, transform_indices = @transform_2, window_bounds = array<i64: 1, 1536>}, {pipeline_mode = #tpu.pipeline_mode<synchronous>, transform_indices = @transform_3, window_bounds = array<i64: 1536, 512>}, {pipeline_mode = #tpu.pipeline_mode<synchronous>, transform_indices = @transform_4, window_bounds = array<i64: 1, 512>}, {pipeline_mode = #tpu.pipeline_mode<synchronous>, transform_indices = @transform_5, window_bounds = array<i64: 512, 256>}, {pipeline_mode = #tpu.pipeline_mode<synchronous>, transform_indices = @transform_6, window_bounds = array<i64: 1, 256>}, {pipeline_mode = #tpu.pipeline_mode<synchronous>, transform_indices = @transform_7, window_bounds = array<i64: 256, 64>}, {pipeline_mode = #tpu.pipeline_mode<synchronous>, transform_indices = @transform_8, window_bounds = array<i64: 1, 64>}, {pipeline_mode = #tpu.pipeline_mode<synchronous>, transform_indices = @transform_9, window_bounds = array<i64: 64, 128>}, {pipeline_mode = #tpu.pipeline_mode<synchronous>, transform_indices = @transform_10, window_bounds = array<i64: 1, 128>}, {pipeline_mode = #tpu.pipeline_mode<synchronous>, transform_indices = @transform_11, window_bounds = array<i64: 512, 256>}, {pipeline_mode = #tpu.pipeline_mode<synchronous>, transform_indices = @transform_12, window_bounds = array<i64: 1, 256>}, {pipeline_mode = #tpu.pipeline_mode<synchronous>, transform_indices = @transform_13, window_bounds = array<i64: 256, 64>}, {pipeline_mode = #tpu.pipeline_mode<synchronous>, transform_indices = @transform_14, window_bounds = array<i64: 1, 64>}, {pipeline_mode = #tpu.pipeline_mode<synchronous>, transform_indices = @transform_15, window_bounds = array<i64: 64, 128>}, {pipeline_mode = #tpu.pipeline_mode<synchronous>, transform_indices = @transform_16, window_bounds = array<i64: 1, 128>}, {transform_indices = @transform_17, window_bounds = array<i64: 1, 1, 1536>}, {transform_indices = @transform_18, window_bounds = array<i64: 1, 1, 512>}]} {
    %c0 = arith.constant 0 : index
    %c0_0 = arith.constant 0 : index
    %c0_1 = arith.constant 0 : index
    %0 = vector.load %arg1[%c0, %c0_0, %c0_1] : memref<1x3x1024xf32, #tpu.memory_space<vmem>>, vector<1x3x1024xf32>
    %cst = arith.constant dense<0.000000e+00> : vector<1x3xf32>
    %1 = vector.multi_reduction <add>, %0, %cst [2] : vector<1x3x1024xf32> to vector<1x3xf32>
    %cst_2 = arith.constant 1.024000e+03 : f32
    %2 = vector.broadcast %cst_2 : f32 to vector<1x3xf32>
    %3 = arith.divf %1, %2 : vector<1x3xf32>
    %c0_3 = arith.constant 0 : index
    %c0_4 = arith.constant 0 : index
    %4 = vector.load %arg2[%c0_3, %c0_4] : memref<3x1536xf32, #tpu.memory_space<vmem>>, vector<3x1536xf32>
    %cst_5 = arith.constant dense<0.000000e+00> : vector<1x1536xf32>
    %5 = tpu.matmul %3, %4, %cst_5 {dimension_numbers = #tpu.dot_dimension_numbers<[1], [0], [0], [1], [0, 0, 1, 1], [], []>} : vector<1x3xf32>, vector<3x1536xf32>, vector<1x1536xf32> -> vector<1x1536xf32>
    %c0_6 = arith.constant 0 : index
    %c0_7 = arith.constant 0 : index
    %6 = vector.load %arg3[%c0_6, %c0_7] : memref<1x1536xf32, #tpu.memory_space<vmem>>, vector<1x1536xf32>
    %7 = arith.addf %5, %6 : vector<1x1536xf32>
    %c0_8 = arith.constant 0 : index
    %c0_9 = arith.constant 0 : index
    %c0_10 = arith.constant 0 : index
    %8 = vector.load %arg18[%c0_8, %c0_9, %c0_10] : memref<1x1x1536xf32, #tpu.memory_space<vmem>>, vector<1x1x1536xf32>
    %9 = vector.shape_cast %8 : vector<1x1x1536xf32> to vector<1x1536xf32>
    %10 = vector.shape_cast %7 : vector<1x1536xf32> to vector<1x1x1536xf32>
    tpu.vector_store %arg18[%c0_8, %c0_9, %c0_10], %10 {strides = array<i32>} : memref<1x1x1536xf32, #tpu.memory_space<vmem>>, vector<1x1x1536xf32>,
    %c0_11 = arith.constant 0 : index
    %c0_12 = arith.constant 0 : index
    %11 = vector.load %arg4[%c0_11, %c0_12] : memref<1536x512xbf16, #tpu.memory_space<vmem>>, vector<1536x512xbf16>
    %12 = arith.truncf %7 : vector<1x1536xf32> to vector<1x1536xbf16>
    %cst_13 = arith.constant dense<0.000000e+00> : vector<1x512xf32>
    %13 = tpu.matmul %12, %11, %cst_13 {dimension_numbers = #tpu.dot_dimension_numbers<[1], [0], [0], [1], [0, 0, 1, 1], [], []>} : vector<1x1536xbf16>, vector<1536x512xbf16>, vector<1x512xf32> -> vector<1x512xf32>
    %c0_14 = arith.constant 0 : index
    %c0_15 = arith.constant 0 : index
    %14 = vector.load %arg5[%c0_14, %c0_15] : memref<1x512xf32, #tpu.memory_space<vmem>>, vector<1x512xf32>
    %15 = arith.addf %13, %14 : vector<1x512xf32>
    %cst_16 = arith.constant 0.000000e+00 : f32
    %16 = vector.broadcast %cst_16 : f32 to vector<1x512xf32>
    %17 = arith.cmpf oge, %15, %16 : vector<1x512xf32>
    %cst_17 = arith.constant 2.500000e-01 : f32
    %18 = vector.broadcast %cst_17 : f32 to vector<1x512xf32>
    %19 = arith.mulf %18, %15 : vector<1x512xf32>
    %20 = arith.select %17, %15, %19 : vector<1x512xi1>, vector<1x512xf32>
    %c0_18 = arith.constant 0 : index
    %c0_19 = arith.constant 0 : index
    %21 = vector.load %arg6[%c0_18, %c0_19] : memref<512x256xbf16, #tpu.memory_space<vmem>>, vector<512x256xbf16>
    %22 = arith.truncf %20 : vector<1x512xf32> to vector<1x512xbf16>
    %cst_20 = arith.constant dense<0.000000e+00> : vector<1x256xf32>
    %23 = tpu.matmul %22, %21, %cst_20 {dimension_numbers = #tpu.dot_dimension_numbers<[1], [0], [0], [1], [0, 0, 1, 1], [], []>} : vector<1x512xbf16>, vector<512x256xbf16>, vector<1x256xf32> -> vector<1x256xf32>
    %c0_21 = arith.constant 0 : index
    %c0_22 = arith.constant 0 : index
    %24 = vector.load %arg7[%c0_21, %c0_22] : memref<1x256xf32, #tpu.memory_space<vmem>>, vector<1x256xf32>
    %25 = arith.addf %23, %24 : vector<1x256xf32>
    %cst_23 = arith.constant 0.000000e+00 : f32
    %26 = vector.broadcast %cst_23 : f32 to vector<1x256xf32>
    %27 = arith.cmpf oge, %25, %26 : vector<1x256xf32>
    %cst_24 = arith.constant 2.500000e-01 : f32
    %28 = vector.broadcast %cst_24 : f32 to vector<1x256xf32>
    %29 = arith.mulf %28, %25 : vector<1x256xf32>
    %30 = arith.select %27, %25, %29 : vector<1x256xi1>, vector<1x256xf32>
    %c0_25 = arith.constant 0 : index
    %c0_26 = arith.constant 0 : index
    %31 = vector.load %arg8[%c0_25, %c0_26] : memref<256x64xbf16, #tpu.memory_space<vmem>>, vector<256x64xbf16>
    %32 = arith.truncf %30 : vector<1x256xf32> to vector<1x256xbf16>
    %cst_27 = arith.constant dense<0.000000e+00> : vector<1x64xf32>
    %33 = tpu.matmul %32, %31, %cst_27 {dimension_numbers = #tpu.dot_dimension_numbers<[1], [0], [0], [1], [0, 0, 1, 1], [], []>} : vector<1x256xbf16>, vector<256x64xbf16>, vector<1x64xf32> -> vector<1x64xf32>
    %c0_28 = arith.constant 0 : index
    %c0_29 = arith.constant 0 : index
    %34 = vector.load %arg9[%c0_28, %c0_29] : memref<1x64xf32, #tpu.memory_space<vmem>>, vector<1x64xf32>
    %35 = arith.addf %33, %34 : vector<1x64xf32>
    %cst_30 = arith.constant 0.000000e+00 : f32
    %36 = vector.broadcast %cst_30 : f32 to vector<1x64xf32>
    %37 = arith.cmpf oge, %35, %36 : vector<1x64xf32>
    %cst_31 = arith.constant 2.500000e-01 : f32
    %38 = vector.broadcast %cst_31 : f32 to vector<1x64xf32>
    %39 = arith.mulf %38, %35 : vector<1x64xf32>
    %40 = arith.select %37, %35, %39 : vector<1x64xi1>, vector<1x64xf32>
    %c0_32 = arith.constant 0 : index
    %c0_33 = arith.constant 0 : index
    %41 = vector.load %arg10[%c0_32, %c0_33] : memref<64x128xbf16, #tpu.memory_space<vmem>>, vector<64x128xbf16>
    %42 = arith.truncf %40 : vector<1x64xf32> to vector<1x64xbf16>
    %cst_34 = arith.constant dense<0.000000e+00> : vector<1x128xf32>
    %43 = tpu.matmul %42, %41, %cst_34 {dimension_numbers = #tpu.dot_dimension_numbers<[1], [0], [0], [1], [0, 0, 1, 1], [], []>} : vector<1x64xbf16>, vector<64x128xbf16>, vector<1x128xf32> -> vector<1x128xf32>
    %c0_35 = arith.constant 0 : index
    %c0_36 = arith.constant 0 : index
    %44 = vector.load %arg11[%c0_35, %c0_36] : memref<1x128xf32, #tpu.memory_space<vmem>>, vector<1x128xf32>
    %45 = arith.addf %43, %44 : vector<1x128xf32>
    %46 = vector.extract_strided_slice %7 {offsets = [0, 0], sizes = [1, 512], strides = [1, 1]} : vector<1x1536xf32> to vector<1x512xf32>
    %47 = vector.extract_strided_slice %7 {offsets = [0, 512], sizes = [1, 512], strides = [1, 1]} : vector<1x1536xf32> to vector<1x512xf32>
    %48 = vector.extract_strided_slice %7 {offsets = [0, 1024], sizes = [1, 512], strides = [1, 1]} : vector<1x1536xf32> to vector<1x512xf32>
    %49 = tpu.concatenate %46, %47, %48 in 0 : vector<1x512xf32>, vector<1x512xf32>, vector<1x512xf32> -> vector<3x512xf32>
    %c0_37 = arith.constant 0 : index
    %c0_38 = arith.constant 0 : index
    %50 = vector.load %arg12[%c0_37, %c0_38] : memref<512x256xbf16, #tpu.memory_space<vmem>>, vector<512x256xbf16>
    %51 = arith.truncf %49 : vector<3x512xf32> to vector<3x512xbf16>
    %cst_39 = arith.constant dense<0.000000e+00> : vector<3x256xf32>
    %52 = tpu.matmul %51, %50, %cst_39 {dimension_numbers = #tpu.dot_dimension_numbers<[1], [0], [0], [1], [0, 0, 1, 1], [], []>} : vector<3x512xbf16>, vector<512x256xbf16>, vector<3x256xf32> -> vector<3x256xf32>
    %c0_40 = arith.constant 0 : index
    %c0_41 = arith.constant 0 : index
    %53 = vector.load %arg13[%c0_40, %c0_41] : memref<1x256xf32, #tpu.memory_space<vmem>>, vector<1x256xf32>
    %54 = vector.broadcast %53 : vector<1x256xf32> to vector<3x256xf32>
    %55 = arith.addf %52, %54 : vector<3x256xf32>
    %cst_42 = arith.constant 0.000000e+00 : f32
    %56 = vector.broadcast %cst_42 : f32 to vector<3x256xf32>
    %57 = arith.cmpf oge, %55, %56 : vector<3x256xf32>
    %cst_43 = arith.constant 2.500000e-01 : f32
    %58 = vector.broadcast %cst_43 : f32 to vector<3x256xf32>
    %59 = arith.mulf %58, %55 : vector<3x256xf32>
    %60 = arith.select %57, %55, %59 : vector<3x256xi1>, vector<3x256xf32>
    %c0_44 = arith.constant 0 : index
    %c0_45 = arith.constant 0 : index
    %61 = vector.load %arg14[%c0_44, %c0_45] : memref<256x64xbf16, #tpu.memory_space<vmem>>, vector<256x64xbf16>
    %62 = arith.truncf %60 : vector<3x256xf32> to vector<3x256xbf16>
    %cst_46 = arith.constant dense<0.000000e+00> : vector<3x64xf32>
    %63 = tpu.matmul %62, %61, %cst_46 {dimension_numbers = #tpu.dot_dimension_numbers<[1], [0], [0], [1], [0, 0, 1, 1], [], []>} : vector<3x256xbf16>, vector<256x64xbf16>, vector<3x64xf32> -> vector<3x64xf32>
    %c0_47 = arith.constant 0 : index
    %c0_48 = arith.constant 0 : index
    %64 = vector.load %arg15[%c0_47, %c0_48] : memref<1x64xf32, #tpu.memory_space<vmem>>, vector<1x64xf32>
    %65 = vector.broadcast %64 : vector<1x64xf32> to vector<3x64xf32>
    %66 = arith.addf %63, %65 : vector<3x64xf32>
    %cst_49 = arith.constant 0.000000e+00 : f32
    %67 = vector.broadcast %cst_49 : f32 to vector<3x64xf32>
    %68 = arith.cmpf oge, %66, %67 : vector<3x64xf32>
    %cst_50 = arith.constant 2.500000e-01 : f32
    %69 = vector.broadcast %cst_50 : f32 to vector<3x64xf32>
    %70 = arith.mulf %69, %66 : vector<3x64xf32>
    %71 = arith.select %68, %66, %70 : vector<3x64xi1>, vector<3x64xf32>
    %c0_51 = arith.constant 0 : index
    %c0_52 = arith.constant 0 : index
    %72 = vector.load %arg16[%c0_51, %c0_52] : memref<64x128xbf16, #tpu.memory_space<vmem>>, vector<64x128xbf16>
    %73 = arith.truncf %71 : vector<3x64xf32> to vector<3x64xbf16>
    %cst_53 = arith.constant dense<0.000000e+00> : vector<3x128xf32>
    %74 = tpu.matmul %73, %72, %cst_53 {dimension_numbers = #tpu.dot_dimension_numbers<[1], [0], [0], [1], [0, 0, 1, 1], [], []>} : vector<3x64xbf16>, vector<64x128xbf16>, vector<3x128xf32> -> vector<3x128xf32>
    %c0_54 = arith.constant 0 : index
    %c0_55 = arith.constant 0 : index
    %75 = vector.load %arg17[%c0_54, %c0_55] : memref<1x128xf32, #tpu.memory_space<vmem>>, vector<1x128xf32>
    %76 = vector.broadcast %75 : vector<1x128xf32> to vector<3x128xf32>
    %77 = arith.addf %74, %76 : vector<3x128xf32>
    %78 = vector.extract_strided_slice %77 {offsets = [0, 0], sizes = [1, 128], strides = [1, 1]} : vector<3x128xf32> to vector<1x128xf32>
    %79 = vector.extract_strided_slice %77 {offsets = [1, 0], sizes = [1, 128], strides = [1, 1]} : vector<3x128xf32> to vector<1x128xf32>
    %80 = vector.extract_strided_slice %77 {offsets = [2, 0], sizes = [1, 128], strides = [1, 1]} : vector<3x128xf32> to vector<1x128xf32>
    %81 = tpu.concatenate %45, %78, %79, %80 in 1 : vector<1x128xf32>, vector<1x128xf32>, vector<1x128xf32>, vector<1x128xf32> -> vector<1x512xf32>
    %c0_56 = arith.constant 0 : index
    %c0_57 = arith.constant 0 : index
    %c0_58 = arith.constant 0 : index
    %82 = vector.load %arg19[%c0_56, %c0_57, %c0_58] : memref<1x1x512xf32, #tpu.memory_space<vmem>>, vector<1x1x512xf32>
    %83 = vector.shape_cast %82 : vector<1x1x512xf32> to vector<1x512xf32>
    %84 = vector.shape_cast %81 : vector<1x512xf32> to vector<1x1x512xf32>
    tpu.vector_store %arg19[%c0_56, %c0_57, %c0_58], %84 {strides = array<i32>} : memref<1x1x512xf32, #tpu.memory_space<vmem>>, vector<1x1x512xf32>,
    return
  }
  func.func @transform_0(%arg0: i32) -> (i32, i32, i32) {
    %c0_i32 = arith.constant 0 : i32
    %c0_i32_0 = arith.constant 0 : i32
    %c0_i32_1 = arith.constant 0 : i32
    return %arg0, %c0_i32, %c0_i32_0 : i32, i32, i32
  }
  func.func @transform_1(%arg0: i32) -> (i32, i32) {
    %c0_i32 = arith.constant 0 : i32
    %c0_i32_0 = arith.constant 0 : i32
    %c0_i32_1 = arith.constant 0 : i32
    return %c0_i32, %c0_i32_0 : i32, i32
  }
  func.func @transform_2(%arg0: i32) -> (i32, i32) {
    %c0_i32 = arith.constant 0 : i32
    %c0_i32_0 = arith.constant 0 : i32
    %c0_i32_1 = arith.constant 0 : i32
    return %c0_i32, %c0_i32_0 : i32, i32
  }
  func.func @transform_3(%arg0: i32) -> (i32, i32) {
    %c0_i32 = arith.constant 0 : i32
    %c0_i32_0 = arith.constant 0 : i32
    %c0_i32_1 = arith.constant 0 : i32
    return %c0_i32, %c0_i32_0 : i32, i32
  }
  func.func @transform_4(%arg0: i32) -> (i32, i32) {
    %c0_i32 = arith.constant 0 : i32
    %c0_i32_0 = arith.constant 0 : i32
    %c0_i32_1 = arith.constant 0 : i32
    return %c0_i32, %c0_i32_0 : i32, i32
  }
  func.func @transform_5(%arg0: i32) -> (i32, i32) {
    %c0_i32 = arith.constant 0 : i32
    %c0_i32_0 = arith.constant 0 : i32
    %c0_i32_1 = arith.constant 0 : i32
    return %c0_i32, %c0_i32_0 : i32, i32
  }
  func.func @transform_6(%arg0: i32) -> (i32, i32) {
    %c0_i32 = arith.constant 0 : i32
    %c0_i32_0 = arith.constant 0 : i32
    %c0_i32_1 = arith.constant 0 : i32
    return %c0_i32, %c0_i32_0 : i32, i32
  }
  func.func @transform_7(%arg0: i32) -> (i32, i32) {
    %c0_i32 = arith.constant 0 : i32
    %c0_i32_0 = arith.constant 0 : i32
    %c0_i32_1 = arith.constant 0 : i32
    return %c0_i32, %c0_i32_0 : i32, i32
  }
  func.func @transform_8(%arg0: i32) -> (i32, i32) {
    %c0_i32 = arith.constant 0 : i32
    %c0_i32_0 = arith.constant 0 : i32
    %c0_i32_1 = arith.constant 0 : i32
    return %c0_i32, %c0_i32_0 : i32, i32
  }
  func.func @transform_9(%arg0: i32) -> (i32, i32) {
    %c0_i32 = arith.constant 0 : i32
    %c0_i32_0 = arith.constant 0 : i32
    %c0_i32_1 = arith.constant 0 : i32
    return %c0_i32, %c0_i32_0 : i32, i32
  }
  func.func @transform_10(%arg0: i32) -> (i32, i32) {
    %c0_i32 = arith.constant 0 : i32
    %c0_i32_0 = arith.constant 0 : i32
    %c0_i32_1 = arith.constant 0 : i32
    return %c0_i32, %c0_i32_0 : i32, i32
  }
  func.func @transform_11(%arg0: i32) -> (i32, i32) {
    %c0_i32 = arith.constant 0 : i32
    %c0_i32_0 = arith.constant 0 : i32
    %c0_i32_1 = arith.constant 0 : i32
    return %c0_i32, %c0_i32_0 : i32, i32
  }
  func.func @transform_12(%arg0: i32) -> (i32, i32) {
    %c0_i32 = arith.constant 0 : i32
    %c0_i32_0 = arith.constant 0 : i32
    %c0_i32_1 = arith.constant 0 : i32
    return %c0_i32, %c0_i32_0 : i32, i32
  }
  func.func @transform_13(%arg0: i32) -> (i32, i32) {
    %c0_i32 = arith.constant 0 : i32
    %c0_i32_0 = arith.constant 0 : i32
    %c0_i32_1 = arith.constant 0 : i32
    return %c0_i32, %c0_i32_0 : i32, i32
  }
  func.func @transform_14(%arg0: i32) -> (i32, i32) {
    %c0_i32 = arith.constant 0 : i32
    %c0_i32_0 = arith.constant 0 : i32
    %c0_i32_1 = arith.constant 0 : i32
    return %c0_i32, %c0_i32_0 : i32, i32
  }
  func.func @transform_15(%arg0: i32) -> (i32, i32) {
    %c0_i32 = arith.constant 0 : i32
    %c0_i32_0 = arith.constant 0 : i32
    %c0_i32_1 = arith.constant 0 : i32
    return %c0_i32, %c0_i32_0 : i32, i32
  }
  func.func @transform_16(%arg0: i32) -> (i32, i32) {
    %c0_i32 = arith.constant 0 : i32
    %c0_i32_0 = arith.constant 0 : i32
    %c0_i32_1 = arith.constant 0 : i32
    return %c0_i32, %c0_i32_0 : i32, i32
  }
  func.func @transform_17(%arg0: i32) -> (i32, i32, i32) {
    %c0_i32 = arith.constant 0 : i32
    %c0_i32_0 = arith.constant 0 : i32
    %c0_i32_1 = arith.constant 0 : i32
    return %arg0, %c0_i32, %c0_i32_0 : i32, i32, i32
  }
  func.func @transform_18(%arg0: i32) -> (i32, i32, i32) {
    %c0_i32 = arith.constant 0 : i32
    %c0_i32_0 = arith.constant 0 : i32
    %c0_i32_1 = arith.constant 0 : i32
    return %arg0, %c0_i32, %c0_i32_0 : i32, i32, i32
  }
}

</mosaic_0001>

<llo_original>
// kernel: tpu_custom_call.1
$region0: #{tpu_custom_call.1}
  #allocation0 [shape = 'u32[]', space=smem, size = 0x4, offset = 0x4, fixed_abs, tag = 'smem constant byte address 0x4 - core index']
  #allocation1 [shape = 'u32[144,128]{1,0:T(1,128)}', space=vmem, size = 0x12000, scoped, tag = 'internal scratch']
  %s0 = inlined_call_operand.vmem [shape: f32[1,3,1024], index: 0, kind: input, shape index: {}]
  %s1 = inlined_call_operand.hbm [shape: f32[3,1536], index: 1, kind: input, shape index: {}]
  %s2 = inlined_call_operand.hbm [shape: f32[1,1536], index: 2, kind: input, shape index: {}]
  %s3 = inlined_call_operand.hbm [shape: bf16[1536,512], index: 3, kind: input, shape index: {}]
  %s4 = inlined_call_operand.hbm [shape: f32[1,512], index: 4, kind: input, shape index: {}]
  %s5 = inlined_call_operand.hbm [shape: bf16[512,256], index: 5, kind: input, shape index: {}]
  %s6 = inlined_call_operand.hbm [shape: f32[1,256], index: 6, kind: input, shape index: {}]
  %s7 = inlined_call_operand.vmem [shape: bf16[256,64], index: 7, kind: input, shape index: {}]
  %s8 = inlined_call_operand.hbm [shape: f32[1,64], index: 8, kind: input, shape index: {}]
  %s9 = inlined_call_operand.hbm [shape: bf16[64,128], index: 9, kind: input, shape index: {}]
  %s10 = inlined_call_operand.hbm [shape: f32[1,128], index: 10, kind: input, shape index: {}]
  %s11 = inlined_call_operand.hbm [shape: bf16[512,256], index: 11, kind: input, shape index: {}]
  %s12 = inlined_call_operand.hbm [shape: f32[1,256], index: 12, kind: input, shape index: {}]
  %s13 = inlined_call_operand.vmem [shape: bf16[256,64], index: 13, kind: input, shape index: {}]
  %s14 = inlined_call_operand.hbm [shape: f32[1,64], index: 14, kind: input, shape index: {}]
  %s15 = inlined_call_operand.hbm [shape: bf16[64,128], index: 15, kind: input, shape index: {}]
  %s16 = inlined_call_operand.hbm [shape: f32[1,128], index: 16, kind: input, shape index: {}]
  %s17 = inlined_call_operand.hbm [shape: f32[1,1,1536], index: 17, kind: output, shape index: {0}]
  %s18 = inlined_call_operand.hbm [shape: f32[1,1,512], index: 18, kind: output, shape index: {1}]
  %19 = xla_tuple %s17, %s18
  %s20 = sld [smem:[#allocation0]]
  $region142: #{tpu_custom_call.1} parent=0
    _
  %s22 = ssub.s32 1, %s20
  %s23 = scalar_select 0, %s22, %s20
  $region1: #{tpu_custom_call.1} parent=0
    #allocation2 [shape = 'u8[24576]{0}', space=vmem, size = 0x6000, scoped, tag = 'input window, operand 1, single buffered']
    #allocation3 [shape = 's32[1]{0}', space=sflag, size = 0x4, scoped, tag = 'scoped memory for tpu_custom_call.1']
    #allocation4 [shape = 's32[1]{0}', space=sflag, size = 0x4, scoped, tag = 'scoped memory for tpu_custom_call.1']
    #allocation5 [shape = 'u8[6144]{0}', space=vmem, size = 0x1800, scoped, tag = 'input window, operand 2, single buffered']
    #allocation6 [shape = 's32[1]{0}', space=sflag, size = 0x4, scoped, tag = 'scoped memory for tpu_custom_call.1']
    #allocation7 [shape = 'u8[1572864]{0}', space=vmem, size = 0x180000, scoped, tag = 'input window, operand 3, single buffered']
    #allocation8 [shape = 'u8[2048]{0}', space=vmem, size = 0x800, scoped, tag = 'input window, operand 4, single buffered']
    #allocation9 [shape = 's32[1]{0}', space=sflag, size = 0x4, scoped, tag = 'scoped memory for tpu_custom_call.1']
    #allocation10 [shape = 'u8[262144]{0}', space=vmem, size = 0x40000, scoped, tag = 'input window, operand 5, single buffered']
    #allocation11 [shape = 'u8[1024]{0}', space=vmem, size = 0x400, scoped, tag = 'input window, operand 6, single buffered']
    #allocation12 [shape = 's32[1]{0}', space=sflag, size = 0x4, scoped, tag = 'scoped memory for tpu_custom_call.1']
    #allocation13 [shape = 'u8[512]{0}', space=vmem, size = 0x400, scoped, tag = 'input window, operand 8, single buffered']
    #allocation14 [shape = 'u8[16384]{0}', space=vmem, size = 0x4000, scoped, tag = 'input window, operand 9, single buffered']
    #allocation15 [shape = 's32[1]{0}', space=sflag, size = 0x4, scoped, tag = 'scoped memory for tpu_custom_call.1']
    #allocation16 [shape = 'u8[512]{0}', space=vmem, size = 0x400, scoped, tag = 'input window, operand 10, single buffered']
    #allocation17 [shape = 'u8[262144]{0}', space=vmem, size = 0x40000, scoped, tag = 'input window, operand 11, single buffered']
    #allocation18 [shape = 's32[1]{0}', space=sflag, size = 0x4, scoped, tag = 'scoped memory for tpu_custom_call.1']
    #allocation19 [shape = 'u8[1024]{0}', space=vmem, size = 0x400, scoped, tag = 'input window, operand 12, single buffered']
    #allocation20 [shape = 'u8[512]{0}', space=vmem, size = 0x400, scoped, tag = 'input window, operand 14, single buffered']
    #allocation21 [shape = 's32[1]{0}', space=sflag, size = 0x4, scoped, tag = 'scoped memory for tpu_custom_call.1']
    #allocation22 [shape = 'u8[16384]{0}', space=vmem, size = 0x4000, scoped, tag = 'input window, operand 15, single buffered']
    #allocation23 [shape = 'u8[512]{0}', space=vmem, size = 0x400, scoped, tag = 'input window, operand 16, single buffered']
    #allocation24 [shape = 's32[1]{0}', space=sflag, size = 0x4, scoped, tag = 'scoped memory for tpu_custom_call.1']
    #allocation25 [shape = 'u8[6144]{0}', space=vmem, size = 0x1800, scoped, tag = 'output window, operand 0, single buffered']
    #allocation26 [shape = 'u8[2048]{0}', space=vmem, size = 0x800, scoped, tag = 'output window, operand 1, single buffered']
    #allocation27 [shape = 's32[1]{0}', space=sflag, size = 0x4, scoped, tag = 'scoped memory for tpu_custom_call.1']
    %24 = vsyncpa [#allocation3], 0
    %25 = vsyncpa [#allocation6], 0
    %26 = vsyncpa [#allocation9], 0
    %27 = vsyncpa [#allocation12], 0
    %28 = vsyncpa [#allocation15], 0
    %29 = vsyncpa [#allocation18], 0
    %30 = vsyncpa [#allocation21], 0
    %31 = vsyncpa [#allocation24], 0
    %32 = vsyncpa [#allocation4], 0
    %33 = vsyncpa [#allocation27], 0
    // Predicated region
    $region2: #{tpu_custom_call.1} parent=1 // pred_check
      _
    $region3: #{tpu_custom_call.1} parent=1 // pred_check_branch
      %35 = sbr.rel (0) target = $region5
    $region4: #{tpu_custom_call.1} parent=1 // pred_region
      _
    $region5: #{tpu_custom_call.1} parent=1 // pred_fallthru
      _
    // Predicated region
    $region6: #{tpu_custom_call.1} parent=1 // pred_check
      _
    $region7: #{tpu_custom_call.1} parent=1 // pred_check_branch
      %37 = sbr.rel (0) target = $region9
    $region8: #{tpu_custom_call.1} parent=1 // pred_region
      %s39 = ssub.s32 768, 768
      %40 = vsyncadd [#allocation3], %s39
      %s42 = sshll.u32 [#allocation2], 4
      %s43 = int_to_ptr.vmem [resolvable:$true] %s42
      %45 = dma.hbm_to_vmem [thread:$0]  %s1, 768, %s43, [#allocation3]
    $region9: #{tpu_custom_call.1} parent=1 // pred_fallthru
      _
    // Predicated region
    $region10: #{tpu_custom_call.1} parent=1 // pred_check
      _
    $region11: #{tpu_custom_call.1} parent=1 // pred_check_branch
      %47 = sbr.rel (0) target = $region13
    $region12: #{tpu_custom_call.1} parent=1 // pred_region
      %s49 = ssub.s32 192, 192
      %50 = vsyncadd [#allocation6], %s49
      %s52 = sshll.u32 [#allocation5], 4
      %s53 = int_to_ptr.vmem [resolvable:$true] %s52
      %55 = dma.hbm_to_vmem [thread:$0]  %s2, 192, %s53, [#allocation6]
    $region13: #{tpu_custom_call.1} parent=1 // pred_fallthru
      _
    // Predicated region
    $region14: #{tpu_custom_call.1} parent=1 // pred_check
      _
    $region15: #{tpu_custom_call.1} parent=1 // pred_check_branch
      %57 = sbr.rel (0) target = $region17
    $region16: #{tpu_custom_call.1} parent=1 // pred_region
      %s59 = ssub.s32 49152, 49152
      %60 = vsyncadd [#allocation6], %s59
      %s61 = sshll.u32 [#allocation7], 4
      %s62 = int_to_ptr.vmem [resolvable:$true] %s61
      %67 = dma.hbm_to_vmem [thread:$0]  %s3, 49152, %s62, [#allocation6], 256, 256, 16
    $region17: #{tpu_custom_call.1} parent=1 // pred_fallthru
      _
    // Predicated region
    $region18: #{tpu_custom_call.1} parent=1 // pred_check
      _
    $region19: #{tpu_custom_call.1} parent=1 // pred_check_branch
      %69 = sbr.rel (0) target = $region21
    $region20: #{tpu_custom_call.1} parent=1 // pred_region
      %s71 = ssub.s32 64, 64
      %72 = vsyncadd [#allocation9], %s71
      %s74 = sshll.u32 [#allocation8], 4
      %s75 = int_to_ptr.vmem [resolvable:$true] %s74
      %77 = dma.hbm_to_vmem [thread:$0]  %s4, 64, %s75, [#allocation9]
    $region21: #{tpu_custom_call.1} parent=1 // pred_fallthru
      _
    // Predicated region
    $region22: #{tpu_custom_call.1} parent=1 // pred_check
      _
    $region23: #{tpu_custom_call.1} parent=1 // pred_check_branch
      %79 = sbr.rel (0) target = $region25
    $region24: #{tpu_custom_call.1} parent=1 // pred_region
      %s81 = ssub.s32 8192, 8192
      %82 = vsyncadd [#allocation9], %s81
      %s83 = sshll.u32 [#allocation10], 4
      %s84 = int_to_ptr.vmem [resolvable:$true] %s83
      %89 = dma.hbm_to_vmem [thread:$0]  %s5, 8192, %s84, [#allocation9], 128, 128, 8
    $region25: #{tpu_custom_call.1} parent=1 // pred_fallthru
      _
    // Predicated region
    $region26: #{tpu_custom_call.1} parent=1 // pred_check
      _
    $region27: #{tpu_custom_call.1} parent=1 // pred_check_branch
      %91 = sbr.rel (0) target = $region29
    $region28: #{tpu_custom_call.1} parent=1 // pred_region
      %s93 = ssub.s32 32, 32
      %94 = vsyncadd [#allocation12], %s93
      %s96 = sshll.u32 [#allocation11], 4
      %s97 = int_to_ptr.vmem [resolvable:$true] %s96
      %99 = dma.hbm_to_vmem [thread:$0]  %s6, 32, %s97, [#allocation12]
    $region29: #{tpu_custom_call.1} parent=1 // pred_fallthru
      _
    // Predicated region
    $region30: #{tpu_custom_call.1} parent=1 // pred_check
      _
    $region31: #{tpu_custom_call.1} parent=1 // pred_check_branch
      %101 = sbr.rel (0) target = $region33
    $region32: #{tpu_custom_call.1} parent=1 // pred_region
      _
    $region33: #{tpu_custom_call.1} parent=1 // pred_fallthru
      _
    // Predicated region
    $region34: #{tpu_custom_call.1} parent=1 // pred_check
      _
    $region35: #{tpu_custom_call.1} parent=1 // pred_check_branch
      %103 = sbr.rel (0) target = $region37
    $region36: #{tpu_custom_call.1} parent=1 // pred_region
      %s105 = ssub.s32 16, 16
      %106 = vsyncadd [#allocation12], %s105
      %s108 = sshll.u32 [#allocation13], 4
      %s109 = int_to_ptr.vmem [resolvable:$true] %s108
      %111 = dma.hbm_to_vmem [thread:$0]  %s8, 16, %s109, [#allocation12]
    $region37: #{tpu_custom_call.1} parent=1 // pred_fallthru
      _
    // Predicated region
    $region38: #{tpu_custom_call.1} parent=1 // pred_check
      _
    $region39: #{tpu_custom_call.1} parent=1 // pred_check_branch
      %113 = sbr.rel (0) target = $region41
    $region40: #{tpu_custom_call.1} parent=1 // pred_region
      %s115 = ssub.s32 512, 512
      %116 = vsyncadd [#allocation15], %s115
      %s117 = sshll.u32 [#allocation14], 4
      %s118 = int_to_ptr.vmem [resolvable:$true] %s117
      %123 = dma.hbm_to_vmem [thread:$0]  %s9, 512, %s118, [#allocation15], 64, 64, 4
    $region41: #{tpu_custom_call.1} parent=1 // pred_fallthru
      _
    // Predicated region
    $region42: #{tpu_custom_call.1} parent=1 // pred_check
      _
    $region43: #{tpu_custom_call.1} parent=1 // pred_check_branch
      %125 = sbr.rel (0) target = $region45
    $region44: #{tpu_custom_call.1} parent=1 // pred_region
      %s127 = ssub.s32 16, 16
      %128 = vsyncadd [#allocation15], %s127
      %s130 = sshll.u32 [#allocation16], 4
      %s131 = int_to_ptr.vmem [resolvable:$true] %s130
      %133 = dma.hbm_to_vmem [thread:$0]  %s10, 16, %s131, [#allocation15]
    $region45: #{tpu_custom_call.1} parent=1 // pred_fallthru
      _
    // Predicated region
    $region46: #{tpu_custom_call.1} parent=1 // pred_check
      _
    $region47: #{tpu_custom_call.1} parent=1 // pred_check_branch
      %135 = sbr.rel (0) target = $region49
    $region48: #{tpu_custom_call.1} parent=1 // pred_region
      %s137 = ssub.s32 8192, 8192
      %138 = vsyncadd [#allocation18], %s137
      %s139 = sshll.u32 [#allocation17], 4
      %s140 = int_to_ptr.vmem [resolvable:$true] %s139
      %145 = dma.hbm_to_vmem [thread:$0]  %s11, 8192, %s140, [#allocation18], 128, 128, 8
    $region49: #{tpu_custom_call.1} parent=1 // pred_fallthru
      _
    // Predicated region
    $region50: #{tpu_custom_call.1} parent=1 // pred_check
      _
    $region51: #{tpu_custom_call.1} parent=1 // pred_check_branch
      %147 = sbr.rel (0) target = $region53
    $region52: #{tpu_custom_call.1} parent=1 // pred_region
      %s149 = ssub.s32 32, 32
      %150 = vsyncadd [#allocation18], %s149
      %s152 = sshll.u32 [#allocation19], 4
      %s153 = int_to_ptr.vmem [resolvable:$true] %s152
      %155 = dma.hbm_to_vmem [thread:$0]  %s12, 32, %s153, [#allocation18]
    $region53: #{tpu_custom_call.1} parent=1 // pred_fallthru
      _
    // Predicated region
    $region54: #{tpu_custom_call.1} parent=1 // pred_check
      _
    $region55: #{tpu_custom_call.1} parent=1 // pred_check_branch
      %157 = sbr.rel (0) target = $region57
    $region56: #{tpu_custom_call.1} parent=1 // pred_region
      _
    $region57: #{tpu_custom_call.1} parent=1 // pred_fallthru
      _
    // Predicated region
    $region58: #{tpu_custom_call.1} parent=1 // pred_check
      _
    $region59: #{tpu_custom_call.1} parent=1 // pred_check_branch
      %159 = sbr.rel (0) target = $region61
    $region60: #{tpu_custom_call.1} parent=1 // pred_region
      %s161 = ssub.s32 16, 16
      %162 = vsyncadd [#allocation21], %s161
      %s164 = sshll.u32 [#allocation20], 4
      %s165 = int_to_ptr.vmem [resolvable:$true] %s164
      %167 = dma.hbm_to_vmem [thread:$0]  %s14, 16, %s165, [#allocation21]
    $region61: #{tpu_custom_call.1} parent=1 // pred_fallthru
      _
    // Predicated region
    $region62: #{tpu_custom_call.1} parent=1 // pred_check
      _
    $region63: #{tpu_custom_call.1} parent=1 // pred_check_branch
      %169 = sbr.rel (0) target = $region65
    $region64: #{tpu_custom_call.1} parent=1 // pred_region
      %s171 = ssub.s32 512, 512
      %172 = vsyncadd [#allocation21], %s171
      %s173 = sshll.u32 [#allocation22], 4
      %s174 = int_to_ptr.vmem [resolvable:$true] %s173
      %179 = dma.hbm_to_vmem [thread:$0]  %s15, 512, %s174, [#allocation21], 64, 64, 4
    $region65: #{tpu_custom_call.1} parent=1 // pred_fallthru
      _
    // Predicated region
    $region66: #{tpu_custom_call.1} parent=1 // pred_check
      _
    $region67: #{tpu_custom_call.1} parent=1 // pred_check_branch
      %181 = sbr.rel (0) target = $region69
    $region68: #{tpu_custom_call.1} parent=1 // pred_region
      %s183 = ssub.s32 16, 16
      %184 = vsyncadd [#allocation24], %s183
      %s186 = sshll.u32 [#allocation23], 4
      %s187 = int_to_ptr.vmem [resolvable:$true] %s186
      %189 = dma.hbm_to_vmem [thread:$0]  %s16, 16, %s187, [#allocation24]
    $region69: #{tpu_custom_call.1} parent=1 // pred_fallthru
      _
    // Predicated region
    $region70: #{tpu_custom_call.1} parent=1 // pred_check
      _
    $region71: #{tpu_custom_call.1} parent=1 // pred_check_branch
      %191 = sbr.rel (0) target = $region73
    $region72: #{tpu_custom_call.1} parent=1 // pred_region
      %192 = dma.done [#allocation3], 768
    $region73: #{tpu_custom_call.1} parent=1 // pred_fallthru
      _
    // Predicated region
    $region74: #{tpu_custom_call.1} parent=1 // pred_check
      _
    $region75: #{tpu_custom_call.1} parent=1 // pred_check_branch
      %194 = sbr.rel (0) target = $region77
    $region76: #{tpu_custom_call.1} parent=1 // pred_region
      %195 = dma.done [#allocation6], 192
    $region77: #{tpu_custom_call.1} parent=1 // pred_fallthru
      _
    // Predicated region
    $region78: #{tpu_custom_call.1} parent=1 // pred_check
      _
    $region79: #{tpu_custom_call.1} parent=1 // pred_check_branch
      %197 = sbr.rel (0) target = $region81
    $region80: #{tpu_custom_call.1} parent=1 // pred_region
      %198 = dma.done [#allocation6], 49152
    $region81: #{tpu_custom_call.1} parent=1 // pred_fallthru
      _
    // Predicated region
    $region82: #{tpu_custom_call.1} parent=1 // pred_check
      _
    $region83: #{tpu_custom_call.1} parent=1 // pred_check_branch
      %200 = sbr.rel (0) target = $region85
    $region84: #{tpu_custom_call.1} parent=1 // pred_region
      %201 = dma.done [#allocation9], 64
    $region85: #{tpu_custom_call.1} parent=1 // pred_fallthru
      _
    // Predicated region
    $region86: #{tpu_custom_call.1} parent=1 // pred_check
      _
    $region87: #{tpu_custom_call.1} parent=1 // pred_check_branch
      %203 = sbr.rel (0) target = $region89
    $region88: #{tpu_custom_call.1} parent=1 // pred_region
      %204 = dma.done [#allocation9], 8192
    $region89: #{tpu_custom_call.1} parent=1 // pred_fallthru
      _
    // Predicated region
    $region90: #{tpu_custom_call.1} parent=1 // pred_check
      _
    $region91: #{tpu_custom_call.1} parent=1 // pred_check_branch
      %206 = sbr.rel (0) target = $region93
    $region92: #{tpu_custom_call.1} parent=1 // pred_region
      %207 = dma.done [#allocation12], 32
    $region93: #{tpu_custom_call.1} parent=1 // pred_fallthru
      _
    // Predicated region
    $region94: #{tpu_custom_call.1} parent=1 // pred_check
      _
    $region95: #{tpu_custom_call.1} parent=1 // pred_check_branch
      %209 = sbr.rel (0) target = $region97
    $region96: #{tpu_custom_call.1} parent=1 // pred_region
      %210 = dma.done [#allocation12], 16
    $region97: #{tpu_custom_call.1} parent=1 // pred_fallthru
      _
    // Predicated region
    $region98: #{tpu_custom_call.1} parent=1 // pred_check
      _
    $region99: #{tpu_custom_call.1} parent=1 // pred_check_branch
      %212 = sbr.rel (0) target = $region101
    $region100: #{tpu_custom_call.1} parent=1 // pred_region
      %213 = dma.done [#allocation15], 512
    $region101: #{tpu_custom_call.1} parent=1 // pred_fallthru
      _
    // Predicated region
    $region102: #{tpu_custom_call.1} parent=1 // pred_check
      _
    $region103: #{tpu_custom_call.1} parent=1 // pred_check_branch
      %215 = sbr.rel (0) target = $region105
    $region104: #{tpu_custom_call.1} parent=1 // pred_region
      %216 = dma.done [#allocation15], 16
    $region105: #{tpu_custom_call.1} parent=1 // pred_fallthru
      _
    // Predicated region
    $region106: #{tpu_custom_call.1} parent=1 // pred_check
      _
    $region107: #{tpu_custom_call.1} parent=1 // pred_check_branch
      %218 = sbr.rel (0) target = $region109
    $region108: #{tpu_custom_call.1} parent=1 // pred_region
      %219 = dma.done [#allocation18], 8192
    $region109: #{tpu_custom_call.1} parent=1 // pred_fallthru
      _
    // Predicated region
    $region110: #{tpu_custom_call.1} parent=1 // pred_check
      _
    $region111: #{tpu_custom_call.1} parent=1 // pred_check_branch
      %221 = sbr.rel (0) target = $region113
    $region112: #{tpu_custom_call.1} parent=1 // pred_region
      %222 = dma.done [#allocation18], 32
    $region113: #{tpu_custom_call.1} parent=1 // pred_fallthru
      _
    // Predicated region
    $region114: #{tpu_custom_call.1} parent=1 // pred_check
      _
    $region115: #{tpu_custom_call.1} parent=1 // pred_check_branch
      %224 = sbr.rel (0) target = $region117
    $region116: #{tpu_custom_call.1} parent=1 // pred_region
      %225 = dma.done [#allocation21], 16
    $region117: #{tpu_custom_call.1} parent=1 // pred_fallthru
      _
    // Predicated region
    $region118: #{tpu_custom_call.1} parent=1 // pred_check
      _
    $region119: #{tpu_custom_call.1} parent=1 // pred_check_branch
      %227 = sbr.rel (0) target = $region121
    $region120: #{tpu_custom_call.1} parent=1 // pred_region
      %228 = dma.done [#allocation21], 512
    $region121: #{tpu_custom_call.1} parent=1 // pred_fallthru
      _
    // Predicated region
    $region122: #{tpu_custom_call.1} parent=1 // pred_check
      _
    $region123: #{tpu_custom_call.1} parent=1 // pred_check_branch
      %230 = sbr.rel (0) target = $region125
    $region124: #{tpu_custom_call.1} parent=1 // pred_region
      %231 = dma.done [#allocation24], 16
    $region125: #{tpu_custom_call.1} parent=1 // pred_fallthru
      _
    %v233 = vld [vmem:[%s0] sm:$0x77]
    %v234 = vld [vmem:[%s0 + $0x8] sm:$0x77]
    %v235 = vld [vmem:[%s0 + $0x10] sm:$0x77]
    %v236 = vld [vmem:[%s0 + $0x18] sm:$0x77]
    %v241 = vcombine.high %v233, %v233
    %v242 = vcombine.high %v234, %v234
    %v243 = vcombine.high %v235, %v235
    %v244 = vcombine.high %v236, %v236
    %vm249 = vcmask 1042432
    %v250 = vsel %vm249, %v233, 0.0
    %v251 = vsel %vm249, %v241, 0.0
    %v252 = vadd.f32 %v250, %v251
    %v253 = vsel %vm249, %v234, 0.0
    %v254 = vadd.f32 %v252, %v253
    %v255 = vsel %vm249, %v242, 0.0
    %v256 = vadd.f32 %v254, %v255
    %v257 = vsel %vm249, %v235, 0.0
    %v258 = vadd.f32 %v256, %v257
    %v259 = vsel %vm249, %v243, 0.0
    %v260 = vadd.f32 %v258, %v259
    %v261 = vsel %vm249, %v236, 0.0
    %v262 = vadd.f32 %v260, %v261
    %v263 = vsel %vm249, %v244, 0.0
    %v264 = vadd.f32 %v262, %v263
    %265 = vadd.xlane.f32.xlu0 %v264
    %v266 = vpop.xlane.xlu0 %265
    %v267 = vrcp.pop 1024.0
    %v268 = vmul.f32 %v266, %v267
    %v269 = vld [vmem:[#allocation2] sm:$0x77]
    %v270 = vld [vmem:[#allocation2 + $0x8] sm:$0x77]
    %v271 = vld [vmem:[#allocation2 + $0x10] sm:$0x77]
    %v272 = vld [vmem:[#allocation2 + $0x18] sm:$0x77]
    %v273 = vld [vmem:[#allocation2 + $0x20] sm:$0x77]
    %v274 = vld [vmem:[#allocation2 + $0x28] sm:$0x77]
    %v275 = vld [vmem:[#allocation5] sm:$0xff]
    %v276 = vld [vmem:[#allocation5 + $0x8] sm:$0xf]
    %v278 = vlaneseq
    %v279 = vand.u32 %v278, 127
    %v280 = vlaneseq
    %v281 = vshrl.u32 %v280, 7
    %v282 = vsub.s32 %v279, %v281
    %v283 = vrot.slane %v268, %v282
    %v290 = vcombine.high %v269, %v269
    %v291 = vcombine.high %v270, %v270
    %v292 = vcombine.high %v271, %v271
    %v293 = vcombine.high %v272, %v272
    %v294 = vcombine.high %v273, %v273
    %v295 = vcombine.high %v274, %v274
    %v298 = vlaneseq
    %v299 = vshrl.u32 %v298, 7
    %v300 = vsub.s32 0, %v299
    %v301 = vrot.slane %v275, %v300
    %v302 = vlaneseq
    %v303 = vshrl.u32 %v302, 7
    %v304 = vsub.s32 1, %v303
    %v305 = vrot.slane %v275, %v304
    %v306 = vlaneseq
    %v307 = vshrl.u32 %v306, 7
    %v308 = vsub.s32 2, %v307
    %v309 = vrot.slane %v275, %v308
    %v310 = vlaneseq
    %v311 = vshrl.u32 %v310, 7
    %v312 = vsub.s32 3, %v311
    %v313 = vrot.slane %v275, %v312
    %v314 = vlaneseq
    %v315 = vshrl.u32 %v314, 7
    %v316 = vsub.s32 4, %v315
    %v317 = vrot.slane %v275, %v316
    %v318 = vlaneseq
    %v319 = vshrl.u32 %v318, 7
    %v320 = vsub.s32 5, %v319
    %v321 = vrot.slane %v275, %v320
    %v322 = vlaneseq
    %v323 = vshrl.u32 %v322, 7
    %v324 = vsub.s32 6, %v323
    %v325 = vrot.slane %v275, %v324
    %v326 = vlaneseq
    %v327 = vshrl.u32 %v326, 7
    %v328 = vsub.s32 7, %v327
    %v329 = vrot.slane %v275, %v328
    %v330 = vlaneseq
    %v331 = vshrl.u32 %v330, 7
    %v332 = vsub.s32 0, %v331
    %v333 = vrot.slane %v276, %v332
    %v334 = vlaneseq
    %v335 = vshrl.u32 %v334, 7
    %v336 = vsub.s32 1, %v335
    %v337 = vrot.slane %v276, %v336
    %v338 = vlaneseq
    %v339 = vshrl.u32 %v338, 7
    %v340 = vsub.s32 2, %v339
    %v341 = vrot.slane %v276, %v340
    %v342 = vlaneseq
    %v343 = vshrl.u32 %v342, 7
    %v344 = vsub.s32 3, %v343
    %v345 = vrot.slane %v276, %v344
    %vm358 = vcmask 23552
    %v359 = vsel %vm358, %v283, 0
    %v361 = vsel %vm249, %v269, 0
    %v363 = vsel %vm249, %v290, 0
    %v365 = vsel %vm249, %v270, 0
    %v367 = vsel %vm249, %v291, 0
    %v369 = vsel %vm249, %v271, 0
    %v371 = vsel %vm249, %v292, 0
    %v373 = vsel %vm249, %v272, 0
    %v375 = vsel %vm249, %v293, 0
    %v377 = vsel %vm249, %v273, 0
    %v379 = vsel %vm249, %v294, 0
    %v381 = vsel %vm249, %v274, 0
    %v383 = vsel %vm249, %v295, 0
    %385 = vmatprep.subr.mxu0 %v363
    %386 = vmatpush1.msra.mxu0 %v361
    %387 = vmatprep.subr.mxu0 0.0
    %388 = vmatpush1.msra.mxu0 0.0
    %389 = vmatprep.subr.mxu0 0.0
    %390 = vmatpush1.msra.mxu0 0.0
    %391 = vmatprep.subr.mxu0 0.0
    %392 = vmatpush1.msra.mxu0 0.0
    %393 = vmatprep.subr.mxu0 0.0
    %394 = vmatpush1.msra.mxu0 0.0
    %395 = vmatprep.subr.mxu0 0.0
    %396 = vmatpush1.msra.mxu0 0.0
    %397 = vmatprep.subr.mxu0 0.0
    %398 = vmatpush1.msra.mxu0 0.0
    %399 = vmatprep.subr.mxu0 0.0
    %400 = vmatpush1.msra.mxu0 0.0
    %401 = vmatprep.subr.mxu0 0.0
    %402 = vmatpush1.msra.mxu0 0.0
    %403 = vmatprep.subr.mxu0 0.0
    %404 = vmatpush1.msra.mxu0 0.0
    %405 = vmatprep.subr.mxu0 0.0
    %406 = vmatpush1.msra.mxu0 0.0
    %407 = vmatprep.subr.mxu0 0.0
    %408 = vmatpush1.msra.mxu0 0.0
    %409 = vmatprep.subr.mxu0 0.0
    %410 = vmatpush1.msra.mxu0 0.0
    %411 = vmatprep.subr.mxu0 0.0
    %412 = vmatpush1.msra.mxu0 0.0
    %413 = vmatprep.subr.mxu0 0.0
    %414 = vmatpush1.msra.mxu0 0.0
    %415 = vmatprep.subr.mxu0 0.0
    %416 = vmatpush1.msra.mxu0 0.0
    %417 = vmatprep.subr.mxu0 0.0
    %418 = vmatpush1.msra.mxu0 0.0
    %419 = vmatprep.subr.mxu0 0.0
    %420 = vmatpush1.msra.mxu0 0.0
    %421 = vmatprep.subr.mxu0 0.0
    %422 = vmatpush1.msra.mxu0 0.0
    %423 = vmatprep.subr.mxu0 0.0
    %424 = vmatpush1.msra.mxu0 0.0
    %425 = vmatprep.subr.mxu0 0.0
    %426 = vmatpush1.msra.mxu0 0.0
    %427 = vmatprep.subr.mxu0 0.0
    %428 = vmatpush1.msra.mxu0 0.0
    %429 = vmatprep.subr.mxu0 0.0
    %430 = vmatpush1.msra.mxu0 0.0
    %431 = vmatprep.subr.mxu0 0.0
    %432 = vmatpush1.msra.mxu0 0.0
    %433 = vmatprep.subr.mxu0 0.0
    %434 = vmatpush1.msra.mxu0 0.0
    %435 = vmatprep.subr.mxu0 0.0
    %436 = vmatpush1.msra.mxu0 0.0
    %437 = vmatprep.subr.mxu0 0.0
    %438 = vmatpush1.msra.mxu0 0.0
    %439 = vmatprep.subr.mxu0 0.0
    %440 = vmatpush1.msra.mxu0 0.0
    %441 = vmatprep.subr.mxu0 0.0
    %442 = vmatpush1.msra.mxu0 0.0
    %443 = vmatprep.subr.mxu0 0.0
    %444 = vmatpush1.msra.mxu0 0.0
    %445 = vmatprep.subr.mxu0 0.0
    %446 = vmatpush1.msra.mxu0 0.0
    %447 = vmatprep.subr.mxu0 0.0
    %448 = vmatpush1.msra.mxu0 0.0
    %449 = vmatprep.mubr.f32.mxu0 0.0
    %450 = vmatmul.mubr.f32.gmra.mrb[0].mxu0 %v359
    %v451 = vpop.f32.mrb[0].mxu0
    %v452 = vadd.f32 %v301, %v451
    %v453 = vpop.f32.mrb[0].mxu0
    %v454 = vadd.f32 %v305, %v453
    %455 = vdwg.mxu0
    %456 = vmatprep.subr.mxu0 %v367
    %457 = vmatpush1.msra.mxu0 %v365
    %458 = vmatprep.subr.mxu0 0.0
    %459 = vmatpush1.msra.mxu0 0.0
    %460 = vmatprep.subr.mxu0 0.0
    %461 = vmatpush1.msra.mxu0 0.0
    %462 = vmatprep.subr.mxu0 0.0
    %463 = vmatpush1.msra.mxu0 0.0
    %464 = vmatprep.subr.mxu0 0.0
    %465 = vmatpush1.msra.mxu0 0.0
    %466 = vmatprep.subr.mxu0 0.0
    %467 = vmatpush1.msra.mxu0 0.0
    %468 = vmatprep.subr.mxu0 0.0
    %469 = vmatpush1.msra.mxu0 0.0
    %470 = vmatprep.subr.mxu0 0.0
    %471 = vmatpush1.msra.mxu0 0.0
    %472 = vmatprep.subr.mxu0 0.0
    %473 = vmatpush1.msra.mxu0 0.0
    %474 = vmatprep.subr.mxu0 0.0
    %475 = vmatpush1.msra.mxu0 0.0
    %476 = vmatprep.subr.mxu0 0.0
    %477 = vmatpush1.msra.mxu0 0.0
    %478 = vmatprep.subr.mxu0 0.0
    %479 = vmatpush1.msra.mxu0 0.0
    %480 = vmatprep.subr.mxu0 0.0
    %481 = vmatpush1.msra.mxu0 0.0
    %482 = vmatprep.subr.mxu0 0.0
    %483 = vmatpush1.msra.mxu0 0.0
    %484 = vmatprep.subr.mxu0 0.0
    %485 = vmatpush1.msra.mxu0 0.0
    %486 = vmatprep.subr.mxu0 0.0
    %487 = vmatpush1.msra.mxu0 0.0
    %488 = vmatprep.subr.mxu0 0.0
    %489 = vmatpush1.msra.mxu0 0.0
    %490 = vmatprep.subr.mxu0 0.0
    %491 = vmatpush1.msra.mxu0 0.0
    %492 = vmatprep.subr.mxu0 0.0
    %493 = vmatpush1.msra.mxu0 0.0
    %494 = vmatprep.subr.mxu0 0.0
    %495 = vmatpush1.msra.mxu0 0.0
    %496 = vmatprep.subr.mxu0 0.0
    %497 = vmatpush1.msra.mxu0 0.0
    %498 = vmatprep.subr.mxu0 0.0
    %499 = vmatpush1.msra.mxu0 0.0
    %500 = vmatprep.subr.mxu0 0.0
    %501 = vmatpush1.msra.mxu0 0.0
    %502 = vmatprep.subr.mxu0 0.0
    %503 = vmatpush1.msra.mxu0 0.0
    %504 = vmatprep.subr.mxu0 0.0
    %505 = vmatpush1.msra.mxu0 0.0
    %506 = vmatprep.subr.mxu0 0.0
    %507 = vmatpush1.msra.mxu0 0.0
    %508 = vmatprep.subr.mxu0 0.0
    %509 = vmatpush1.msra.mxu0 0.0
    %510 = vmatprep.subr.mxu0 0.0
    %511 = vmatpush1.msra.mxu0 0.0
    %512 = vmatprep.subr.mxu0 0.0
    %513 = vmatpush1.msra.mxu0 0.0
    %514 = vmatprep.subr.mxu0 0.0
    %515 = vmatpush1.msra.mxu0 0.0
    %516 = vmatprep.subr.mxu0 0.0
    %517 = vmatpush1.msra.mxu0 0.0
    %518 = vmatprep.subr.mxu0 0.0
    %519 = vmatpush1.msra.mxu0 0.0
    %520 = vmatprep.mubr.f32.mxu0 0.0
    %521 = vmatmul.mubr.f32.gmra.mrb[0].mxu0 %v359
    %v522 = vpop.f32.mrb[0].mxu0
    %v523 = vadd.f32 %v309, %v522
    %v524 = vpop.f32.mrb[0].mxu0
    %v525 = vadd.f32 %v313, %v524
    %526 = vdwg.mxu0
    %527 = vmatprep.subr.mxu0 %v371
    %528 = vmatpush1.msra.mxu0 %v369
    %529 = vmatprep.subr.mxu0 0.0
    %530 = vmatpush1.msra.mxu0 0.0
    %531 = vmatprep.subr.mxu0 0.0
    %532 = vmatpush1.msra.mxu0 0.0
    %533 = vmatprep.subr.mxu0 0.0
    %534 = vmatpush1.msra.mxu0 0.0
    %535 = vmatprep.subr.mxu0 0.0
    %536 = vmatpush1.msra.mxu0 0.0
    %537 = vmatprep.subr.mxu0 0.0
    %538 = vmatpush1.msra.mxu0 0.0
    %539 = vmatprep.subr.mxu0 0.0
    %540 = vmatpush1.msra.mxu0 0.0
    %541 = vmatprep.subr.mxu0 0.0
    %542 = vmatpush1.msra.mxu0 0.0
    %543 = vmatprep.subr.mxu0 0.0
    %544 = vmatpush1.msra.mxu0 0.0
    %545 = vmatprep.subr.mxu0 0.0
    %546 = vmatpush1.msra.mxu0 0.0
    %547 = vmatprep.subr.mxu0 0.0
    %548 = vmatpush1.msra.mxu0 0.0
    %549 = vmatprep.subr.mxu0 0.0
    %550 = vmatpush1.msra.mxu0 0.0
    %551 = vmatprep.subr.mxu0 0.0
    %552 = vmatpush1.msra.mxu0 0.0
    %553 = vmatprep.subr.mxu0 0.0
    %554 = vmatpush1.msra.mxu0 0.0
    %555 = vmatprep.subr.mxu0 0.0
    %556 = vmatpush1.msra.mxu0 0.0
    %557 = vmatprep.subr.mxu0 0.0
    %558 = vmatpush1.msra.mxu0 0.0
    %559 = vmatprep.subr.mxu0 0.0
    %560 = vmatpush1.msra.mxu0 0.0
    %561 = vmatprep.subr.mxu0 0.0
    %562 = vmatpush1.msra.mxu0 0.0
    %563 = vmatprep.subr.mxu0 0.0
    %564 = vmatpush1.msra.mxu0 0.0
    %565 = vmatprep.subr.mxu0 0.0
    %566 = vmatpush1.msra.mxu0 0.0
    %567 = vmatprep.subr.mxu0 0.0
    %568 = vmatpush1.msra.mxu0 0.0
    %569 = vmatprep.subr.mxu0 0.0
    %570 = vmatpush1.msra.mxu0 0.0
    %571 = vmatprep.subr.mxu0 0.0
    %572 = vmatpush1.msra.mxu0 0.0
    %573 = vmatprep.subr.mxu0 0.0
    %574 = vmatpush1.msra.mxu0 0.0
    %575 = vmatprep.subr.mxu0 0.0
    %576 = vmatpush1.msra.mxu0 0.0
    %577 = vmatprep.subr.mxu0 0.0
    %578 = vmatpush1.msra.mxu0 0.0
    %579 = vmatprep.subr.mxu0 0.0
    %580 = vmatpush1.msra.mxu0 0.0
    %581 = vmatprep.subr.mxu0 0.0
    %582 = vmatpush1.msra.mxu0 0.0
    %583 = vmatprep.subr.mxu0 0.0
    %584 = vmatpush1.msra.mxu0 0.0
    %585 = vmatprep.subr.mxu0 0.0
    %586 = vmatpush1.msra.mxu0 0.0
    %587 = vmatprep.subr.mxu0 0.0
    %588 = vmatpush1.msra.mxu0 0.0
    %589 = vmatprep.subr.mxu0 0.0
    %590 = vmatpush1.msra.mxu0 0.0
    %591 = vmatprep.mubr.f32.mxu0 0.0
    %592 = vmatmul.mubr.f32.gmra.mrb[0].mxu0 %v359
    %v593 = vpop.f32.mrb[0].mxu0
    %v594 = vadd.f32 %v317, %v593
    %v595 = vpop.f32.mrb[0].mxu0
    %v596 = vadd.f32 %v321, %v595
    %597 = vdwg.mxu0
    %598 = vmatprep.subr.mxu0 %v375
    %599 = vmatpush1.msra.mxu0 %v373
    %600 = vmatprep.subr.mxu0 0.0
    %601 = vmatpush1.msra.mxu0 0.0
    %602 = vmatprep.subr.mxu0 0.0
    %603 = vmatpush1.msra.mxu0 0.0
    %604 = vmatprep.subr.mxu0 0.0
    %605 = vmatpush1.msra.mxu0 0.0
    %606 = vmatprep.subr.mxu0 0.0
    %607 = vmatpush1.msra.mxu0 0.0
    %608 = vmatprep.subr.mxu0 0.0
    %609 = vmatpush1.msra.mxu0 0.0
    %610 = vmatprep.subr.mxu0 0.0
    %611 = vmatpush1.msra.mxu0 0.0
    %612 = vmatprep.subr.mxu0 0.0
    %613 = vmatpush1.msra.mxu0 0.0
    %614 = vmatprep.subr.mxu0 0.0
    %615 = vmatpush1.msra.mxu0 0.0
    %616 = vmatprep.subr.mxu0 0.0
    %617 = vmatpush1.msra.mxu0 0.0
    %618 = vmatprep.subr.mxu0 0.0
    %619 = vmatpush1.msra.mxu0 0.0
    %620 = vmatprep.subr.mxu0 0.0
    %621 = vmatpush1.msra.mxu0 0.0
    %622 = vmatprep.subr.mxu0 0.0
    %623 = vmatpush1.msra.mxu0 0.0
    %624 = vmatprep.subr.mxu0 0.0
    %625 = vmatpush1.msra.mxu0 0.0
    %626 = vmatprep.subr.mxu0 0.0
    %627 = vmatpush1.msra.mxu0 0.0
    %628 = vmatprep.subr.mxu0 0.0
    %629 = vmatpush1.msra.mxu0 0.0
    %630 = vmatprep.subr.mxu0 0.0
    %631 = vmatpush1.msra.mxu0 0.0
    %632 = vmatprep.subr.mxu0 0.0
    %633 = vmatpush1.msra.mxu0 0.0
    %634 = vmatprep.subr.mxu0 0.0
    %635 = vmatpush1.msra.mxu0 0.0
    %636 = vmatprep.subr.mxu0 0.0
    %637 = vmatpush1.msra.mxu0 0.0
    %638 = vmatprep.subr.mxu0 0.0
    %639 = vmatpush1.msra.mxu0 0.0
    %640 = vmatprep.subr.mxu0 0.0
    %641 = vmatpush1.msra.mxu0 0.0
    %642 = vmatprep.subr.mxu0 0.0
    %643 = vmatpush1.msra.mxu0 0.0
    %644 = vmatprep.subr.mxu0 0.0
    %645 = vmatpush1.msra.mxu0 0.0
    %646 = vmatprep.subr.mxu0 0.0
    %647 = vmatpush1.msra.mxu0 0.0
    %648 = vmatprep.subr.mxu0 0.0
    %649 = vmatpush1.msra.mxu0 0.0
    %650 = vmatprep.subr.mxu0 0.0
    %651 = vmatpush1.msra.mxu0 0.0
    %652 = vmatprep.subr.mxu0 0.0
    %653 = vmatpush1.msra.mxu0 0.0
    %654 = vmatprep.subr.mxu0 0.0
    %655 = vmatpush1.msra.mxu0 0.0
    %656 = vmatprep.subr.mxu0 0.0
    %657 = vmatpush1.msra.mxu0 0.0
    %658 = vmatprep.subr.mxu0 0.0
    %659 = vmatpush1.msra.mxu0 0.0
    %660 = vmatprep.subr.mxu0 0.0
    %661 = vmatpush1.msra.mxu0 0.0
    %662 = vmatprep.mubr.f32.mxu0 0.0
    %663 = vmatmul.mubr.f32.gmra.mrb[0].mxu0 %v359
    %v664 = vpop.f32.mrb[0].mxu0
    %v665 = vadd.f32 %v325, %v664
    %v666 = vpop.f32.mrb[0].mxu0
    %v667 = vadd.f32 %v329, %v666
    %668 = vdwg.mxu0
    %669 = vmatprep.subr.mxu0 %v379
    %670 = vmatpush1.msra.mxu0 %v377
    %671 = vmatprep.subr.mxu0 0.0
    %672 = vmatpush1.msra.mxu0 0.0
    %673 = vmatprep.subr.mxu0 0.0
    %674 = vmatpush1.msra.mxu0 0.0
    %675 = vmatprep.subr.mxu0 0.0
    %676 = vmatpush1.msra.mxu0 0.0
    %677 = vmatprep.subr.mxu0 0.0
    %678 = vmatpush1.msra.mxu0 0.0
    %679 = vmatprep.subr.mxu0 0.0
    %680 = vmatpush1.msra.mxu0 0.0
    %681 = vmatprep.subr.mxu0 0.0
    %682 = vmatpush1.msra.mxu0 0.0
    %683 = vmatprep.subr.mxu0 0.0
    %684 = vmatpush1.msra.mxu0 0.0
    %685 = vmatprep.subr.mxu0 0.0
    %686 = vmatpush1.msra.mxu0 0.0
    %687 = vmatprep.subr.mxu0 0.0
    %688 = vmatpush1.msra.mxu0 0.0
    %689 = vmatprep.subr.mxu0 0.0
    %690 = vmatpush1.msra.mxu0 0.0
    %691 = vmatprep.subr.mxu0 0.0
    %692 = vmatpush1.msra.mxu0 0.0
    %693 = vmatprep.subr.mxu0 0.0
    %694 = vmatpush1.msra.mxu0 0.0
    %695 = vmatprep.subr.mxu0 0.0
    %696 = vmatpush1.msra.mxu0 0.0
    %697 = vmatprep.subr.mxu0 0.0
    %698 = vmatpush1.msra.mxu0 0.0
    %699 = vmatprep.subr.mxu0 0.0
    %700 = vmatpush1.msra.mxu0 0.0
    %701 = vmatprep.subr.mxu0 0.0
    %702 = vmatpush1.msra.mxu0 0.0
    %703 = vmatprep.subr.mxu0 0.0
    %704 = vmatpush1.msra.mxu0 0.0
    %705 = vmatprep.subr.mxu0 0.0
    %706 = vmatpush1.msra.mxu0 0.0
    %707 = vmatprep.subr.mxu0 0.0
    %708 = vmatpush1.msra.mxu0 0.0
    %709 = vmatprep.subr.mxu0 0.0
    %710 = vmatpush1.msra.mxu0 0.0
    %711 = vmatprep.subr.mxu0 0.0
    %712 = vmatpush1.msra.mxu0 0.0
    %713 = vmatprep.subr.mxu0 0.0
    %714 = vmatpush1.msra.mxu0 0.0
    %715 = vmatprep.subr.mxu0 0.0
    %716 = vmatpush1.msra.mxu0 0.0
    %717 = vmatprep.subr.mxu0 0.0
    %718 = vmatpush1.msra.mxu0 0.0
    %719 = vmatprep.subr.mxu0 0.0
    %720 = vmatpush1.msra.mxu0 0.0
    %721 = vmatprep.subr.mxu0 0.0
    %722 = vmatpush1.msra.mxu0 0.0
    %723 = vmatprep.subr.mxu0 0.0
    %724 = vmatpush1.msra.mxu0 0.0
    %725 = vmatprep.subr.mxu0 0.0
    %726 = vmatpush1.msra.mxu0 0.0
    %727 = vmatprep.subr.mxu0 0.0
    %728 = vmatpush1.msra.mxu0 0.0
    %729 = vmatprep.subr.mxu0 0.0
    %730 = vmatpush1.msra.mxu0 0.0
    %731 = vmatprep.subr.mxu0 0.0
    %732 = vmatpush1.msra.mxu0 0.0
    %733 = vmatprep.mubr.f32.mxu0 0.0
    %734 = vmatmul.mubr.f32.gmra.mrb[0].mxu0 %v359
    %v735 = vpop.f32.mrb[0].mxu0
    %v736 = vadd.f32 %v333, %v735
    %v737 = vpop.f32.mrb[0].mxu0
    %v738 = vadd.f32 %v337, %v737
    %739 = vdwg.mxu0
    %740 = vmatprep.subr.mxu0 %v383
    %741 = vmatpush1.msra.mxu0 %v381
    %742 = vmatprep.subr.mxu0 0.0
    %743 = vmatpush1.msra.mxu0 0.0
    %744 = vmatprep.subr.mxu0 0.0
    %745 = vmatpush1.msra.mxu0 0.0
    %746 = vmatprep.subr.mxu0 0.0
    %747 = vmatpush1.msra.mxu0 0.0
    %748 = vmatprep.subr.mxu0 0.0
    %749 = vmatpush1.msra.mxu0 0.0
    %750 = vmatprep.subr.mxu0 0.0
    %751 = vmatpush1.msra.mxu0 0.0
    %752 = vmatprep.subr.mxu0 0.0
    %753 = vmatpush1.msra.mxu0 0.0
    %754 = vmatprep.subr.mxu0 0.0
    %755 = vmatpush1.msra.mxu0 0.0
    %756 = vmatprep.subr.mxu0 0.0
    %757 = vmatpush1.msra.mxu0 0.0
    %758 = vmatprep.subr.mxu0 0.0
    %759 = vmatpush1.msra.mxu0 0.0
    %760 = vmatprep.subr.mxu0 0.0
    %761 = vmatpush1.msra.mxu0 0.0
    %762 = vmatprep.subr.mxu0 0.0
    %763 = vmatpush1.msra.mxu0 0.0
    %764 = vmatprep.subr.mxu0 0.0
    %765 = vmatpush1.msra.mxu0 0.0
    %766 = vmatprep.subr.mxu0 0.0
    %767 = vmatpush1.msra.mxu0 0.0
    %768 = vmatprep.subr.mxu0 0.0
    %769 = vmatpush1.msra.mxu0 0.0
    %770 = vmatprep.subr.mxu0 0.0
    %771 = vmatpush1.msra.mxu0 0.0
    %772 = vmatprep.subr.mxu0 0.0
    %773 = vmatpush1.msra.mxu0 0.0
    %774 = vmatprep.subr.mxu0 0.0
    %775 = vmatpush1.msra.mxu0 0.0
    %776 = vmatprep.subr.mxu0 0.0
    %777 = vmatpush1.msra.mxu0 0.0
    %778 = vmatprep.subr.mxu0 0.0
    %779 = vmatpush1.msra.mxu0 0.0
    %780 = vmatprep.subr.mxu0 0.0
    %781 = vmatpush1.msra.mxu0 0.0
    %782 = vmatprep.subr.mxu0 0.0
    %783 = vmatpush1.msra.mxu0 0.0
    %784 = vmatprep.subr.mxu0 0.0
    %785 = vmatpush1.msra.mxu0 0.0
    %786 = vmatprep.subr.mxu0 0.0
    %787 = vmatpush1.msra.mxu0 0.0
    %788 = vmatprep.subr.mxu0 0.0
    %789 = vmatpush1.msra.mxu0 0.0
    %790 = vmatprep.subr.mxu0 0.0
    %791 = vmatpush1.msra.mxu0 0.0
    %792 = vmatprep.subr.mxu0 0.0
    %793 = vmatpush1.msra.mxu0 0.0
    %794 = vmatprep.subr.mxu0 0.0
    %795 = vmatpush1.msra.mxu0 0.0
    %796 = vmatprep.subr.mxu0 0.0
    %797 = vmatpush1.msra.mxu0 0.0
    %798 = vmatprep.subr.mxu0 0.0
    %799 = vmatpush1.msra.mxu0 0.0
    %800 = vmatprep.subr.mxu0 0.0
    %801 = vmatpush1.msra.mxu0 0.0
    %802 = vmatprep.subr.mxu0 0.0
    %803 = vmatpush1.msra.mxu0 0.0
    %804 = vmatprep.mubr.f32.mxu0 0.0
    %805 = vmatmul.mubr.f32.gmra.mrb[0].mxu0 %v359
    %v806 = vpop.f32.mrb[0].mxu0
    %v807 = vadd.f32 %v341, %v806
    %v808 = vpop.f32.mrb[0].mxu0
    %v809 = vadd.f32 %v345, %v808
    %810 = vdwg.mxu0
    %v823 = vcombine.low %v452, %v454
    %v824 = vcombine.low %v523, %v525
    %v825 = vcombine.low %v594, %v596
    %v826 = vcombine.low %v665, %v667
    %v828 = vunpack.c.l.s4 1966171168
    %v829 = vunpack.c.0.s8 %v828
    %v830 = vlaneseq
    %v831 = vshrl.u32 %v830, 7
    %v832 = vsub.s32 %v829, %v831
    %v833 = vrot.slane %v823, %v832
    %v835 = vunpack.c.l.s4 1966171168
    %v836 = vunpack.c.0.s8 %v835
    %v837 = vlaneseq
    %v838 = vshrl.u32 %v837, 7
    %v839 = vsub.s32 %v836, %v838
    %v840 = vrot.slane %v824, %v839
    %v842 = vunpack.c.l.s4 1966171168
    %v843 = vunpack.c.0.s8 %v842
    %v844 = vlaneseq
    %v845 = vshrl.u32 %v844, 7
    %v846 = vsub.s32 %v843, %v845
    %v847 = vrot.slane %v825, %v846
    %v849 = vunpack.c.l.s4 1966171168
    %v850 = vunpack.c.0.s8 %v849
    %v851 = vlaneseq
    %v852 = vshrl.u32 %v851, 7
    %v853 = vsub.s32 %v850, %v852
    %v854 = vrot.slane %v826, %v853
    %v855 = vcombine.low %v833, %v840
    %v856 = vcombine.low %v847, %v854
    %v858 = vunpack.c.l.s4 1966171168
    %v859 = vunpack.c.0.s8 %v858
    %v860 = vlaneseq
    %v861 = vshrl.u32 %v860, 7
    %v862 = vsub.s32 %v859, %v861
    %v863 = vrot.slane %v855, %v862
    %v865 = vunpack.c.l.s4 1966171168
    %v866 = vunpack.c.0.s8 %v865
    %v867 = vlaneseq
    %v868 = vshrl.u32 %v867, 7
    %v869 = vsub.s32 %v866, %v868
    %v870 = vrot.slane %v856, %v869
    %v871 = vcombine.low %v863, %v870
    %v872 = vcombine.low %v736, %v738
    %v873 = vcombine.low %v807, %v809
    %v875 = vunpack.c.l.s4 1966171168
    %v876 = vunpack.c.0.s8 %v875
    %v877 = vlaneseq
    %v878 = vshrl.u32 %v877, 7
    %v879 = vsub.s32 %v876, %v878
    %v880 = vrot.slane %v872, %v879
    %v882 = vunpack.c.l.s4 1966171168
    %v883 = vunpack.c.0.s8 %v882
    %v884 = vlaneseq
    %v885 = vshrl.u32 %v884, 7
    %v886 = vsub.s32 %v883, %v885
    %v887 = vrot.slane %v873, %v886
    %v888 = vcombine.low %v880, %v887
    %v890 = vunpack.c.l.s4 1966171168
    %v891 = vunpack.c.0.s8 %v890
    %v892 = vlaneseq
    %v893 = vshrl.u32 %v892, 7
    %v894 = vsub.s32 %v891, %v893
    %v895 = vrot.slane %v888, %v894
    %898 = vst [vmem:[#allocation25] sm:$0xff] %v871
    %v899 = vlaneseq
    %vm900 = vcmp.ge.s32.totalorder %v899, 0
    %vm901 = vcmp.lt.s32.totalorder %v899, 512
    %vm902 = vmand %vm900, %vm901
    %903 = vst.msk [vmem:[#allocation25 + $0x8] sm:$0xf] %vm902, %v895
    %v904 = vld [vmem:[#allocation7] sm:$0xff]
    %v905 = vld [vmem:[#allocation7 + $0x8] sm:$0xff]
    %v906 = vld [vmem:[#allocation7 + $0x10] sm:$0xff]
    %v907 = vld [vmem:[#allocation7 + $0x18] sm:$0xff]
    %v908 = vld [vmem:[#allocation7 + $0x20] sm:$0xff]
    %v909 = vld [vmem:[#allocation7 + $0x28] sm:$0xff]
    %v910 = vld [vmem:[#allocation7 + $0x30] sm:$0xff]
    %v911 = vld [vmem:[#allocation7 + $0x38] sm:$0xff]
    %v912 = vld [vmem:[#allocation7 + $0x40] sm:$0xff]
    %v913 = vld [vmem:[#allocation7 + $0x48] sm:$0xff]
    %v914 = vld [vmem:[#allocation7 + $0x50] sm:$0xff]
    %v915 = vld [vmem:[#allocation7 + $0x58] sm:$0xff]
    %v916 = vld [vmem:[#allocation7 + $0x60] sm:$0xff]
    %v917 = vld [vmem:[#allocation7 + $0x68] sm:$0xff]
    %v918 = vld [vmem:[#allocation7 + $0x70] sm:$0xff]
    %v919 = vld [vmem:[#allocation7 + $0x78] sm:$0xff]
    %v920 = vld [vmem:[#allocation7 + $0x80] sm:$0xff]
    %v921 = vld [vmem:[#allocation7 + $0x88] sm:$0xff]
    %v922 = vld [vmem:[#allocation7 + $0x90] sm:$0xff]
    %v923 = vld [vmem:[#allocation7 + $0x98] sm:$0xff]
    %v924 = vld [vmem:[#allocation7 + $0xa0] sm:$0xff]
    %v925 = vld [vmem:[#allocation7 + $0xa8] sm:$0xff]
    %v926 = vld [vmem:[#allocation7 + $0xb0] sm:$0xff]
    %v927 = vld [vmem:[#allocation7 + $0xb8] sm:$0xff]
    %v928 = vld [vmem:[#allocation7 + $0xc0] sm:$0xff]
    %v929 = vld [vmem:[#allocation7 + $0xc8] sm:$0xff]
    %v930 = vld [vmem:[#allocation7 + $0xd0] sm:$0xff]
    %v931 = vld [vmem:[#allocation7 + $0xd8] sm:$0xff]
    %v932 = vld [vmem:[#allocation7 + $0xe0] sm:$0xff]
    %v933 = vld [vmem:[#allocation7 + $0xe8] sm:$0xff]
    %v934 = vld [vmem:[#allocation7 + $0xf0] sm:$0xff]
    %v935 = vld [vmem:[#allocation7 + $0xf8] sm:$0xff]
    %v936 = vld [vmem:[#allocation7 + $0x100] sm:$0xff]
    %v937 = vld [vmem:[#allocation7 + $0x108] sm:$0xff]
    %v938 = vld [vmem:[#allocation7 + $0x110] sm:$0xff]
    %v939 = vld [vmem:[#allocation7 + $0x118] sm:$0xff]
    %v940 = vld [vmem:[#allocation7 + $0x120] sm:$0xff]
    %v941 = vld [vmem:[#allocation7 + $0x128] sm:$0xff]
    %v942 = vld [vmem:[#allocation7 + $0x130] sm:$0xff]
    %v943 = vld [vmem:[#allocation7 + $0x138] sm:$0xff]
    %v944 = vld [vmem:[#allocation7 + $0x140] sm:$0xff]
    %v945 = vld [vmem:[#allocation7 + $0x148] sm:$0xff]
    %v946 = vld [vmem:[#allocation7 + $0x150] sm:$0xff]
    %v947 = vld [vmem:[#allocation7 + $0x158] sm:$0xff]
    %v948 = vld [vmem:[#allocation7 + $0x160] sm:$0xff]
    %v949 = vld [vmem:[#allocation7 + $0x168] sm:$0xff]
    %v950 = vld [vmem:[#allocation7 + $0x170] sm:$0xff]
    %v951 = vld [vmem:[#allocation7 + $0x178] sm:$0xff]
    %v952 = vld [vmem:[#allocation7 + $0x180] sm:$0xff]
    %v953 = vld [vmem:[#allocation7 + $0x188] sm:$0xff]
    %v954 = vld [vmem:[#allocation7 + $0x190] sm:$0xff]
    %v955 = vld [vmem:[#allocation7 + $0x198] sm:$0xff]
    %v956 = vld [vmem:[#allocation7 + $0x1a0] sm:$0xff]
    %v957 = vld [vmem:[#allocation7 + $0x1a8] sm:$0xff]
    %v958 = vld [vmem:[#allocation7 + $0x1b0] sm:$0xff]
    %v959 = vld [vmem:[#allocation7 + $0x1b8] sm:$0xff]
    %v960 = vld [vmem:[#allocation7 + $0x1c0] sm:$0xff]
    %v961 = vld [vmem:[#allocation7 + $0x1c8] sm:$0xff]
    %v962 = vld [vmem:[#allocation7 + $0x1d0] sm:$0xff]
    %v963 = vld [vmem:[#allocation7 + $0x1d8] sm:$0xff]
    %v964 = vld [vmem:[#allocation7 + $0x1e0] sm:$0xff]
    %v965 = vld [vmem:[#allocation7 + $0x1e8] sm:$0xff]
    %v966 = vld [vmem:[#allocation7 + $0x1f0] sm:$0xff]
    %v967 = vld [vmem:[#allocation7 + $0x1f8] sm:$0xff]
    %v968 = vld [vmem:[#allocation7 + $0x200] sm:$0xff]
    %v969 = vld [vmem:[#allocation7 + $0x208] sm:$0xff]
    %v970 = vld [vmem:[#allocation7 + $0x210] sm:$0xff]
    %v971 = vld [vmem:[#allocation7 + $0x218] sm:$0xff]
    %v972 = vld [vmem:[#allocation7 + $0x220] sm:$0xff]
    %v973 = vld [vmem:[#allocation7 + $0x228] sm:$0xff]
    %v974 = vld [vmem:[#allocation7 + $0x230] sm:$0xff]
    %v975 = vld [vmem:[#allocation7 + $0x238] sm:$0xff]
    %v976 = vld [vmem:[#allocation7 + $0x240] sm:$0xff]
    %v977 = vld [vmem:[#allocation7 + $0x248] sm:$0xff]
    %v978 = vld [vmem:[#allocation7 + $0x250] sm:$0xff]
    %v979 = vld [vmem:[#allocation7 + $0x258] sm:$0xff]
    %v980 = vld [vmem:[#allocation7 + $0x260] sm:$0xff]
    %v981 = vld [vmem:[#allocation7 + $0x268] sm:$0xff]
    %v982 = vld [vmem:[#allocation7 + $0x270] sm:$0xff]
    %v983 = vld [vmem:[#allocation7 + $0x278] sm:$0xff]
    %v984 = vld [vmem:[#allocation7 + $0x280] sm:$0xff]
    %v985 = vld [vmem:[#allocation7 + $0x288] sm:$0xff]
    %v986 = vld [vmem:[#allocation7 + $0x290] sm:$0xff]
    %v987 = vld [vmem:[#allocation7 + $0x298] sm:$0xff]
    %v988 = vld [vmem:[#allocation7 + $0x2a0] sm:$0xff]
    %v989 = vld [vmem:[#allocation7 + $0x2a8] sm:$0xff]
    %v990 = vld [vmem:[#allocation7 + $0x2b0] sm:$0xff]
    %v991 = vld [vmem:[#allocation7 + $0x2b8] sm:$0xff]
    %v992 = vld [vmem:[#allocation7 + $0x2c0] sm:$0xff]
    %v993 = vld [vmem:[#allocation7 + $0x2c8] sm:$0xff]
    %v994 = vld [vmem:[#allocation7 + $0x2d0] sm:$0xff]
    %v995 = vld [vmem:[#allocation7 + $0x2d8] sm:$0xff]
    %v996 = vld [vmem:[#allocation7 + $0x2e0] sm:$0xff]
    %v997 = vld [vmem:[#allocation7 + $0x2e8] sm:$0xff]
    %v998 = vld [vmem:[#allocation7 + $0x2f0] sm:$0xff]
    %v999 = vld [vmem:[#allocation7 + $0x2f8] sm:$0xff]
    %v1000 = vld [vmem:[#allocation7 + $0x300] sm:$0xff]
    %v1001 = vld [vmem:[#allocation7 + $0x308] sm:$0xff]
    %v1002 = vld [vmem:[#allocation7 + $0x310] sm:$0xff]
    %v1003 = vld [vmem:[#allocation7 + $0x318] sm:$0xff]
    %v1004 = vld [vmem:[#allocation7 + $0x320] sm:$0xff]
    %v1005 = vld [vmem:[#allocation7 + $0x328] sm:$0xff]
    %v1006 = vld [vmem:[#allocation7 + $0x330] sm:$0xff]
    %v1007 = vld [vmem:[#allocation7 + $0x338] sm:$0xff]
    %v1008 = vld [vmem:[#allocation7 + $0x340] sm:$0xff]
    %v1009 = vld [vmem:[#allocation7 + $0x348] sm:$0xff]
    %v1010 = vld [vmem:[#allocation7 + $0x350] sm:$0xff]
    %v1011 = vld [vmem:[#allocation7 + $0x358] sm:$0xff]
    %v1012 = vld [vmem:[#allocation7 + $0x360] sm:$0xff]
    %v1013 = vld [vmem:[#allocation7 + $0x368] sm:$0xff]
    %v1014 = vld [vmem:[#allocation7 + $0x370] sm:$0xff]
    %v1015 = vld [vmem:[#allocation7 + $0x378] sm:$0xff]
    %v1016 = vld [vmem:[#allocation7 + $0x380] sm:$0xff]
    %v1017 = vld [vmem:[#allocation7 + $0x388] sm:$0xff]
    %v1018 = vld [vmem:[#allocation7 + $0x390] sm:$0xff]
    %v1019 = vld [vmem:[#allocation7 + $0x398] sm:$0xff]
    %v1020 = vld [vmem:[#allocation7 + $0x3a0] sm:$0xff]
    %v1021 = vld [vmem:[#allocation7 + $0x3a8] sm:$0xff]
    %v1022 = vld [vmem:[#allocation7 + $0x3b0] sm:$0xff]
    %v1023 = vld [vmem:[#allocation7 + $0x3b8] sm:$0xff]
    %v1024 = vld [vmem:[#allocation7 + $0x3c0] sm:$0xff]
    %v1025 = vld [vmem:[#allocation7 + $0x3c8] sm:$0xff]
    %v1026 = vld [vmem:[#allocation7 + $0x3d0] sm:$0xff]
    %v1027 = vld [vmem:[#allocation7 + $0x3d8] sm:$0xff]
    %v1028 = vld [vmem:[#allocation7 + $0x3e0] sm:$0xff]
    %v1029 = vld [vmem:[#allocation7 + $0x3e8] sm:$0xff]
    %v1030 = vld [vmem:[#allocation7 + $0x3f0] sm:$0xff]
    %v1031 = vld [vmem:[#allocation7 + $0x3f8] sm:$0xff]
    %v1032 = vld [vmem:[#allocation7 + $0x400] sm:$0xff]
    %v1033 = vld [vmem:[#allocation7 + $0x408] sm:$0xff]
    %v1034 = vld [vmem:[#allocation7 + $0x410] sm:$0xff]
    %v1035 = vld [vmem:[#allocation7 + $0x418] sm:$0xff]
    %v1036 = vld [vmem:[#allocation7 + $0x420] sm:$0xff]
    %v1037 = vld [vmem:[#allocation7 + $0x428] sm:$0xff]
    %v1038 = vld [vmem:[#allocation7 + $0x430] sm:$0xff]
    %v1039 = vld [vmem:[#allocation7 + $0x438] sm:$0xff]
    %v1040 = vld [vmem:[#allocation7 + $0x440] sm:$0xff]
    %v1041 = vld [vmem:[#allocation7 + $0x448] sm:$0xff]
    %v1042 = vld [vmem:[#allocation7 + $0x450] sm:$0xff]
    %v1043 = vld [vmem:[#allocation7 + $0x458] sm:$0xff]
    %v1044 = vld [vmem:[#allocation7 + $0x460] sm:$0xff]
    %v1045 = vld [vmem:[#allocation7 + $0x468] sm:$0xff]
    %v1046 = vld [vmem:[#allocation7 + $0x470] sm:$0xff]
    %v1047 = vld [vmem:[#allocation7 + $0x478] sm:$0xff]
    %v1048 = vld [vmem:[#allocation7 + $0x480] sm:$0xff]
    %v1049 = vld [vmem:[#allocation7 + $0x488] sm:$0xff]
    %v1050 = vld [vmem:[#allocation7 + $0x490] sm:$0xff]
    %v1051 = vld [vmem:[#allocation7 + $0x498] sm:$0xff]
    %v1052 = vld [vmem:[#allocation7 + $0x4a0] sm:$0xff]
    %v1053 = vld [vmem:[#allocation7 + $0x4a8] sm:$0xff]
    %v1054 = vld [vmem:[#allocation7 + $0x4b0] sm:$0xff]
    %v1055 = vld [vmem:[#allocation7 + $0x4b8] sm:$0xff]
    %v1056 = vld [vmem:[#allocation7 + $0x4c0] sm:$0xff]
    %v1057 = vld [vmem:[#allocation7 + $0x4c8] sm:$0xff]
    %v1058 = vld [vmem:[#allocation7 + $0x4d0] sm:$0xff]
    %v1059 = vld [vmem:[#allocation7 + $0x4d8] sm:$0xff]
    %v1060 = vld [vmem:[#allocation7 + $0x4e0] sm:$0xff]
    %v1061 = vld [vmem:[#allocation7 + $0x4e8] sm:$0xff]
    %v1062 = vld [vmem:[#allocation7 + $0x4f0] sm:$0xff]
    %v1063 = vld [vmem:[#allocation7 + $0x4f8] sm:$0xff]
    %v1064 = vld [vmem:[#allocation7 + $0x500] sm:$0xff]
    %v1065 = vld [vmem:[#allocation7 + $0x508] sm:$0xff]
    %v1066 = vld [vmem:[#allocation7 + $0x510] sm:$0xff]
    %v1067 = vld [vmem:[#allocation7 + $0x518] sm:$0xff]
    %v1068 = vld [vmem:[#allocation7 + $0x520] sm:$0xff]
    %v1069 = vld [vmem:[#allocation7 + $0x528] sm:$0xff]
    %v1070 = vld [vmem:[#allocation7 + $0x530] sm:$0xff]
    %v1071 = vld [vmem:[#allocation7 + $0x538] sm:$0xff]
    %v1072 = vld [vmem:[#allocation7 + $0x540] sm:$0xff]
    %v1073 = vld [vmem:[#allocation7 + $0x548] sm:$0xff]
    %v1074 = vld [vmem:[#allocation7 + $0x550] sm:$0xff]
    %v1075 = vld [vmem:[#allocation7 + $0x558] sm:$0xff]
    %v1076 = vld [vmem:[#allocation7 + $0x560] sm:$0xff]
    %v1077 = vld [vmem:[#allocation7 + $0x568] sm:$0xff]
    %v1078 = vld [vmem:[#allocation7 + $0x570] sm:$0xff]
    %v1079 = vld [vmem:[#allocation7 + $0x578] sm:$0xff]
    %v1080 = vld [vmem:[#allocation7 + $0x580] sm:$0xff]
    %v1081 = vld [vmem:[#allocation7 + $0x588] sm:$0xff]
    %v1082 = vld [vmem:[#allocation7 + $0x590] sm:$0xff]
    %v1083 = vld [vmem:[#allocation7 + $0x598] sm:$0xff]
    %v1084 = vld [vmem:[#allocation7 + $0x5a0] sm:$0xff]
    %v1085 = vld [vmem:[#allocation7 + $0x5a8] sm:$0xff]
    %v1086 = vld [vmem:[#allocation7 + $0x5b0] sm:$0xff]
    %v1087 = vld [vmem:[#allocation7 + $0x5b8] sm:$0xff]
    %v1088 = vld [vmem:[#allocation7 + $0x5c0] sm:$0xff]
    %v1089 = vld [vmem:[#allocation7 + $0x5c8] sm:$0xff]
    %v1090 = vld [vmem:[#allocation7 + $0x5d0] sm:$0xff]
    %v1091 = vld [vmem:[#allocation7 + $0x5d8] sm:$0xff]
    %v1092 = vld [vmem:[#allocation7 + $0x5e0] sm:$0xff]
    %v1093 = vld [vmem:[#allocation7 + $0x5e8] sm:$0xff]
    %v1094 = vld [vmem:[#allocation7 + $0x5f0] sm:$0xff]
    %v1095 = vld [vmem:[#allocation7 + $0x5f8] sm:$0xff]
    %v1096 = vld [vmem:[#allocation7 + $0x600] sm:$0xff]
    %v1097 = vld [vmem:[#allocation7 + $0x608] sm:$0xff]
    %v1098 = vld [vmem:[#allocation7 + $0x610] sm:$0xff]
    %v1099 = vld [vmem:[#allocation7 + $0x618] sm:$0xff]
    %v1100 = vld [vmem:[#allocation7 + $0x620] sm:$0xff]
    %v1101 = vld [vmem:[#allocation7 + $0x628] sm:$0xff]
    %v1102 = vld [vmem:[#allocation7 + $0x630] sm:$0xff]
    %v1103 = vld [vmem:[#allocation7 + $0x638] sm:$0xff]
    %v1104 = vld [vmem:[#allocation7 + $0x640] sm:$0xff]
    %v1105 = vld [vmem:[#allocation7 + $0x648] sm:$0xff]
    %v1106 = vld [vmem:[#allocation7 + $0x650] sm:$0xff]
    %v1107 = vld [vmem:[#allocation7 + $0x658] sm:$0xff]
    %v1108 = vld [vmem:[#allocation7 + $0x660] sm:$0xff]
    %v1109 = vld [vmem:[#allocation7 + $0x668] sm:$0xff]
    %v1110 = vld [vmem:[#allocation7 + $0x670] sm:$0xff]
    %v1111 = vld [vmem:[#allocation7 + $0x678] sm:$0xff]
    %v1112 = vld [vmem:[#allocation7 + $0x680] sm:$0xff]
    %v1113 = vld [vmem:[#allocation7 + $0x688] sm:$0xff]
    %v1114 = vld [vmem:[#allocation7 + $0x690] sm:$0xff]
    %v1115 = vld [vmem:[#allocation7 + $0x698] sm:$0xff]
    %v1116 = vld [vmem:[#allocation7 + $0x6a0] sm:$0xff]
    %v1117 = vld [vmem:[#allocation7 + $0x6a8] sm:$0xff]
    %v1118 = vld [vmem:[#allocation7 + $0x6b0] sm:$0xff]
    %v1119 = vld [vmem:[#allocation7 + $0x6b8] sm:$0xff]
    %v1120 = vld [vmem:[#allocation7 + $0x6c0] sm:$0xff]
    %v1121 = vld [vmem:[#allocation7 + $0x6c8] sm:$0xff]
    %v1122 = vld [vmem:[#allocation7 + $0x6d0] sm:$0xff]
    %v1123 = vld [vmem:[#allocation7 + $0x6d8] sm:$0xff]
    %v1124 = vld [vmem:[#allocation7 + $0x6e0] sm:$0xff]
    %v1125 = vld [vmem:[#allocation7 + $0x6e8] sm:$0xff]
    %v1126 = vld [vmem:[#allocation7 + $0x6f0] sm:$0xff]
    %v1127 = vld [vmem:[#allocation7 + $0x6f8] sm:$0xff]
    %v1128 = vld [vmem:[#allocation7 + $0x700] sm:$0xff]
    %v1129 = vld [vmem:[#allocation7 + $0x708] sm:$0xff]
    %v1130 = vld [vmem:[#allocation7 + $0x710] sm:$0xff]
    %v1131 = vld [vmem:[#allocation7 + $0x718] sm:$0xff]
    %v1132 = vld [vmem:[#allocation7 + $0x720] sm:$0xff]
    %v1133 = vld [vmem:[#allocation7 + $0x728] sm:$0xff]
    %v1134 = vld [vmem:[#allocation7 + $0x730] sm:$0xff]
    %v1135 = vld [vmem:[#allocation7 + $0x738] sm:$0xff]
    %v1136 = vld [vmem:[#allocation7 + $0x740] sm:$0xff]
    %v1137 = vld [vmem:[#allocation7 + $0x748] sm:$0xff]
    %v1138 = vld [vmem:[#allocation7 + $0x750] sm:$0xff]
    %v1139 = vld [vmem:[#allocation7 + $0x758] sm:$0xff]
    %v1140 = vld [vmem:[#allocation7 + $0x760] sm:$0xff]
    %v1141 = vld [vmem:[#allocation7 + $0x768] sm:$0xff]
    %v1142 = vld [vmem:[#allocation7 + $0x770] sm:$0xff]
    %v1143 = vld [vmem:[#allocation7 + $0x778] sm:$0xff]
    %v1144 = vld [vmem:[#allocation7 + $0x780] sm:$0xff]
    %v1145 = vld [vmem:[#allocation7 + $0x788] sm:$0xff]
    %v1146 = vld [vmem:[#allocation7 + $0x790] sm:$0xff]
    %v1147 = vld [vmem:[#allocation7 + $0x798] sm:$0xff]
    %v1148 = vld [vmem:[#allocation7 + $0x7a0] sm:$0xff]
    %v1149 = vld [vmem:[#allocation7 + $0x7a8] sm:$0xff]
    %v1150 = vld [vmem:[#allocation7 + $0x7b0] sm:$0xff]
    %v1151 = vld [vmem:[#allocation7 + $0x7b8] sm:$0xff]
    %v1152 = vld [vmem:[#allocation7 + $0x7c0] sm:$0xff]
    %v1153 = vld [vmem:[#allocation7 + $0x7c8] sm:$0xff]
    %v1154 = vld [vmem:[#allocation7 + $0x7d0] sm:$0xff]
    %v1155 = vld [vmem:[#allocation7 + $0x7d8] sm:$0xff]
    %v1156 = vld [vmem:[#allocation7 + $0x7e0] sm:$0xff]
    %v1157 = vld [vmem:[#allocation7 + $0x7e8] sm:$0xff]
    %v1158 = vld [vmem:[#allocation7 + $0x7f0] sm:$0xff]
    %v1159 = vld [vmem:[#allocation7 + $0x7f8] sm:$0xff]
    %v1160 = vld [vmem:[#allocation7 + $0x800] sm:$0xff]
    %v1161 = vld [vmem:[#allocation7 + $0x808] sm:$0xff]
    %v1162 = vld [vmem:[#allocation7 + $0x810] sm:$0xff]
    %v1163 = vld [vmem:[#allocation7 + $0x818] sm:$0xff]
    %v1164 = vld [vmem:[#allocation7 + $0x820] sm:$0xff]
    %v1165 = vld [vmem:[#allocation7 + $0x828] sm:$0xff]
    %v1166 = vld [vmem:[#allocation7 + $0x830] sm:$0xff]
    %v1167 = vld [vmem:[#allocation7 + $0x838] sm:$0xff]
    %v1168 = vld [vmem:[#allocation7 + $0x840] sm:$0xff]
    %v1169 = vld [vmem:[#allocation7 + $0x848] sm:$0xff]
    %v1170 = vld [vmem:[#allocation7 + $0x850] sm:$0xff]
    %v1171 = vld [vmem:[#allocation7 + $0x858] sm:$0xff]
    %v1172 = vld [vmem:[#allocation7 + $0x860] sm:$0xff]
    %v1173 = vld [vmem:[#allocation7 + $0x868] sm:$0xff]
    %v1174 = vld [vmem:[#allocation7 + $0x870] sm:$0xff]
    %v1175 = vld [vmem:[#allocation7 + $0x878] sm:$0xff]
    %v1176 = vld [vmem:[#allocation7 + $0x880] sm:$0xff]
    %v1177 = vld [vmem:[#allocation7 + $0x888] sm:$0xff]
    %v1178 = vld [vmem:[#allocation7 + $0x890] sm:$0xff]
    %v1179 = vld [vmem:[#allocation7 + $0x898] sm:$0xff]
    %v1180 = vld [vmem:[#allocation7 + $0x8a0] sm:$0xff]
    %v1181 = vld [vmem:[#allocation7 + $0x8a8] sm:$0xff]
    %v1182 = vld [vmem:[#allocation7 + $0x8b0] sm:$0xff]
    %v1183 = vld [vmem:[#allocation7 + $0x8b8] sm:$0xff]
    %v1184 = vld [vmem:[#allocation7 + $0x8c0] sm:$0xff]
    %v1185 = vld [vmem:[#allocation7 + $0x8c8] sm:$0xff]
    %v1186 = vld [vmem:[#allocation7 + $0x8d0] sm:$0xff]
    %v1187 = vld [vmem:[#allocation7 + $0x8d8] sm:$0xff]
    %v1188 = vld [vmem:[#allocation7 + $0x8e0] sm:$0xff]
    %v1189 = vld [vmem:[#allocation7 + $0x8e8] sm:$0xff]
    %v1190 = vld [vmem:[#allocation7 + $0x8f0] sm:$0xff]
    %v1191 = vld [vmem:[#allocation7 + $0x8f8] sm:$0xff]
    %v1192 = vld [vmem:[#allocation7 + $0x900] sm:$0xff]
    %v1193 = vld [vmem:[#allocation7 + $0x908] sm:$0xff]
    %v1194 = vld [vmem:[#allocation7 + $0x910] sm:$0xff]
    %v1195 = vld [vmem:[#allocation7 + $0x918] sm:$0xff]
    %v1196 = vld [vmem:[#allocation7 + $0x920] sm:$0xff]
    %v1197 = vld [vmem:[#allocation7 + $0x928] sm:$0xff]
    %v1198 = vld [vmem:[#allocation7 + $0x930] sm:$0xff]
    %v1199 = vld [vmem:[#allocation7 + $0x938] sm:$0xff]
    %v1200 = vld [vmem:[#allocation7 + $0x940] sm:$0xff]
    %v1201 = vld [vmem:[#allocation7 + $0x948] sm:$0xff]
    %v1202 = vld [vmem:[#allocation7 + $0x950] sm:$0xff]
    %v1203 = vld [vmem:[#allocation7 + $0x958] sm:$0xff]
    %v1204 = vld [vmem:[#allocation7 + $0x960] sm:$0xff]
    %v1205 = vld [vmem:[#allocation7 + $0x968] sm:$0xff]
    %v1206 = vld [vmem:[#allocation7 + $0x970] sm:$0xff]
    %v1207 = vld [vmem:[#allocation7 + $0x978] sm:$0xff]
    %v1208 = vld [vmem:[#allocation7 + $0x980] sm:$0xff]
    %v1209 = vld [vmem:[#allocation7 + $0x988] sm:$0xff]
    %v1210 = vld [vmem:[#allocation7 + $0x990] sm:$0xff]
    %v1211 = vld [vmem:[#allocation7 + $0x998] sm:$0xff]
    %v1212 = vld [vmem:[#allocation7 + $0x9a0] sm:$0xff]
    %v1213 = vld [vmem:[#allocation7 + $0x9a8] sm:$0xff]
    %v1214 = vld [vmem:[#allocation7 + $0x9b0] sm:$0xff]
    %v1215 = vld [vmem:[#allocation7 + $0x9b8] sm:$0xff]
    %v1216 = vld [vmem:[#allocation7 + $0x9c0] sm:$0xff]
    %v1217 = vld [vmem:[#allocation7 + $0x9c8] sm:$0xff]
    %v1218 = vld [vmem:[#allocation7 + $0x9d0] sm:$0xff]
    %v1219 = vld [vmem:[#allocation7 + $0x9d8] sm:$0xff]
    %v1220 = vld [vmem:[#allocation7 + $0x9e0] sm:$0xff]
    %v1221 = vld [vmem:[#allocation7 + $0x9e8] sm:$0xff]
    %v1222 = vld [vmem:[#allocation7 + $0x9f0] sm:$0xff]
    %v1223 = vld [vmem:[#allocation7 + $0x9f8] sm:$0xff]
    %v1224 = vld [vmem:[#allocation7 + $0xa00] sm:$0xff]
    %v1225 = vld [vmem:[#allocation7 + $0xa08] sm:$0xff]
    %v1226 = vld [vmem:[#allocation7 + $0xa10] sm:$0xff]
    %v1227 = vld [vmem:[#allocation7 + $0xa18] sm:$0xff]
    %v1228 = vld [vmem:[#allocation7 + $0xa20] sm:$0xff]
    %v1229 = vld [vmem:[#allocation7 + $0xa28] sm:$0xff]
    %v1230 = vld [vmem:[#allocation7 + $0xa30] sm:$0xff]
    %v1231 = vld [vmem:[#allocation7 + $0xa38] sm:$0xff]
    %v1232 = vld [vmem:[#allocation7 + $0xa40] sm:$0xff]
    %v1233 = vld [vmem:[#allocation7 + $0xa48] sm:$0xff]
    %v1234 = vld [vmem:[#allocation7 + $0xa50] sm:$0xff]
    %v1235 = vld [vmem:[#allocation7 + $0xa58] sm:$0xff]
    %v1236 = vld [vmem:[#allocation7 + $0xa60] sm:$0xff]
    %v1237 = vld [vmem:[#allocation7 + $0xa68] sm:$0xff]
    %v1238 = vld [vmem:[#allocation7 + $0xa70] sm:$0xff]
    %v1239 = vld [vmem:[#allocation7 + $0xa78] sm:$0xff]
    %v1240 = vld [vmem:[#allocation7 + $0xa80] sm:$0xff]
    %v1241 = vld [vmem:[#allocation7 + $0xa88] sm:$0xff]
    %v1242 = vld [vmem:[#allocation7 + $0xa90] sm:$0xff]
    %v1243 = vld [vmem:[#allocation7 + $0xa98] sm:$0xff]
    %v1244 = vld [vmem:[#allocation7 + $0xaa0] sm:$0xff]
    %v1245 = vld [vmem:[#allocation7 + $0xaa8] sm:$0xff]
    %v1246 = vld [vmem:[#allocation7 + $0xab0] sm:$0xff]
    %v1247 = vld [vmem:[#allocation7 + $0xab8] sm:$0xff]
    %v1248 = vld [vmem:[#allocation7 + $0xac0] sm:$0xff]
    %v1249 = vld [vmem:[#allocation7 + $0xac8] sm:$0xff]
    %v1250 = vld [vmem:[#allocation7 + $0xad0] sm:$0xff]
    %v1251 = vld [vmem:[#allocation7 + $0xad8] sm:$0xff]
    %v1252 = vld [vmem:[#allocation7 + $0xae0] sm:$0xff]
    %v1253 = vld [vmem:[#allocation7 + $0xae8] sm:$0xff]
    %v1254 = vld [vmem:[#allocation7 + $0xaf0] sm:$0xff]
    %v1255 = vld [vmem:[#allocation7 + $0xaf8] sm:$0xff]
    %v1256 = vld [vmem:[#allocation7 + $0xb00] sm:$0xff]
    %v1257 = vld [vmem:[#allocation7 + $0xb08] sm:$0xff]
    %v1258 = vld [vmem:[#allocation7 + $0xb10] sm:$0xff]
    %v1259 = vld [vmem:[#allocation7 + $0xb18] sm:$0xff]
    %v1260 = vld [vmem:[#allocation7 + $0xb20] sm:$0xff]
    %v1261 = vld [vmem:[#allocation7 + $0xb28] sm:$0xff]
    %v1262 = vld [vmem:[#allocation7 + $0xb30] sm:$0xff]
    %v1263 = vld [vmem:[#allocation7 + $0xb38] sm:$0xff]
    %v1264 = vld [vmem:[#allocation7 + $0xb40] sm:$0xff]
    %v1265 = vld [vmem:[#allocation7 + $0xb48] sm:$0xff]
    %v1266 = vld [vmem:[#allocation7 + $0xb50] sm:$0xff]
    %v1267 = vld [vmem:[#allocation7 + $0xb58] sm:$0xff]
    %v1268 = vld [vmem:[#allocation7 + $0xb60] sm:$0xff]
    %v1269 = vld [vmem:[#allocation7 + $0xb68] sm:$0xff]
    %v1270 = vld [vmem:[#allocation7 + $0xb70] sm:$0xff]
    %v1271 = vld [vmem:[#allocation7 + $0xb78] sm:$0xff]
    %v1272 = vld [vmem:[#allocation7 + $0xb80] sm:$0xff]
    %v1273 = vld [vmem:[#allocation7 + $0xb88] sm:$0xff]
    %v1274 = vld [vmem:[#allocation7 + $0xb90] sm:$0xff]
    %v1275 = vld [vmem:[#allocation7 + $0xb98] sm:$0xff]
    %v1276 = vld [vmem:[#allocation7 + $0xba0] sm:$0xff]
    %v1277 = vld [vmem:[#allocation7 + $0xba8] sm:$0xff]
    %v1278 = vld [vmem:[#allocation7 + $0xbb0] sm:$0xff]
    %v1279 = vld [vmem:[#allocation7 + $0xbb8] sm:$0xff]
    %v1280 = vld [vmem:[#allocation7 + $0xbc0] sm:$0xff]
    %v1281 = vld [vmem:[#allocation7 + $0xbc8] sm:$0xff]
    %v1282 = vld [vmem:[#allocation7 + $0xbd0] sm:$0xff]
    %v1283 = vld [vmem:[#allocation7 + $0xbd8] sm:$0xff]
    %v1284 = vld [vmem:[#allocation7 + $0xbe0] sm:$0xff]
    %v1285 = vld [vmem:[#allocation7 + $0xbe8] sm:$0xff]
    %v1286 = vld [vmem:[#allocation7 + $0xbf0] sm:$0xff]
    %v1287 = vld [vmem:[#allocation7 + $0xbf8] sm:$0xff]
    %v1288 = vpack.c.bf16 %v452, %v452
    %v1289 = vpack.c.bf16 %v454, %v454
    %v1290 = vpack.c.bf16 %v523, %v523
    %v1291 = vpack.c.bf16 %v525, %v525
    %v1292 = vpack.c.bf16 %v594, %v594
    %v1293 = vpack.c.bf16 %v596, %v596
    %v1294 = vpack.c.bf16 %v665, %v665
    %v1295 = vpack.c.bf16 %v667, %v667
    %v1296 = vpack.c.bf16 %v736, %v736
    %v1297 = vpack.c.bf16 %v738, %v738
    %v1298 = vpack.c.bf16 %v807, %v807
    %v1299 = vpack.c.bf16 %v809, %v809
    %v1300 = vld [vmem:[#allocation8] sm:$0xf]
    %v1685 = vunpack.c.l.b16 %v904
    %v1686 = vunpack.c.h.b16 %v904
    %v1687 = vunpack.c.l.b16 %v905
    %v1688 = vunpack.c.h.b16 %v905
    %v1689 = vunpack.c.l.b16 %v906
    %v1690 = vunpack.c.h.b16 %v906
    %v1691 = vunpack.c.l.b16 %v907
    %v1692 = vunpack.c.h.b16 %v907
    %v1693 = vunpack.c.l.b16 %v908
    %v1694 = vunpack.c.h.b16 %v908
    %v1695 = vunpack.c.l.b16 %v909
    %v1696 = vunpack.c.h.b16 %v909
    %v1697 = vunpack.c.l.b16 %v910
    %v1698 = vunpack.c.h.b16 %v910
    %v1699 = vunpack.c.l.b16 %v911
    %v1700 = vunpack.c.h.b16 %v911
    %v1701 = vunpack.c.l.b16 %v912
    %v1702 = vunpack.c.h.b16 %v912
    %v1703 = vunpack.c.l.b16 %v913
    %v1704 = vunpack.c.h.b16 %v913
    %v1705 = vunpack.c.l.b16 %v914
    %v1706 = vunpack.c.h.b16 %v914
    %v1707 = vunpack.c.l.b16 %v915
    %v1708 = vunpack.c.h.b16 %v915
    %v1709 = vunpack.c.l.b16 %v916
    %v1710 = vunpack.c.h.b16 %v916
    %v1711 = vunpack.c.l.b16 %v917
    %v1712 = vunpack.c.h.b16 %v917
    %v1713 = vunpack.c.l.b16 %v918
    %v1714 = vunpack.c.h.b16 %v918
    %v1715 = vunpack.c.l.b16 %v919
    %v1716 = vunpack.c.h.b16 %v919
    %v1717 = vunpack.c.l.b16 %v920
    %v1718 = vunpack.c.h.b16 %v920
    %v1719 = vunpack.c.l.b16 %v921
    %v1720 = vunpack.c.h.b16 %v921
    %v1721 = vunpack.c.l.b16 %v922
    %v1722 = vunpack.c.h.b16 %v922
    %v1723 = vunpack.c.l.b16 %v923
    %v1724 = vunpack.c.h.b16 %v923
    %v1725 = vunpack.c.l.b16 %v924
    %v1726 = vunpack.c.h.b16 %v924
    %v1727 = vunpack.c.l.b16 %v925
    %v1728 = vunpack.c.h.b16 %v925
    %v1729 = vunpack.c.l.b16 %v926
    %v1730 = vunpack.c.h.b16 %v926
    %v1731 = vunpack.c.l.b16 %v927
    %v1732 = vunpack.c.h.b16 %v927
    %v1733 = vunpack.c.l.b16 %v928
    %v1734 = vunpack.c.h.b16 %v928
    %v1735 = vunpack.c.l.b16 %v929
    %v1736 = vunpack.c.h.b16 %v929
    %v1737 = vunpack.c.l.b16 %v930
    %v1738 = vunpack.c.h.b16 %v930
    %v1739 = vunpack.c.l.b16 %v931
    %v1740 = vunpack.c.h.b16 %v931
    %v1741 = vunpack.c.l.b16 %v932
    %v1742 = vunpack.c.h.b16 %v932
    %v1743 = vunpack.c.l.b16 %v933
    %v1744 = vunpack.c.h.b16 %v933
    %v1745 = vunpack.c.l.b16 %v934
    %v1746 = vunpack.c.h.b16 %v934
    %v1747 = vunpack.c.l.b16 %v935
    %v1748 = vunpack.c.h.b16 %v935
    %v1749 = vunpack.c.l.b16 %v936
    %v1750 = vunpack.c.h.b16 %v936
    %v1751 = vunpack.c.l.b16 %v937
    %v1752 = vunpack.c.h.b16 %v937
    %v1753 = vunpack.c.l.b16 %v938
    %v1754 = vunpack.c.h.b16 %v938
    %v1755 = vunpack.c.l.b16 %v939
    %v1756 = vunpack.c.h.b16 %v939
    %v1757 = vunpack.c.l.b16 %v940
    %v1758 = vunpack.c.h.b16 %v940
    %v1759 = vunpack.c.l.b16 %v941
    %v1760 = vunpack.c.h.b16 %v941
    %v1761 = vunpack.c.l.b16 %v942
    %v1762 = vunpack.c.h.b16 %v942
    %v1763 = vunpack.c.l.b16 %v943
    %v1764 = vunpack.c.h.b16 %v943
    %v1765 = vunpack.c.l.b16 %v944
    %v1766 = vunpack.c.h.b16 %v944
    %v1767 = vunpack.c.l.b16 %v945
    %v1768 = vunpack.c.h.b16 %v945
    %v1769 = vunpack.c.l.b16 %v946
    %v1770 = vunpack.c.h.b16 %v946
    %v1771 = vunpack.c.l.b16 %v947
    %v1772 = vunpack.c.h.b16 %v947
    %v1773 = vunpack.c.l.b16 %v948
    %v1774 = vunpack.c.h.b16 %v948
    %v1775 = vunpack.c.l.b16 %v949
    %v1776 = vunpack.c.h.b16 %v949
    %v1777 = vunpack.c.l.b16 %v950
    %v1778 = vunpack.c.h.b16 %v950
    %v1779 = vunpack.c.l.b16 %v951
    %v1780 = vunpack.c.h.b16 %v951
    %v1781 = vunpack.c.l.b16 %v952
    %v1782 = vunpack.c.h.b16 %v952
    %v1783 = vunpack.c.l.b16 %v953
    %v1784 = vunpack.c.h.b16 %v953
    %v1785 = vunpack.c.l.b16 %v954
    %v1786 = vunpack.c.h.b16 %v954
    %v1787 = vunpack.c.l.b16 %v955
    %v1788 = vunpack.c.h.b16 %v955
    %v1789 = vunpack.c.l.b16 %v956
    %v1790 = vunpack.c.h.b16 %v956
    %v1791 = vunpack.c.l.b16 %v957
    %v1792 = vunpack.c.h.b16 %v957
    %v1793 = vunpack.c.l.b16 %v958
    %v1794 = vunpack.c.h.b16 %v958
    %v1795 = vunpack.c.l.b16 %v959
    %v1796 = vunpack.c.h.b16 %v959
    %v1797 = vunpack.c.l.b16 %v960
    %v1798 = vunpack.c.h.b16 %v960
    %v1799 = vunpack.c.l.b16 %v961
    %v1800 = vunpack.c.h.b16 %v961
    %v1801 = vunpack.c.l.b16 %v962
    %v1802 = vunpack.c.h.b16 %v962
    %v1803 = vunpack.c.l.b16 %v963
    %v1804 = vunpack.c.h.b16 %v963
    %v1805 = vunpack.c.l.b16 %v964
    %v1806 = vunpack.c.h.b16 %v964
    %v1807 = vunpack.c.l.b16 %v965
    %v1808 = vunpack.c.h.b16 %v965
    %v1809 = vunpack.c.l.b16 %v966
    %v1810 = vunpack.c.h.b16 %v966
    %v1811 = vunpack.c.l.b16 %v967
    %v1812 = vunpack.c.h.b16 %v967
    %v1813 = vunpack.c.l.b16 %v968
    %v1814 = vunpack.c.h.b16 %v968
    %v1815 = vunpack.c.l.b16 %v969
    %v1816 = vunpack.c.h.b16 %v969
    %v1817 = vunpack.c.l.b16 %v970
    %v1818 = vunpack.c.h.b16 %v970
    %v1819 = vunpack.c.l.b16 %v971
    %v1820 = vunpack.c.h.b16 %v971
    %v1821 = vunpack.c.l.b16 %v972
    %v1822 = vunpack.c.h.b16 %v972
    %v1823 = vunpack.c.l.b16 %v973
    %v1824 = vunpack.c.h.b16 %v973
    %v1825 = vunpack.c.l.b16 %v974
    %v1826 = vunpack.c.h.b16 %v974
    %v1827 = vunpack.c.l.b16 %v975
    %v1828 = vunpack.c.h.b16 %v975
    %v1829 = vunpack.c.l.b16 %v976
    %v1830 = vunpack.c.h.b16 %v976
    %v1831 = vunpack.c.l.b16 %v977
    %v1832 = vunpack.c.h.b16 %v977
    %v1833 = vunpack.c.l.b16 %v978
    %v1834 = vunpack.c.h.b16 %v978
    %v1835 = vunpack.c.l.b16 %v979
    %v1836 = vunpack.c.h.b16 %v979
    %v1837 = vunpack.c.l.b16 %v980
    %v1838 = vunpack.c.h.b16 %v980
    %v1839 = vunpack.c.l.b16 %v981
    %v1840 = vunpack.c.h.b16 %v981
    %v1841 = vunpack.c.l.b16 %v982
    %v1842 = vunpack.c.h.b16 %v982
    %v1843 = vunpack.c.l.b16 %v983
    %v1844 = vunpack.c.h.b16 %v983
    %v1845 = vunpack.c.l.b16 %v984
    %v1846 = vunpack.c.h.b16 %v984
    %v1847 = vunpack.c.l.b16 %v985
    %v1848 = vunpack.c.h.b16 %v985
    %v1849 = vunpack.c.l.b16 %v986
    %v1850 = vunpack.c.h.b16 %v986
    %v1851 = vunpack.c.l.b16 %v987
    %v1852 = vunpack.c.h.b16 %v987
    %v1853 = vunpack.c.l.b16 %v988
    %v1854 = vunpack.c.h.b16 %v988
    %v1855 = vunpack.c.l.b16 %v989
    %v1856 = vunpack.c.h.b16 %v989
    %v1857 = vunpack.c.l.b16 %v990
    %v1858 = vunpack.c.h.b16 %v990
    %v1859 = vunpack.c.l.b16 %v991
    %v1860 = vunpack.c.h.b16 %v991
    %v1861 = vunpack.c.l.b16 %v992
    %v1862 = vunpack.c.h.b16 %v992
    %v1863 = vunpack.c.l.b16 %v993
    %v1864 = vunpack.c.h.b16 %v993
    %v1865 = vunpack.c.l.b16 %v994
    %v1866 = vunpack.c.h.b16 %v994
    %v1867 = vunpack.c.l.b16 %v995
    %v1868 = vunpack.c.h.b16 %v995
    %v1869 = vunpack.c.l.b16 %v996
    %v1870 = vunpack.c.h.b16 %v996
    %v1871 = vunpack.c.l.b16 %v997
    %v1872 = vunpack.c.h.b16 %v997
    %v1873 = vunpack.c.l.b16 %v998
    %v1874 = vunpack.c.h.b16 %v998
    %v1875 = vunpack.c.l.b16 %v999
    %v1876 = vunpack.c.h.b16 %v999
    %v1877 = vunpack.c.l.b16 %v1000
    %v1878 = vunpack.c.h.b16 %v1000
    %v1879 = vunpack.c.l.b16 %v1001
    %v1880 = vunpack.c.h.b16 %v1001
    %v1881 = vunpack.c.l.b16 %v1002
    %v1882 = vunpack.c.h.b16 %v1002
    %v1883 = vunpack.c.l.b16 %v1003
    %v1884 = vunpack.c.h.b16 %v1003
    %v1885 = vunpack.c.l.b16 %v1004
    %v1886 = vunpack.c.h.b16 %v1004
    %v1887 = vunpack.c.l.b16 %v1005
    %v1888 = vunpack.c.h.b16 %v1005
    %v1889 = vunpack.c.l.b16 %v1006
    %v1890 = vunpack.c.h.b16 %v1006
    %v1891 = vunpack.c.l.b16 %v1007
    %v1892 = vunpack.c.h.b16 %v1007
    %v1893 = vunpack.c.l.b16 %v1008
    %v1894 = vunpack.c.h.b16 %v1008
    %v1895 = vunpack.c.l.b16 %v1009
    %v1896 = vunpack.c.h.b16 %v1009
    %v1897 = vunpack.c.l.b16 %v1010
    %v1898 = vunpack.c.h.b16 %v1010
    %v1899 = vunpack.c.l.b16 %v1011
    %v1900 = vunpack.c.h.b16 %v1011
    %v1901 = vunpack.c.l.b16 %v1012
    %v1902 = vunpack.c.h.b16 %v1012
    %v1903 = vunpack.c.l.b16 %v1013
    %v1904 = vunpack.c.h.b16 %v1013
    %v1905 = vunpack.c.l.b16 %v1014
    %v1906 = vunpack.c.h.b16 %v1014
    %v1907 = vunpack.c.l.b16 %v1015
    %v1908 = vunpack.c.h.b16 %v1015
    %v1909 = vunpack.c.l.b16 %v1016
    %v1910 = vunpack.c.h.b16 %v1016
    %v1911 = vunpack.c.l.b16 %v1017
    %v1912 = vunpack.c.h.b16 %v1017
    %v1913 = vunpack.c.l.b16 %v1018
    %v1914 = vunpack.c.h.b16 %v1018
    %v1915 = vunpack.c.l.b16 %v1019
    %v1916 = vunpack.c.h.b16 %v1019
    %v1917 = vunpack.c.l.b16 %v1020
    %v1918 = vunpack.c.h.b16 %v1020
    %v1919 = vunpack.c.l.b16 %v1021
    %v1920 = vunpack.c.h.b16 %v1021
    %v1921 = vunpack.c.l.b16 %v1022
    %v1922 = vunpack.c.h.b16 %v1022
    %v1923 = vunpack.c.l.b16 %v1023
    %v1924 = vunpack.c.h.b16 %v1023
    %v1925 = vunpack.c.l.b16 %v1024
    %v1926 = vunpack.c.h.b16 %v1024
    %v1927 = vunpack.c.l.b16 %v1025
    %v1928 = vunpack.c.h.b16 %v1025
    %v1929 = vunpack.c.l.b16 %v1026
    %v1930 = vunpack.c.h.b16 %v1026
    %v1931 = vunpack.c.l.b16 %v1027
    %v1932 = vunpack.c.h.b16 %v1027
    %v1933 = vunpack.c.l.b16 %v1028
    %v1934 = vunpack.c.h.b16 %v1028
    %v1935 = vunpack.c.l.b16 %v1029
    %v1936 = vunpack.c.h.b16 %v1029
    %v1937 = vunpack.c.l.b16 %v1030
    %v1938 = vunpack.c.h.b16 %v1030
    %v1939 = vunpack.c.l.b16 %v1031
    %v1940 = vunpack.c.h.b16 %v1031
    %v1941 = vunpack.c.l.b16 %v1032
    %v1942 = vunpack.c.h.b16 %v1032
    %v1943 = vunpack.c.l.b16 %v1033
    %v1944 = vunpack.c.h.b16 %v1033
    %v1945 = vunpack.c.l.b16 %v1034
    %v1946 = vunpack.c.h.b16 %v1034
    %v1947 = vunpack.c.l.b16 %v1035
    %v1948 = vunpack.c.h.b16 %v1035
    %v1949 = vunpack.c.l.b16 %v1036
    %v1950 = vunpack.c.h.b16 %v1036
    %v1951 = vunpack.c.l.b16 %v1037
    %v1952 = vunpack.c.h.b16 %v1037
    %v1953 = vunpack.c.l.b16 %v1038
    %v1954 = vunpack.c.h.b16 %v1038
    %v1955 = vunpack.c.l.b16 %v1039
    %v1956 = vunpack.c.h.b16 %v1039
    %v1957 = vunpack.c.l.b16 %v1040
    %v1958 = vunpack.c.h.b16 %v1040
    %v1959 = vunpack.c.l.b16 %v1041
    %v1960 = vunpack.c.h.b16 %v1041
    %v1961 = vunpack.c.l.b16 %v1042
    %v1962 = vunpack.c.h.b16 %v1042
    %v1963 = vunpack.c.l.b16 %v1043
    %v1964 = vunpack.c.h.b16 %v1043
    %v1965 = vunpack.c.l.b16 %v1044
    %v1966 = vunpack.c.h.b16 %v1044
    %v1967 = vunpack.c.l.b16 %v1045
    %v1968 = vunpack.c.h.b16 %v1045
    %v1969 = vunpack.c.l.b16 %v1046
    %v1970 = vunpack.c.h.b16 %v1046
    %v1971 = vunpack.c.l.b16 %v1047
    %v1972 = vunpack.c.h.b16 %v1047
    %v1973 = vunpack.c.l.b16 %v1048
    %v1974 = vunpack.c.h.b16 %v1048
    %v1975 = vunpack.c.l.b16 %v1049
    %v1976 = vunpack.c.h.b16 %v1049
    %v1977 = vunpack.c.l.b16 %v1050
    %v1978 = vunpack.c.h.b16 %v1050
    %v1979 = vunpack.c.l.b16 %v1051
    %v1980 = vunpack.c.h.b16 %v1051
    %v1981 = vunpack.c.l.b16 %v1052
    %v1982 = vunpack.c.h.b16 %v1052
    %v1983 = vunpack.c.l.b16 %v1053
    %v1984 = vunpack.c.h.b16 %v1053
    %v1985 = vunpack.c.l.b16 %v1054
    %v1986 = vunpack.c.h.b16 %v1054
    %v1987 = vunpack.c.l.b16 %v1055
    %v1988 = vunpack.c.h.b16 %v1055
    %v1989 = vunpack.c.l.b16 %v1056
    %v1990 = vunpack.c.h.b16 %v1056
    %v1991 = vunpack.c.l.b16 %v1057
    %v1992 = vunpack.c.h.b16 %v1057
    %v1993 = vunpack.c.l.b16 %v1058
    %v1994 = vunpack.c.h.b16 %v1058
    %v1995 = vunpack.c.l.b16 %v1059
    %v1996 = vunpack.c.h.b16 %v1059
    %v1997 = vunpack.c.l.b16 %v1060
    %v1998 = vunpack.c.h.b16 %v1060
    %v1999 = vunpack.c.l.b16 %v1061
    %v2000 = vunpack.c.h.b16 %v1061
    %v2001 = vunpack.c.l.b16 %v1062
    %v2002 = vunpack.c.h.b16 %v1062
    %v2003 = vunpack.c.l.b16 %v1063
    %v2004 = vunpack.c.h.b16 %v1063
    %v2005 = vunpack.c.l.b16 %v1064
    %v2006 = vunpack.c.h.b16 %v1064
    %v2007 = vunpack.c.l.b16 %v1065
    %v2008 = vunpack.c.h.b16 %v1065
    %v2009 = vunpack.c.l.b16 %v1066
    %v2010 = vunpack.c.h.b16 %v1066
    %v2011 = vunpack.c.l.b16 %v1067
    %v2012 = vunpack.c.h.b16 %v1067
    %v2013 = vunpack.c.l.b16 %v1068
    %v2014 = vunpack.c.h.b16 %v1068
    %v2015 = vunpack.c.l.b16 %v1069
    %v2016 = vunpack.c.h.b16 %v1069
    %v2017 = vunpack.c.l.b16 %v1070
    %v2018 = vunpack.c.h.b16 %v1070
    %v2019 = vunpack.c.l.b16 %v1071
    %v2020 = vunpack.c.h.b16 %v1071
    %v2021 = vunpack.c.l.b16 %v1072
    %v2022 = vunpack.c.h.b16 %v1072
    %v2023 = vunpack.c.l.b16 %v1073
    %v2024 = vunpack.c.h.b16 %v1073
    %v2025 = vunpack.c.l.b16 %v1074
    %v2026 = vunpack.c.h.b16 %v1074
    %v2027 = vunpack.c.l.b16 %v1075
    %v2028 = vunpack.c.h.b16 %v1075
    %v2029 = vunpack.c.l.b16 %v1076
    %v2030 = vunpack.c.h.b16 %v1076
    %v2031 = vunpack.c.l.b16 %v1077
    %v2032 = vunpack.c.h.b16 %v1077
    %v2033 = vunpack.c.l.b16 %v1078
    %v2034 = vunpack.c.h.b16 %v1078
    %v2035 = vunpack.c.l.b16 %v1079
    %v2036 = vunpack.c.h.b16 %v1079
    %v2037 = vunpack.c.l.b16 %v1080
    %v2038 = vunpack.c.h.b16 %v1080
    %v2039 = vunpack.c.l.b16 %v1081
    %v2040 = vunpack.c.h.b16 %v1081
    %v2041 = vunpack.c.l.b16 %v1082
    %v2042 = vunpack.c.h.b16 %v1082
    %v2043 = vunpack.c.l.b16 %v1083
    %v2044 = vunpack.c.h.b16 %v1083
    %v2045 = vunpack.c.l.b16 %v1084
    %v2046 = vunpack.c.h.b16 %v1084
    %v2047 = vunpack.c.l.b16 %v1085
    %v2048 = vunpack.c.h.b16 %v1085
    %v2049 = vunpack.c.l.b16 %v1086
    %v2050 = vunpack.c.h.b16 %v1086
    %v2051 = vunpack.c.l.b16 %v1087
    %v2052 = vunpack.c.h.b16 %v1087
    %v2053 = vunpack.c.l.b16 %v1088
    %v2054 = vunpack.c.h.b16 %v1088
    %v2055 = vunpack.c.l.b16 %v1089
    %v2056 = vunpack.c.h.b16 %v1089
    %v2057 = vunpack.c.l.b16 %v1090
    %v2058 = vunpack.c.h.b16 %v1090
    %v2059 = vunpack.c.l.b16 %v1091
    %v2060 = vunpack.c.h.b16 %v1091
    %v2061 = vunpack.c.l.b16 %v1092
    %v2062 = vunpack.c.h.b16 %v1092
    %v2063 = vunpack.c.l.b16 %v1093
    %v2064 = vunpack.c.h.b16 %v1093
    %v2065 = vunpack.c.l.b16 %v1094
    %v2066 = vunpack.c.h.b16 %v1094
    %v2067 = vunpack.c.l.b16 %v1095
    %v2068 = vunpack.c.h.b16 %v1095
    %v2069 = vunpack.c.l.b16 %v1096
    %v2070 = vunpack.c.h.b16 %v1096
    %v2071 = vunpack.c.l.b16 %v1097
    %v2072 = vunpack.c.h.b16 %v1097
    %v2073 = vunpack.c.l.b16 %v1098
    %v2074 = vunpack.c.h.b16 %v1098
    %v2075 = vunpack.c.l.b16 %v1099
    %v2076 = vunpack.c.h.b16 %v1099
    %v2077 = vunpack.c.l.b16 %v1100
    %v2078 = vunpack.c.h.b16 %v1100
    %v2079 = vunpack.c.l.b16 %v1101
    %v2080 = vunpack.c.h.b16 %v1101
    %v2081 = vunpack.c.l.b16 %v1102
    %v2082 = vunpack.c.h.b16 %v1102
    %v2083 = vunpack.c.l.b16 %v1103
    %v2084 = vunpack.c.h.b16 %v1103
    %v2085 = vunpack.c.l.b16 %v1104
    %v2086 = vunpack.c.h.b16 %v1104
    %v2087 = vunpack.c.l.b16 %v1105
    %v2088 = vunpack.c.h.b16 %v1105
    %v2089 = vunpack.c.l.b16 %v1106
    %v2090 = vunpack.c.h.b16 %v1106
    %v2091 = vunpack.c.l.b16 %v1107
    %v2092 = vunpack.c.h.b16 %v1107
    %v2093 = vunpack.c.l.b16 %v1108
    %v2094 = vunpack.c.h.b16 %v1108
    %v2095 = vunpack.c.l.b16 %v1109
    %v2096 = vunpack.c.h.b16 %v1109
    %v2097 = vunpack.c.l.b16 %v1110
    %v2098 = vunpack.c.h.b16 %v1110
    %v2099 = vunpack.c.l.b16 %v1111
    %v2100 = vunpack.c.h.b16 %v1111
    %v2101 = vunpack.c.l.b16 %v1112
    %v2102 = vunpack.c.h.b16 %v1112
    %v2103 = vunpack.c.l.b16 %v1113
    %v2104 = vunpack.c.h.b16 %v1113
    %v2105 = vunpack.c.l.b16 %v1114
    %v2106 = vunpack.c.h.b16 %v1114
    %v2107 = vunpack.c.l.b16 %v1115
    %v2108 = vunpack.c.h.b16 %v1115
    %v2109 = vunpack.c.l.b16 %v1116
    %v2110 = vunpack.c.h.b16 %v1116
    %v2111 = vunpack.c.l.b16 %v1117
    %v2112 = vunpack.c.h.b16 %v1117
    %v2113 = vunpack.c.l.b16 %v1118
    %v2114 = vunpack.c.h.b16 %v1118
    %v2115 = vunpack.c.l.b16 %v1119
    %v2116 = vunpack.c.h.b16 %v1119
    %v2117 = vunpack.c.l.b16 %v1120
    %v2118 = vunpack.c.h.b16 %v1120
    %v2119 = vunpack.c.l.b16 %v1121
    %v2120 = vunpack.c.h.b16 %v1121
    %v2121 = vunpack.c.l.b16 %v1122
    %v2122 = vunpack.c.h.b16 %v1122
    %v2123 = vunpack.c.l.b16 %v1123
    %v2124 = vunpack.c.h.b16 %v1123
    %v2125 = vunpack.c.l.b16 %v1124
    %v2126 = vunpack.c.h.b16 %v1124
    %v2127 = vunpack.c.l.b16 %v1125
    %v2128 = vunpack.c.h.b16 %v1125
    %v2129 = vunpack.c.l.b16 %v1126
    %v2130 = vunpack.c.h.b16 %v1126
    %v2131 = vunpack.c.l.b16 %v1127
    %v2132 = vunpack.c.h.b16 %v1127
    %v2133 = vunpack.c.l.b16 %v1128
    %v2134 = vunpack.c.h.b16 %v1128
    %v2135 = vunpack.c.l.b16 %v1129
    %v2136 = vunpack.c.h.b16 %v1129
    %v2137 = vunpack.c.l.b16 %v1130
    %v2138 = vunpack.c.h.b16 %v1130
    %v2139 = vunpack.c.l.b16 %v1131
    %v2140 = vunpack.c.h.b16 %v1131
    %v2141 = vunpack.c.l.b16 %v1132
    %v2142 = vunpack.c.h.b16 %v1132
    %v2143 = vunpack.c.l.b16 %v1133
    %v2144 = vunpack.c.h.b16 %v1133
    %v2145 = vunpack.c.l.b16 %v1134
    %v2146 = vunpack.c.h.b16 %v1134
    %v2147 = vunpack.c.l.b16 %v1135
    %v2148 = vunpack.c.h.b16 %v1135
    %v2149 = vunpack.c.l.b16 %v1136
    %v2150 = vunpack.c.h.b16 %v1136
    %v2151 = vunpack.c.l.b16 %v1137
    %v2152 = vunpack.c.h.b16 %v1137
    %v2153 = vunpack.c.l.b16 %v1138
    %v2154 = vunpack.c.h.b16 %v1138
    %v2155 = vunpack.c.l.b16 %v1139
    %v2156 = vunpack.c.h.b16 %v1139
    %v2157 = vunpack.c.l.b16 %v1140
    %v2158 = vunpack.c.h.b16 %v1140
    %v2159 = vunpack.c.l.b16 %v1141
    %v2160 = vunpack.c.h.b16 %v1141
    %v2161 = vunpack.c.l.b16 %v1142
    %v2162 = vunpack.c.h.b16 %v1142
    %v2163 = vunpack.c.l.b16 %v1143
    %v2164 = vunpack.c.h.b16 %v1143
    %v2165 = vunpack.c.l.b16 %v1144
    %v2166 = vunpack.c.h.b16 %v1144
    %v2167 = vunpack.c.l.b16 %v1145
    %v2168 = vunpack.c.h.b16 %v1145
    %v2169 = vunpack.c.l.b16 %v1146
    %v2170 = vunpack.c.h.b16 %v1146
    %v2171 = vunpack.c.l.b16 %v1147
    %v2172 = vunpack.c.h.b16 %v1147
    %v2173 = vunpack.c.l.b16 %v1148
    %v2174 = vunpack.c.h.b16 %v1148
    %v2175 = vunpack.c.l.b16 %v1149
    %v2176 = vunpack.c.h.b16 %v1149
    %v2177 = vunpack.c.l.b16 %v1150
    %v2178 = vunpack.c.h.b16 %v1150
    %v2179 = vunpack.c.l.b16 %v1151
    %v2180 = vunpack.c.h.b16 %v1151
    %v2181 = vunpack.c.l.b16 %v1152
    %v2182 = vunpack.c.h.b16 %v1152
    %v2183 = vunpack.c.l.b16 %v1153
    %v2184 = vunpack.c.h.b16 %v1153
    %v2185 = vunpack.c.l.b16 %v1154
    %v2186 = vunpack.c.h.b16 %v1154
    %v2187 = vunpack.c.l.b16 %v1155
    %v2188 = vunpack.c.h.b16 %v1155
    %v2189 = vunpack.c.l.b16 %v1156
    %v2190 = vunpack.c.h.b16 %v1156
    %v2191 = vunpack.c.l.b16 %v1157
    %v2192 = vunpack.c.h.b16 %v1157
    %v2193 = vunpack.c.l.b16 %v1158
    %v2194 = vunpack.c.h.b16 %v1158
    %v2195 = vunpack.c.l.b16 %v1159
    %v2196 = vunpack.c.h.b16 %v1159
    %v2197 = vunpack.c.l.b16 %v1160
    %v2198 = vunpack.c.h.b16 %v1160
    %v2199 = vunpack.c.l.b16 %v1161
    %v2200 = vunpack.c.h.b16 %v1161
    %v2201 = vunpack.c.l.b16 %v1162
    %v2202 = vunpack.c.h.b16 %v1162
    %v2203 = vunpack.c.l.b16 %v1163
    %v2204 = vunpack.c.h.b16 %v1163
    %v2205 = vunpack.c.l.b16 %v1164
    %v2206 = vunpack.c.h.b16 %v1164
    %v2207 = vunpack.c.l.b16 %v1165
    %v2208 = vunpack.c.h.b16 %v1165
    %v2209 = vunpack.c.l.b16 %v1166
    %v2210 = vunpack.c.h.b16 %v1166
    %v2211 = vunpack.c.l.b16 %v1167
    %v2212 = vunpack.c.h.b16 %v1167
    %v2213 = vunpack.c.l.b16 %v1168
    %v2214 = vunpack.c.h.b16 %v1168
    %v2215 = vunpack.c.l.b16 %v1169
    %v2216 = vunpack.c.h.b16 %v1169
    %v2217 = vunpack.c.l.b16 %v1170
    %v2218 = vunpack.c.h.b16 %v1170
    %v2219 = vunpack.c.l.b16 %v1171
    %v2220 = vunpack.c.h.b16 %v1171
    %v2221 = vunpack.c.l.b16 %v1172
    %v2222 = vunpack.c.h.b16 %v1172
    %v2223 = vunpack.c.l.b16 %v1173
    %v2224 = vunpack.c.h.b16 %v1173
    %v2225 = vunpack.c.l.b16 %v1174
    %v2226 = vunpack.c.h.b16 %v1174
    %v2227 = vunpack.c.l.b16 %v1175
    %v2228 = vunpack.c.h.b16 %v1175
    %v2229 = vunpack.c.l.b16 %v1176
    %v2230 = vunpack.c.h.b16 %v1176
    %v2231 = vunpack.c.l.b16 %v1177
    %v2232 = vunpack.c.h.b16 %v1177
    %v2233 = vunpack.c.l.b16 %v1178
    %v2234 = vunpack.c.h.b16 %v1178
    %v2235 = vunpack.c.l.b16 %v1179
    %v2236 = vunpack.c.h.b16 %v1179
    %v2237 = vunpack.c.l.b16 %v1180
    %v2238 = vunpack.c.h.b16 %v1180
    %v2239 = vunpack.c.l.b16 %v1181
    %v2240 = vunpack.c.h.b16 %v1181
    %v2241 = vunpack.c.l.b16 %v1182
    %v2242 = vunpack.c.h.b16 %v1182
    %v2243 = vunpack.c.l.b16 %v1183
    %v2244 = vunpack.c.h.b16 %v1183
    %v2245 = vunpack.c.l.b16 %v1184
    %v2246 = vunpack.c.h.b16 %v1184
    %v2247 = vunpack.c.l.b16 %v1185
    %v2248 = vunpack.c.h.b16 %v1185
    %v2249 = vunpack.c.l.b16 %v1186
    %v2250 = vunpack.c.h.b16 %v1186
    %v2251 = vunpack.c.l.b16 %v1187
    %v2252 = vunpack.c.h.b16 %v1187
    %v2253 = vunpack.c.l.b16 %v1188
    %v2254 = vunpack.c.h.b16 %v1188
    %v2255 = vunpack.c.l.b16 %v1189
    %v2256 = vunpack.c.h.b16 %v1189
    %v2257 = vunpack.c.l.b16 %v1190
    %v2258 = vunpack.c.h.b16 %v1190
    %v2259 = vunpack.c.l.b16 %v1191
    %v2260 = vunpack.c.h.b16 %v1191
    %v2261 = vunpack.c.l.b16 %v1192
    %v2262 = vunpack.c.h.b16 %v1192
    %v2263 = vunpack.c.l.b16 %v1193
    %v2264 = vunpack.c.h.b16 %v1193
    %v2265 = vunpack.c.l.b16 %v1194
    %v2266 = vunpack.c.h.b16 %v1194
    %v2267 = vunpack.c.l.b16 %v1195
    %v2268 = vunpack.c.h.b16 %v1195
    %v2269 = vunpack.c.l.b16 %v1196
    %v2270 = vunpack.c.h.b16 %v1196
    %v2271 = vunpack.c.l.b16 %v1197
    %v2272 = vunpack.c.h.b16 %v1197
    %v2273 = vunpack.c.l.b16 %v1198
    %v2274 = vunpack.c.h.b16 %v1198
    %v2275 = vunpack.c.l.b16 %v1199
    %v2276 = vunpack.c.h.b16 %v1199
    %v2277 = vunpack.c.l.b16 %v1200
    %v2278 = vunpack.c.h.b16 %v1200
    %v2279 = vunpack.c.l.b16 %v1201
    %v2280 = vunpack.c.h.b16 %v1201
    %v2281 = vunpack.c.l.b16 %v1202
    %v2282 = vunpack.c.h.b16 %v1202
    %v2283 = vunpack.c.l.b16 %v1203
    %v2284 = vunpack.c.h.b16 %v1203
    %v2285 = vunpack.c.l.b16 %v1204
    %v2286 = vunpack.c.h.b16 %v1204
    %v2287 = vunpack.c.l.b16 %v1205
    %v2288 = vunpack.c.h.b16 %v1205
    %v2289 = vunpack.c.l.b16 %v1206
    %v2290 = vunpack.c.h.b16 %v1206
    %v2291 = vunpack.c.l.b16 %v1207
    %v2292 = vunpack.c.h.b16 %v1207
    %v2293 = vunpack.c.l.b16 %v1208
    %v2294 = vunpack.c.h.b16 %v1208
    %v2295 = vunpack.c.l.b16 %v1209
    %v2296 = vunpack.c.h.b16 %v1209
    %v2297 = vunpack.c.l.b16 %v1210
    %v2298 = vunpack.c.h.b16 %v1210
    %v2299 = vunpack.c.l.b16 %v1211
    %v2300 = vunpack.c.h.b16 %v1211
    %v2301 = vunpack.c.l.b16 %v1212
    %v2302 = vunpack.c.h.b16 %v1212
    %v2303 = vunpack.c.l.b16 %v1213
    %v2304 = vunpack.c.h.b16 %v1213
    %v2305 = vunpack.c.l.b16 %v1214
    %v2306 = vunpack.c.h.b16 %v1214
    %v2307 = vunpack.c.l.b16 %v1215
    %v2308 = vunpack.c.h.b16 %v1215
    %v2309 = vunpack.c.l.b16 %v1216
    %v2310 = vunpack.c.h.b16 %v1216
    %v2311 = vunpack.c.l.b16 %v1217
    %v2312 = vunpack.c.h.b16 %v1217
    %v2313 = vunpack.c.l.b16 %v1218
    %v2314 = vunpack.c.h.b16 %v1218
    %v2315 = vunpack.c.l.b16 %v1219
    %v2316 = vunpack.c.h.b16 %v1219
    %v2317 = vunpack.c.l.b16 %v1220
    %v2318 = vunpack.c.h.b16 %v1220
    %v2319 = vunpack.c.l.b16 %v1221
    %v2320 = vunpack.c.h.b16 %v1221
    %v2321 = vunpack.c.l.b16 %v1222
    %v2322 = vunpack.c.h.b16 %v1222
    %v2323 = vunpack.c.l.b16 %v1223
    %v2324 = vunpack.c.h.b16 %v1223
    %v2325 = vunpack.c.l.b16 %v1224
    %v2326 = vunpack.c.h.b16 %v1224
    %v2327 = vunpack.c.l.b16 %v1225
    %v2328 = vunpack.c.h.b16 %v1225
    %v2329 = vunpack.c.l.b16 %v1226
    %v2330 = vunpack.c.h.b16 %v1226
    %v2331 = vunpack.c.l.b16 %v1227
    %v2332 = vunpack.c.h.b16 %v1227
    %v2333 = vunpack.c.l.b16 %v1228
    %v2334 = vunpack.c.h.b16 %v1228
    %v2335 = vunpack.c.l.b16 %v1229
    %v2336 = vunpack.c.h.b16 %v1229
    %v2337 = vunpack.c.l.b16 %v1230
    %v2338 = vunpack.c.h.b16 %v1230
    %v2339 = vunpack.c.l.b16 %v1231
    %v2340 = vunpack.c.h.b16 %v1231
    %v2341 = vunpack.c.l.b16 %v1232
    %v2342 = vunpack.c.h.b16 %v1232
    %v2343 = vunpack.c.l.b16 %v1233
    %v2344 = vunpack.c.h.b16 %v1233
    %v2345 = vunpack.c.l.b16 %v1234
    %v2346 = vunpack.c.h.b16 %v1234
    %v2347 = vunpack.c.l.b16 %v1235
    %v2348 = vunpack.c.h.b16 %v1235
    %v2349 = vunpack.c.l.b16 %v1236
    %v2350 = vunpack.c.h.b16 %v1236
    %v2351 = vunpack.c.l.b16 %v1237
    %v2352 = vunpack.c.h.b16 %v1237
    %v2353 = vunpack.c.l.b16 %v1238
    %v2354 = vunpack.c.h.b16 %v1238
    %v2355 = vunpack.c.l.b16 %v1239
    %v2356 = vunpack.c.h.b16 %v1239
    %v2357 = vunpack.c.l.b16 %v1240
    %v2358 = vunpack.c.h.b16 %v1240
    %v2359 = vunpack.c.l.b16 %v1241
    %v2360 = vunpack.c.h.b16 %v1241
    %v2361 = vunpack.c.l.b16 %v1242
    %v2362 = vunpack.c.h.b16 %v1242
    %v2363 = vunpack.c.l.b16 %v1243
    %v2364 = vunpack.c.h.b16 %v1243
    %v2365 = vunpack.c.l.b16 %v1244
    %v2366 = vunpack.c.h.b16 %v1244
    %v2367 = vunpack.c.l.b16 %v1245
    %v2368 = vunpack.c.h.b16 %v1245
    %v2369 = vunpack.c.l.b16 %v1246
    %v2370 = vunpack.c.h.b16 %v1246
    %v2371 = vunpack.c.l.b16 %v1247
    %v2372 = vunpack.c.h.b16 %v1247
    %v2373 = vunpack.c.l.b16 %v1248
    %v2374 = vunpack.c.h.b16 %v1248
    %v2375 = vunpack.c.l.b16 %v1249
    %v2376 = vunpack.c.h.b16 %v1249
    %v2377 = vunpack.c.l.b16 %v1250
    %v2378 = vunpack.c.h.b16 %v1250
    %v2379 = vunpack.c.l.b16 %v1251
    %v2380 = vunpack.c.h.b16 %v1251
    %v2381 = vunpack.c.l.b16 %v1252
    %v2382 = vunpack.c.h.b16 %v1252
    %v2383 = vunpack.c.l.b16 %v1253
    %v2384 = vunpack.c.h.b16 %v1253
    %v2385 = vunpack.c.l.b16 %v1254
    %v2386 = vunpack.c.h.b16 %v1254
    %v2387 = vunpack.c.l.b16 %v1255
    %v2388 = vunpack.c.h.b16 %v1255
    %v2389 = vunpack.c.l.b16 %v1256
    %v2390 = vunpack.c.h.b16 %v1256
    %v2391 = vunpack.c.l.b16 %v1257
    %v2392 = vunpack.c.h.b16 %v1257
    %v2393 = vunpack.c.l.b16 %v1258
    %v2394 = vunpack.c.h.b16 %v1258
    %v2395 = vunpack.c.l.b16 %v1259
    %v2396 = vunpack.c.h.b16 %v1259
    %v2397 = vunpack.c.l.b16 %v1260
    %v2398 = vunpack.c.h.b16 %v1260
    %v2399 = vunpack.c.l.b16 %v1261
    %v2400 = vunpack.c.h.b16 %v1261
    %v2401 = vunpack.c.l.b16 %v1262
    %v2402 = vunpack.c.h.b16 %v1262
    %v2403 = vunpack.c.l.b16 %v1263
    %v2404 = vunpack.c.h.b16 %v1263
    %v2405 = vunpack.c.l.b16 %v1264
    %v2406 = vunpack.c.h.b16 %v1264
    %v2407 = vunpack.c.l.b16 %v1265
    %v2408 = vunpack.c.h.b16 %v1265
    %v2409 = vunpack.c.l.b16 %v1266
    %v2410 = vunpack.c.h.b16 %v1266
    %v2411 = vunpack.c.l.b16 %v1267
    %v2412 = vunpack.c.h.b16 %v1267
    %v2413 = vunpack.c.l.b16 %v1268
    %v2414 = vunpack.c.h.b16 %v1268
    %v2415 = vunpack.c.l.b16 %v1269
    %v2416 = vunpack.c.h.b16 %v1269
    %v2417 = vunpack.c.l.b16 %v1270
    %v2418 = vunpack.c.h.b16 %v1270
    %v2419 = vunpack.c.l.b16 %v1271
    %v2420 = vunpack.c.h.b16 %v1271
    %v2421 = vunpack.c.l.b16 %v1272
    %v2422 = vunpack.c.h.b16 %v1272
    %v2423 = vunpack.c.l.b16 %v1273
    %v2424 = vunpack.c.h.b16 %v1273
    %v2425 = vunpack.c.l.b16 %v1274
    %v2426 = vunpack.c.h.b16 %v1274
    %v2427 = vunpack.c.l.b16 %v1275
    %v2428 = vunpack.c.h.b16 %v1275
    %v2429 = vunpack.c.l.b16 %v1276
    %v2430 = vunpack.c.h.b16 %v1276
    %v2431 = vunpack.c.l.b16 %v1277
    %v2432 = vunpack.c.h.b16 %v1277
    %v2433 = vunpack.c.l.b16 %v1278
    %v2434 = vunpack.c.h.b16 %v1278
    %v2435 = vunpack.c.l.b16 %v1279
    %v2436 = vunpack.c.h.b16 %v1279
    %v2437 = vunpack.c.l.b16 %v1280
    %v2438 = vunpack.c.h.b16 %v1280
    %v2439 = vunpack.c.l.b16 %v1281
    %v2440 = vunpack.c.h.b16 %v1281
    %v2441 = vunpack.c.l.b16 %v1282
    %v2442 = vunpack.c.h.b16 %v1282
    %v2443 = vunpack.c.l.b16 %v1283
    %v2444 = vunpack.c.h.b16 %v1283
    %v2445 = vunpack.c.l.b16 %v1284
    %v2446 = vunpack.c.h.b16 %v1284
    %v2447 = vunpack.c.l.b16 %v1285
    %v2448 = vunpack.c.h.b16 %v1285
    %v2449 = vunpack.c.l.b16 %v1286
    %v2450 = vunpack.c.h.b16 %v1286
    %v2451 = vunpack.c.l.b16 %v1287
    %v2452 = vunpack.c.h.b16 %v1287
    %v2453 = vpack.c.b16 %v1689, %v1685
    %v2454 = vpack.c.b16 %v1690, %v1686
    %v2455 = vpack.c.b16 %v1691, %v1687
    %v2456 = vpack.c.b16 %v1692, %v1688
    %v2457 = vpack.c.b16 %v1697, %v1693
    %v2458 = vpack.c.b16 %v1698, %v1694
    %v2459 = vpack.c.b16 %v1699, %v1695
    %v2460 = vpack.c.b16 %v1700, %v1696
    %v2461 = vpack.c.b16 %v1705, %v1701
    %v2462 = vpack.c.b16 %v1706, %v1702
    %v2463 = vpack.c.b16 %v1707, %v1703
    %v2464 = vpack.c.b16 %v1708, %v1704
    %v2465 = vpack.c.b16 %v1713, %v1709
    %v2466 = vpack.c.b16 %v1714, %v1710
    %v2467 = vpack.c.b16 %v1715, %v1711
    %v2468 = vpack.c.b16 %v1716, %v1712
    %v2469 = vpack.c.b16 %v1721, %v1717
    %v2470 = vpack.c.b16 %v1722, %v1718
    %v2471 = vpack.c.b16 %v1723, %v1719
    %v2472 = vpack.c.b16 %v1724, %v1720
    %v2473 = vpack.c.b16 %v1729, %v1725
    %v2474 = vpack.c.b16 %v1730, %v1726
    %v2475 = vpack.c.b16 %v1731, %v1727
    %v2476 = vpack.c.b16 %v1732, %v1728
    %v2477 = vpack.c.b16 %v1737, %v1733
    %v2478 = vpack.c.b16 %v1738, %v1734
    %v2479 = vpack.c.b16 %v1739, %v1735
    %v2480 = vpack.c.b16 %v1740, %v1736
    %v2481 = vpack.c.b16 %v1745, %v1741
    %v2482 = vpack.c.b16 %v1746, %v1742
    %v2483 = vpack.c.b16 %v1747, %v1743
    %v2484 = vpack.c.b16 %v1748, %v1744
    %v2485 = vpack.c.b16 %v1753, %v1749
    %v2486 = vpack.c.b16 %v1754, %v1750
    %v2487 = vpack.c.b16 %v1755, %v1751
    %v2488 = vpack.c.b16 %v1756, %v1752
    %v2489 = vpack.c.b16 %v1761, %v1757
    %v2490 = vpack.c.b16 %v1762, %v1758
    %v2491 = vpack.c.b16 %v1763, %v1759
    %v2492 = vpack.c.b16 %v1764, %v1760
    %v2493 = vpack.c.b16 %v1769, %v1765
    %v2494 = vpack.c.b16 %v1770, %v1766
    %v2495 = vpack.c.b16 %v1771, %v1767
    %v2496 = vpack.c.b16 %v1772, %v1768
    %v2497 = vpack.c.b16 %v1777, %v1773
    %v2498 = vpack.c.b16 %v1778, %v1774
    %v2499 = vpack.c.b16 %v1779, %v1775
    %v2500 = vpack.c.b16 %v1780, %v1776
    %v2501 = vpack.c.b16 %v1785, %v1781
    %v2502 = vpack.c.b16 %v1786, %v1782
    %v2503 = vpack.c.b16 %v1787, %v1783
    %v2504 = vpack.c.b16 %v1788, %v1784
    %v2505 = vpack.c.b16 %v1793, %v1789
    %v2506 = vpack.c.b16 %v1794, %v1790
    %v2507 = vpack.c.b16 %v1795, %v1791
    %v2508 = vpack.c.b16 %v1796, %v1792
    %v2509 = vpack.c.b16 %v1801, %v1797
    %v2510 = vpack.c.b16 %v1802, %v1798
    %v2511 = vpack.c.b16 %v1803, %v1799
    %v2512 = vpack.c.b16 %v1804, %v1800
    %v2513 = vpack.c.b16 %v1809, %v1805
    %v2514 = vpack.c.b16 %v1810, %v1806
    %v2515 = vpack.c.b16 %v1811, %v1807
    %v2516 = vpack.c.b16 %v1812, %v1808
    %v2517 = vpack.c.b16 %v1817, %v1813
    %v2518 = vpack.c.b16 %v1818, %v1814
    %v2519 = vpack.c.b16 %v1819, %v1815
    %v2520 = vpack.c.b16 %v1820, %v1816
    %v2521 = vpack.c.b16 %v1825, %v1821
    %v2522 = vpack.c.b16 %v1826, %v1822
    %v2523 = vpack.c.b16 %v1827, %v1823
    %v2524 = vpack.c.b16 %v1828, %v1824
    %v2525 = vpack.c.b16 %v1833, %v1829
    %v2526 = vpack.c.b16 %v1834, %v1830
    %v2527 = vpack.c.b16 %v1835, %v1831
    %v2528 = vpack.c.b16 %v1836, %v1832
    %v2529 = vpack.c.b16 %v1841, %v1837
    %v2530 = vpack.c.b16 %v1842, %v1838
    %v2531 = vpack.c.b16 %v1843, %v1839
    %v2532 = vpack.c.b16 %v1844, %v1840
    %v2533 = vpack.c.b16 %v1849, %v1845
    %v2534 = vpack.c.b16 %v1850, %v1846
    %v2535 = vpack.c.b16 %v1851, %v1847
    %v2536 = vpack.c.b16 %v1852, %v1848
    %v2537 = vpack.c.b16 %v1857, %v1853
    %v2538 = vpack.c.b16 %v1858, %v1854
    %v2539 = vpack.c.b16 %v1859, %v1855
    %v2540 = vpack.c.b16 %v1860, %v1856
    %v2541 = vpack.c.b16 %v1865, %v1861
    %v2542 = vpack.c.b16 %v1866, %v1862
    %v2543 = vpack.c.b16 %v1867, %v1863
    %v2544 = vpack.c.b16 %v1868, %v1864
    %v2545 = vpack.c.b16 %v1873, %v1869
    %v2546 = vpack.c.b16 %v1874, %v1870
    %v2547 = vpack.c.b16 %v1875, %v1871
    %v2548 = vpack.c.b16 %v1876, %v1872
    %v2549 = vpack.c.b16 %v1881, %v1877
    %v2550 = vpack.c.b16 %v1882, %v1878
    %v2551 = vpack.c.b16 %v1883, %v1879
    %v2552 = vpack.c.b16 %v1884, %v1880
    %v2553 = vpack.c.b16 %v1889, %v1885
    %v2554 = vpack.c.b16 %v1890, %v1886
    %v2555 = vpack.c.b16 %v1891, %v1887
    %v2556 = vpack.c.b16 %v1892, %v1888
    %v2557 = vpack.c.b16 %v1897, %v1893
    %v2558 = vpack.c.b16 %v1898, %v1894
    %v2559 = vpack.c.b16 %v1899, %v1895
    %v2560 = vpack.c.b16 %v1900, %v1896
    %v2561 = vpack.c.b16 %v1905, %v1901
    %v2562 = vpack.c.b16 %v1906, %v1902
    %v2563 = vpack.c.b16 %v1907, %v1903
    %v2564 = vpack.c.b16 %v1908, %v1904
    %v2565 = vpack.c.b16 %v1913, %v1909
    %v2566 = vpack.c.b16 %v1914, %v1910
    %v2567 = vpack.c.b16 %v1915, %v1911
    %v2568 = vpack.c.b16 %v1916, %v1912
    %v2569 = vpack.c.b16 %v1921, %v1917
    %v2570 = vpack.c.b16 %v1922, %v1918
    %v2571 = vpack.c.b16 %v1923, %v1919
    %v2572 = vpack.c.b16 %v1924, %v1920
    %v2573 = vpack.c.b16 %v1929, %v1925
    %v2574 = vpack.c.b16 %v1930, %v1926
    %v2575 = vpack.c.b16 %v1931, %v1927
    %v2576 = vpack.c.b16 %v1932, %v1928
    %v2577 = vpack.c.b16 %v1937, %v1933
    %v2578 = vpack.c.b16 %v1938, %v1934
    %v2579 = vpack.c.b16 %v1939, %v1935
    %v2580 = vpack.c.b16 %v1940, %v1936
    %v2581 = vpack.c.b16 %v1945, %v1941
    %v2582 = vpack.c.b16 %v1946, %v1942
    %v2583 = vpack.c.b16 %v1947, %v1943
    %v2584 = vpack.c.b16 %v1948, %v1944
    %v2585 = vpack.c.b16 %v1953, %v1949
    %v2586 = vpack.c.b16 %v1954, %v1950
    %v2587 = vpack.c.b16 %v1955, %v1951
    %v2588 = vpack.c.b16 %v1956, %v1952
    %v2589 = vpack.c.b16 %v1961, %v1957
    %v2590 = vpack.c.b16 %v1962, %v1958
    %v2591 = vpack.c.b16 %v1963, %v1959
    %v2592 = vpack.c.b16 %v1964, %v1960
    %v2593 = vpack.c.b16 %v1969, %v1965
    %v2594 = vpack.c.b16 %v1970, %v1966
    %v2595 = vpack.c.b16 %v1971, %v1967
    %v2596 = vpack.c.b16 %v1972, %v1968
    %v2597 = vpack.c.b16 %v1977, %v1973
    %v2598 = vpack.c.b16 %v1978, %v1974
    %v2599 = vpack.c.b16 %v1979, %v1975
    %v2600 = vpack.c.b16 %v1980, %v1976
    %v2601 = vpack.c.b16 %v1985, %v1981
    %v2602 = vpack.c.b16 %v1986, %v1982
    %v2603 = vpack.c.b16 %v1987, %v1983
    %v2604 = vpack.c.b16 %v1988, %v1984
    %v2605 = vpack.c.b16 %v1993, %v1989
    %v2606 = vpack.c.b16 %v1994, %v1990
    %v2607 = vpack.c.b16 %v1995, %v1991
    %v2608 = vpack.c.b16 %v1996, %v1992
    %v2609 = vpack.c.b16 %v2001, %v1997
    %v2610 = vpack.c.b16 %v2002, %v1998
    %v2611 = vpack.c.b16 %v2003, %v1999
    %v2612 = vpack.c.b16 %v2004, %v2000
    %v2613 = vpack.c.b16 %v2009, %v2005
    %v2614 = vpack.c.b16 %v2010, %v2006
    %v2615 = vpack.c.b16 %v2011, %v2007
    %v2616 = vpack.c.b16 %v2012, %v2008
    %v2617 = vpack.c.b16 %v2017, %v2013
    %v2618 = vpack.c.b16 %v2018, %v2014
    %v2619 = vpack.c.b16 %v2019, %v2015
    %v2620 = vpack.c.b16 %v2020, %v2016
    %v2621 = vpack.c.b16 %v2025, %v2021
    %v2622 = vpack.c.b16 %v2026, %v2022
    %v2623 = vpack.c.b16 %v2027, %v2023
    %v2624 = vpack.c.b16 %v2028, %v2024
    %v2625 = vpack.c.b16 %v2033, %v2029
    %v2626 = vpack.c.b16 %v2034, %v2030
    %v2627 = vpack.c.b16 %v2035, %v2031
    %v2628 = vpack.c.b16 %v2036, %v2032
    %v2629 = vpack.c.b16 %v2041, %v2037
    %v2630 = vpack.c.b16 %v2042, %v2038
    %v2631 = vpack.c.b16 %v2043, %v2039
    %v2632 = vpack.c.b16 %v2044, %v2040
    %v2633 = vpack.c.b16 %v2049, %v2045
    %v2634 = vpack.c.b16 %v2050, %v2046
    %v2635 = vpack.c.b16 %v2051, %v2047
    %v2636 = vpack.c.b16 %v2052, %v2048
    %v2637 = vpack.c.b16 %v2057, %v2053
    %v2638 = vpack.c.b16 %v2058, %v2054
    %v2639 = vpack.c.b16 %v2059, %v2055
    %v2640 = vpack.c.b16 %v2060, %v2056
    %v2641 = vpack.c.b16 %v2065, %v2061
    %v2642 = vpack.c.b16 %v2066, %v2062
    %v2643 = vpack.c.b16 %v2067, %v2063
    %v2644 = vpack.c.b16 %v2068, %v2064
    %v2645 = vpack.c.b16 %v2073, %v2069
    %v2646 = vpack.c.b16 %v2074, %v2070
    %v2647 = vpack.c.b16 %v2075, %v2071
    %v2648 = vpack.c.b16 %v2076, %v2072
    %v2649 = vpack.c.b16 %v2081, %v2077
    %v2650 = vpack.c.b16 %v2082, %v2078
    %v2651 = vpack.c.b16 %v2083, %v2079
    %v2652 = vpack.c.b16 %v2084, %v2080
    %v2653 = vpack.c.b16 %v2089, %v2085
    %v2654 = vpack.c.b16 %v2090, %v2086
    %v2655 = vpack.c.b16 %v2091, %v2087
    %v2656 = vpack.c.b16 %v2092, %v2088
    %v2657 = vpack.c.b16 %v2097, %v2093
    %v2658 = vpack.c.b16 %v2098, %v2094
    %v2659 = vpack.c.b16 %v2099, %v2095
    %v2660 = vpack.c.b16 %v2100, %v2096
    %v2661 = vpack.c.b16 %v2105, %v2101
    %v2662 = vpack.c.b16 %v2106, %v2102
    %v2663 = vpack.c.b16 %v2107, %v2103
    %v2664 = vpack.c.b16 %v2108, %v2104
    %v2665 = vpack.c.b16 %v2113, %v2109
    %v2666 = vpack.c.b16 %v2114, %v2110
    %v2667 = vpack.c.b16 %v2115, %v2111
    %v2668 = vpack.c.b16 %v2116, %v2112
    %v2669 = vpack.c.b16 %v2121, %v2117
    %v2670 = vpack.c.b16 %v2122, %v2118
    %v2671 = vpack.c.b16 %v2123, %v2119
    %v2672 = vpack.c.b16 %v2124, %v2120
    %v2673 = vpack.c.b16 %v2129, %v2125
    %v2674 = vpack.c.b16 %v2130, %v2126
    %v2675 = vpack.c.b16 %v2131, %v2127
    %v2676 = vpack.c.b16 %v2132, %v2128
    %v2677 = vpack.c.b16 %v2137, %v2133
    %v2678 = vpack.c.b16 %v2138, %v2134
    %v2679 = vpack.c.b16 %v2139, %v2135
    %v2680 = vpack.c.b16 %v2140, %v2136
    %v2681 = vpack.c.b16 %v2145, %v2141
    %v2682 = vpack.c.b16 %v2146, %v2142
    %v2683 = vpack.c.b16 %v2147, %v2143
    %v2684 = vpack.c.b16 %v2148, %v2144
    %v2685 = vpack.c.b16 %v2153, %v2149
    %v2686 = vpack.c.b16 %v2154, %v2150
    %v2687 = vpack.c.b16 %v2155, %v2151
    %v2688 = vpack.c.b16 %v2156, %v2152
    %v2689 = vpack.c.b16 %v2161, %v2157
    %v2690 = vpack.c.b16 %v2162, %v2158
    %v2691 = vpack.c.b16 %v2163, %v2159
    %v2692 = vpack.c.b16 %v2164, %v2160
    %v2693 = vpack.c.b16 %v2169, %v2165
    %v2694 = vpack.c.b16 %v2170, %v2166
    %v2695 = vpack.c.b16 %v2171, %v2167
    %v2696 = vpack.c.b16 %v2172, %v2168
    %v2697 = vpack.c.b16 %v2177, %v2173
    %v2698 = vpack.c.b16 %v2178, %v2174
    %v2699 = vpack.c.b16 %v2179, %v2175
    %v2700 = vpack.c.b16 %v2180, %v2176
    %v2701 = vpack.c.b16 %v2185, %v2181
    %v2702 = vpack.c.b16 %v2186, %v2182
    %v2703 = vpack.c.b16 %v2187, %v2183
    %v2704 = vpack.c.b16 %v2188, %v2184
    %v2705 = vpack.c.b16 %v2193, %v2189
    %v2706 = vpack.c.b16 %v2194, %v2190
    %v2707 = vpack.c.b16 %v2195, %v2191
    %v2708 = vpack.c.b16 %v2196, %v2192
    %v2709 = vpack.c.b16 %v2201, %v2197
    %v2710 = vpack.c.b16 %v2202, %v2198
    %v2711 = vpack.c.b16 %v2203, %v2199
    %v2712 = vpack.c.b16 %v2204, %v2200
    %v2713 = vpack.c.b16 %v2209, %v2205
    %v2714 = vpack.c.b16 %v2210, %v2206
    %v2715 = vpack.c.b16 %v2211, %v2207
    %v2716 = vpack.c.b16 %v2212, %v2208
    %v2717 = vpack.c.b16 %v2217, %v2213
    %v2718 = vpack.c.b16 %v2218, %v2214
    %v2719 = vpack.c.b16 %v2219, %v2215
    %v2720 = vpack.c.b16 %v2220, %v2216
    %v2721 = vpack.c.b16 %v2225, %v2221
    %v2722 = vpack.c.b16 %v2226, %v2222
    %v2723 = vpack.c.b16 %v2227, %v2223
    %v2724 = vpack.c.b16 %v2228, %v2224
    %v2725 = vpack.c.b16 %v2233, %v2229
    %v2726 = vpack.c.b16 %v2234, %v2230
    %v2727 = vpack.c.b16 %v2235, %v2231
    %v2728 = vpack.c.b16 %v2236, %v2232
    %v2729 = vpack.c.b16 %v2241, %v2237
    %v2730 = vpack.c.b16 %v2242, %v2238
    %v2731 = vpack.c.b16 %v2243, %v2239
    %v2732 = vpack.c.b16 %v2244, %v2240
    %v2733 = vpack.c.b16 %v2249, %v2245
    %v2734 = vpack.c.b16 %v2250, %v2246
    %v2735 = vpack.c.b16 %v2251, %v2247
    %v2736 = vpack.c.b16 %v2252, %v2248
    %v2737 = vpack.c.b16 %v2257, %v2253
    %v2738 = vpack.c.b16 %v2258, %v2254
    %v2739 = vpack.c.b16 %v2259, %v2255
    %v2740 = vpack.c.b16 %v2260, %v2256
    %v2741 = vpack.c.b16 %v2265, %v2261
    %v2742 = vpack.c.b16 %v2266, %v2262
    %v2743 = vpack.c.b16 %v2267, %v2263
    %v2744 = vpack.c.b16 %v2268, %v2264
    %v2745 = vpack.c.b16 %v2273, %v2269
    %v2746 = vpack.c.b16 %v2274, %v2270
    %v2747 = vpack.c.b16 %v2275, %v2271
    %v2748 = vpack.c.b16 %v2276, %v2272
    %v2749 = vpack.c.b16 %v2281, %v2277
    %v2750 = vpack.c.b16 %v2282, %v2278
    %v2751 = vpack.c.b16 %v2283, %v2279
    %v2752 = vpack.c.b16 %v2284, %v2280
    %v2753 = vpack.c.b16 %v2289, %v2285
    %v2754 = vpack.c.b16 %v2290, %v2286
    %v2755 = vpack.c.b16 %v2291, %v2287
    %v2756 = vpack.c.b16 %v2292, %v2288
    %v2757 = vpack.c.b16 %v2297, %v2293
    %v2758 = vpack.c.b16 %v2298, %v2294
    %v2759 = vpack.c.b16 %v2299, %v2295
    %v2760 = vpack.c.b16 %v2300, %v2296
    %v2761 = vpack.c.b16 %v2305, %v2301
    %v2762 = vpack.c.b16 %v2306, %v2302
    %v2763 = vpack.c.b16 %v2307, %v2303
    %v2764 = vpack.c.b16 %v2308, %v2304
    %v2765 = vpack.c.b16 %v2313, %v2309
    %v2766 = vpack.c.b16 %v2314, %v2310
    %v2767 = vpack.c.b16 %v2315, %v2311
    %v2768 = vpack.c.b16 %v2316, %v2312
    %v2769 = vpack.c.b16 %v2321, %v2317
    %v2770 = vpack.c.b16 %v2322, %v2318
    %v2771 = vpack.c.b16 %v2323, %v2319
    %v2772 = vpack.c.b16 %v2324, %v2320
    %v2773 = vpack.c.b16 %v2329, %v2325
    %v2774 = vpack.c.b16 %v2330, %v2326
    %v2775 = vpack.c.b16 %v2331, %v2327
    %v2776 = vpack.c.b16 %v2332, %v2328
    %v2777 = vpack.c.b16 %v2337, %v2333
    %v2778 = vpack.c.b16 %v2338, %v2334
    %v2779 = vpack.c.b16 %v2339, %v2335
    %v2780 = vpack.c.b16 %v2340, %v2336
    %v2781 = vpack.c.b16 %v2345, %v2341
    %v2782 = vpack.c.b16 %v2346, %v2342
    %v2783 = vpack.c.b16 %v2347, %v2343
    %v2784 = vpack.c.b16 %v2348, %v2344
    %v2785 = vpack.c.b16 %v2353, %v2349
    %v2786 = vpack.c.b16 %v2354, %v2350
    %v2787 = vpack.c.b16 %v2355, %v2351
    %v2788 = vpack.c.b16 %v2356, %v2352
    %v2789 = vpack.c.b16 %v2361, %v2357
    %v2790 = vpack.c.b16 %v2362, %v2358
    %v2791 = vpack.c.b16 %v2363, %v2359
    %v2792 = vpack.c.b16 %v2364, %v2360
    %v2793 = vpack.c.b16 %v2369, %v2365
    %v2794 = vpack.c.b16 %v2370, %v2366
    %v2795 = vpack.c.b16 %v2371, %v2367
    %v2796 = vpack.c.b16 %v2372, %v2368
    %v2797 = vpack.c.b16 %v2377, %v2373
    %v2798 = vpack.c.b16 %v2378, %v2374
    %v2799 = vpack.c.b16 %v2379, %v2375
    %v2800 = vpack.c.b16 %v2380, %v2376
    %v2801 = vpack.c.b16 %v2385, %v2381
    %v2802 = vpack.c.b16 %v2386, %v2382
    %v2803 = vpack.c.b16 %v2387, %v2383
    %v2804 = vpack.c.b16 %v2388, %v2384
    %v2805 = vpack.c.b16 %v2393, %v2389
    %v2806 = vpack.c.b16 %v2394, %v2390
    %v2807 = vpack.c.b16 %v2395, %v2391
    %v2808 = vpack.c.b16 %v2396, %v2392
    %v2809 = vpack.c.b16 %v2401, %v2397
    %v2810 = vpack.c.b16 %v2402, %v2398
    %v2811 = vpack.c.b16 %v2403, %v2399
    %v2812 = vpack.c.b16 %v2404, %v2400
    %v2813 = vpack.c.b16 %v2409, %v2405
    %v2814 = vpack.c.b16 %v2410, %v2406
    %v2815 = vpack.c.b16 %v2411, %v2407
    %v2816 = vpack.c.b16 %v2412, %v2408
    %v2817 = vpack.c.b16 %v2417, %v2413
    %v2818 = vpack.c.b16 %v2418, %v2414
    %v2819 = vpack.c.b16 %v2419, %v2415
    %v2820 = vpack.c.b16 %v2420, %v2416
    %v2821 = vpack.c.b16 %v2425, %v2421
    %v2822 = vpack.c.b16 %v2426, %v2422
    %v2823 = vpack.c.b16 %v2427, %v2423
    %v2824 = vpack.c.b16 %v2428, %v2424
    %v2825 = vpack.c.b16 %v2433, %v2429
    %v2826 = vpack.c.b16 %v2434, %v2430
    %v2827 = vpack.c.b16 %v2435, %v2431
    %v2828 = vpack.c.b16 %v2436, %v2432
    %v2829 = vpack.c.b16 %v2441, %v2437
    %v2830 = vpack.c.b16 %v2442, %v2438
    %v2831 = vpack.c.b16 %v2443, %v2439
    %v2832 = vpack.c.b16 %v2444, %v2440
    %v2833 = vpack.c.b16 %v2449, %v2445
    %v2834 = vpack.c.b16 %v2450, %v2446
    %v2835 = vpack.c.b16 %v2451, %v2447
    %v2836 = vpack.c.b16 %v2452, %v2448
    %v3222 = vlaneseq
    %v3223 = vshrl.u32 %v3222, 7
    %v3224 = vsub.s32 0, %v3223
    %v3225 = vrot.slane %v1300, %v3224
    %v3226 = vlaneseq
    %v3227 = vshrl.u32 %v3226, 7
    %v3228 = vsub.s32 1, %v3227
    %v3229 = vrot.slane %v1300, %v3228
    %v3230 = vlaneseq
    %v3231 = vshrl.u32 %v3230, 7
    %v3232 = vsub.s32 2, %v3231
    %v3233 = vrot.slane %v1300, %v3232
    %v3234 = vlaneseq
    %v3235 = vshrl.u32 %v3234, 7
    %v3236 = vsub.s32 3, %v3235
    %v3237 = vrot.slane %v1300, %v3236
    %3242 = vmatprep.subr.bf16.mxu0 %v2454
    %3243 = vmatpush1.bf16.msra.mxu0 %v2453
    %3244 = vmatprep.subr.bf16.mxu0 %v2458
    %3245 = vmatpush1.bf16.msra.mxu0 %v2457
    %3246 = vmatprep.subr.bf16.mxu0 %v2462
    %3247 = vmatpush1.bf16.msra.mxu0 %v2461
    %3248 = vmatprep.subr.bf16.mxu0 %v2466
    %3249 = vmatpush1.bf16.msra.mxu0 %v2465
    %3250 = vmatprep.subr.bf16.mxu0 %v2470
    %3251 = vmatpush1.bf16.msra.mxu0 %v2469
    %3252 = vmatprep.subr.bf16.mxu0 %v2474
    %3253 = vmatpush1.bf16.msra.mxu0 %v2473
    %3254 = vmatprep.subr.bf16.mxu0 %v2478
    %3255 = vmatpush1.bf16.msra.mxu0 %v2477
    %3256 = vmatprep.subr.bf16.mxu0 %v2482
    %3257 = vmatpush1.bf16.msra.mxu0 %v2481
    %3258 = vmatprep.subr.bf16.mxu0 %v2486
    %3259 = vmatpush1.bf16.msra.mxu0 %v2485
    %3260 = vmatprep.subr.bf16.mxu0 %v2490
    %3261 = vmatpush1.bf16.msra.mxu0 %v2489
    %3262 = vmatprep.subr.bf16.mxu0 %v2494
    %3263 = vmatpush1.bf16.msra.mxu0 %v2493
    %3264 = vmatprep.subr.bf16.mxu0 %v2498
    %3265 = vmatpush1.bf16.msra.mxu0 %v2497
    %3266 = vmatprep.subr.bf16.mxu0 %v2502
    %3267 = vmatpush1.bf16.msra.mxu0 %v2501
    %3268 = vmatprep.subr.bf16.mxu0 %v2506
    %3269 = vmatpush1.bf16.msra.mxu0 %v2505
    %3270 = vmatprep.subr.bf16.mxu0 %v2510
    %3271 = vmatpush1.bf16.msra.mxu0 %v2509
    %3272 = vmatprep.subr.bf16.mxu0 %v2514
    %3273 = vmatpush1.bf16.msra.mxu0 %v2513
    %3274 = vmatprep.mubr.bf16.mxu0 %v1289
    %3275 = vmatmul.mubr.bf16.gmra.mrb[0].mxu0 %v1288
    %v3276 = vpop.f32.mrb[0].mxu0
    %v3277 = vadd.f32 %v3225, %v3276
    %v3278 = vpop.f32.mrb[0].mxu0
    %v3279 = vadd.f32 %v3229, %v3278
    %v3280 = vpop.f32.mrb[0].mxu0
    %v3281 = vpop.f32.mrb[0].mxu0
    %3282 = vdwg.mxu0
    %3283 = vmatprep.subr.bf16.mxu0 %v2518
    %3284 = vmatpush1.bf16.msra.mxu0 %v2517
    %3285 = vmatprep.subr.bf16.mxu0 %v2522
    %3286 = vmatpush1.bf16.msra.mxu0 %v2521
    %3287 = vmatprep.subr.bf16.mxu0 %v2526
    %3288 = vmatpush1.bf16.msra.mxu0 %v2525
    %3289 = vmatprep.subr.bf16.mxu0 %v2530
    %3290 = vmatpush1.bf16.msra.mxu0 %v2529
    %3291 = vmatprep.subr.bf16.mxu0 %v2534
    %3292 = vmatpush1.bf16.msra.mxu0 %v2533
    %3293 = vmatprep.subr.bf16.mxu0 %v2538
    %3294 = vmatpush1.bf16.msra.mxu0 %v2537
    %3295 = vmatprep.subr.bf16.mxu0 %v2542
    %3296 = vmatpush1.bf16.msra.mxu0 %v2541
    %3297 = vmatprep.subr.bf16.mxu0 %v2546
    %3298 = vmatpush1.bf16.msra.mxu0 %v2545
    %3299 = vmatprep.subr.bf16.mxu0 %v2550
    %3300 = vmatpush1.bf16.msra.mxu0 %v2549
    %3301 = vmatprep.subr.bf16.mxu0 %v2554
    %3302 = vmatpush1.bf16.msra.mxu0 %v2553
    %3303 = vmatprep.subr.bf16.mxu0 %v2558
    %3304 = vmatpush1.bf16.msra.mxu0 %v2557
    %3305 = vmatprep.subr.bf16.mxu0 %v2562
    %3306 = vmatpush1.bf16.msra.mxu0 %v2561
    %3307 = vmatprep.subr.bf16.mxu0 %v2566
    %3308 = vmatpush1.bf16.msra.mxu0 %v2565
    %3309 = vmatprep.subr.bf16.mxu0 %v2570
    %3310 = vmatpush1.bf16.msra.mxu0 %v2569
    %3311 = vmatprep.subr.bf16.mxu0 %v2574
    %3312 = vmatpush1.bf16.msra.mxu0 %v2573
    %3313 = vmatprep.subr.bf16.mxu0 %v2578
    %3314 = vmatpush1.bf16.msra.mxu0 %v2577
    %3315 = vmatprep.mubr.bf16.mxu0 %v1291
    %3316 = vmatmul.mubr.bf16.gmra.mrb[0].mxu0 %v1290
    %v3317 = vpop.f32.mrb[0].mxu0
    %v3318 = vadd.f32 %v3277, %v3317
    %v3319 = vpop.f32.mrb[0].mxu0
    %v3320 = vadd.f32 %v3279, %v3319
    %v3321 = vpop.f32.mrb[0].mxu0
    %v3322 = vpop.f32.mrb[0].mxu0
    %3323 = vdwg.mxu0
    %3324 = vmatprep.subr.bf16.mxu0 %v2582
    %3325 = vmatpush1.bf16.msra.mxu0 %v2581
    %3326 = vmatprep.subr.bf16.mxu0 %v2586
    %3327 = vmatpush1.bf16.msra.mxu0 %v2585
    %3328 = vmatprep.subr.bf16.mxu0 %v2590
    %3329 = vmatpush1.bf16.msra.mxu0 %v2589
    %3330 = vmatprep.subr.bf16.mxu0 %v2594
    %3331 = vmatpush1.bf16.msra.mxu0 %v2593
    %3332 = vmatprep.subr.bf16.mxu0 %v2598
    %3333 = vmatpush1.bf16.msra.mxu0 %v2597
    %3334 = vmatprep.subr.bf16.mxu0 %v2602
    %3335 = vmatpush1.bf16.msra.mxu0 %v2601
    %3336 = vmatprep.subr.bf16.mxu0 %v2606
    %3337 = vmatpush1.bf16.msra.mxu0 %v2605
    %3338 = vmatprep.subr.bf16.mxu0 %v2610
    %3339 = vmatpush1.bf16.msra.mxu0 %v2609
    %3340 = vmatprep.subr.bf16.mxu0 %v2614
    %3341 = vmatpush1.bf16.msra.mxu0 %v2613
    %3342 = vmatprep.subr.bf16.mxu0 %v2618
    %3343 = vmatpush1.bf16.msra.mxu0 %v2617
    %3344 = vmatprep.subr.bf16.mxu0 %v2622
    %3345 = vmatpush1.bf16.msra.mxu0 %v2621
    %3346 = vmatprep.subr.bf16.mxu0 %v2626
    %3347 = vmatpush1.bf16.msra.mxu0 %v2625
    %3348 = vmatprep.subr.bf16.mxu0 %v2630
    %3349 = vmatpush1.bf16.msra.mxu0 %v2629
    %3350 = vmatprep.subr.bf16.mxu0 %v2634
    %3351 = vmatpush1.bf16.msra.mxu0 %v2633
    %3352 = vmatprep.subr.bf16.mxu0 %v2638
    %3353 = vmatpush1.bf16.msra.mxu0 %v2637
    %3354 = vmatprep.subr.bf16.mxu0 %v2642
    %3355 = vmatpush1.bf16.msra.mxu0 %v2641
    %3356 = vmatprep.mubr.bf16.mxu0 %v1293
    %3357 = vmatmul.mubr.bf16.gmra.mrb[0].mxu0 %v1292
    %v3358 = vpop.f32.mrb[0].mxu0
    %v3359 = vadd.f32 %v3318, %v3358
    %v3360 = vpop.f32.mrb[0].mxu0
    %v3361 = vadd.f32 %v3320, %v3360
    %v3362 = vpop.f32.mrb[0].mxu0
    %v3363 = vpop.f32.mrb[0].mxu0
    %3364 = vdwg.mxu0
    %3365 = vmatprep.subr.bf16.mxu0 %v2646
    %3366 = vmatpush1.bf16.msra.mxu0 %v2645
    %3367 = vmatprep.subr.bf16.mxu0 %v2650
    %3368 = vmatpush1.bf16.msra.mxu0 %v2649
    %3369 = vmatprep.subr.bf16.mxu0 %v2654
    %3370 = vmatpush1.bf16.msra.mxu0 %v2653
    %3371 = vmatprep.subr.bf16.mxu0 %v2658
    %3372 = vmatpush1.bf16.msra.mxu0 %v2657
    %3373 = vmatprep.subr.bf16.mxu0 %v2662
    %3374 = vmatpush1.bf16.msra.mxu0 %v2661
    %3375 = vmatprep.subr.bf16.mxu0 %v2666
    %3376 = vmatpush1.bf16.msra.mxu0 %v2665
    %3377 = vmatprep.subr.bf16.mxu0 %v2670
    %3378 = vmatpush1.bf16.msra.mxu0 %v2669
    %3379 = vmatprep.subr.bf16.mxu0 %v2674
    %3380 = vmatpush1.bf16.msra.mxu0 %v2673
    %3381 = vmatprep.subr.bf16.mxu0 %v2678
    %3382 = vmatpush1.bf16.msra.mxu0 %v2677
    %3383 = vmatprep.subr.bf16.mxu0 %v2682
    %3384 = vmatpush1.bf16.msra.mxu0 %v2681
    %3385 = vmatprep.subr.bf16.mxu0 %v2686
    %3386 = vmatpush1.bf16.msra.mxu0 %v2685
    %3387 = vmatprep.subr.bf16.mxu0 %v2690
    %3388 = vmatpush1.bf16.msra.mxu0 %v2689
    %3389 = vmatprep.subr.bf16.mxu0 %v2694
    %3390 = vmatpush1.bf16.msra.mxu0 %v2693
    %3391 = vmatprep.subr.bf16.mxu0 %v2698
    %3392 = vmatpush1.bf16.msra.mxu0 %v2697
    %3393 = vmatprep.subr.bf16.mxu0 %v2702
    %3394 = vmatpush1.bf16.msra.mxu0 %v2701
    %3395 = vmatprep.subr.bf16.mxu0 %v2706
    %3396 = vmatpush1.bf16.msra.mxu0 %v2705
    %3397 = vmatprep.mubr.bf16.mxu0 %v1295
    %3398 = vmatmul.mubr.bf16.gmra.mrb[0].mxu0 %v1294
    %v3399 = vpop.f32.mrb[0].mxu0
    %v3400 = vadd.f32 %v3359, %v3399
    %v3401 = vpop.f32.mrb[0].mxu0
    %v3402 = vadd.f32 %v3361, %v3401
    %v3403 = vpop.f32.mrb[0].mxu0
    %v3404 = vpop.f32.mrb[0].mxu0
    %3405 = vdwg.mxu0
    %3406 = vmatprep.subr.bf16.mxu0 %v2710
    %3407 = vmatpush1.bf16.msra.mxu0 %v2709
    %3408 = vmatprep.subr.bf16.mxu0 %v2714
    %3409 = vmatpush1.bf16.msra.mxu0 %v2713
    %3410 = vmatprep.subr.bf16.mxu0 %v2718
    %3411 = vmatpush1.bf16.msra.mxu0 %v2717
    %3412 = vmatprep.subr.bf16.mxu0 %v2722
    %3413 = vmatpush1.bf16.msra.mxu0 %v2721
    %3414 = vmatprep.subr.bf16.mxu0 %v2726
    %3415 = vmatpush1.bf16.msra.mxu0 %v2725
    %3416 = vmatprep.subr.bf16.mxu0 %v2730
    %3417 = vmatpush1.bf16.msra.mxu0 %v2729
    %3418 = vmatprep.subr.bf16.mxu0 %v2734
    %3419 = vmatpush1.bf16.msra.mxu0 %v2733
    %3420 = vmatprep.subr.bf16.mxu0 %v2738
    %3421 = vmatpush1.bf16.msra.mxu0 %v2737
    %3422 = vmatprep.subr.bf16.mxu0 %v2742
    %3423 = vmatpush1.bf16.msra.mxu0 %v2741
    %3424 = vmatprep.subr.bf16.mxu0 %v2746
    %3425 = vmatpush1.bf16.msra.mxu0 %v2745
    %3426 = vmatprep.subr.bf16.mxu0 %v2750
    %3427 = vmatpush1.bf16.msra.mxu0 %v2749
    %3428 = vmatprep.subr.bf16.mxu0 %v2754
    %3429 = vmatpush1.bf16.msra.mxu0 %v2753
    %3430 = vmatprep.subr.bf16.mxu0 %v2758
    %3431 = vmatpush1.bf16.msra.mxu0 %v2757
    %3432 = vmatprep.subr.bf16.mxu0 %v2762
    %3433 = vmatpush1.bf16.msra.mxu0 %v2761
    %3434 = vmatprep.subr.bf16.mxu0 %v2766
    %3435 = vmatpush1.bf16.msra.mxu0 %v2765
    %3436 = vmatprep.subr.bf16.mxu0 %v2770
    %3437 = vmatpush1.bf16.msra.mxu0 %v2769
    %3438 = vmatprep.mubr.bf16.mxu0 %v1297
    %3439 = vmatmul.mubr.bf16.gmra.mrb[0].mxu0 %v1296
    %v3440 = vpop.f32.mrb[0].mxu0
    %v3441 = vadd.f32 %v3400, %v3440
    %v3442 = vpop.f32.mrb[0].mxu0
    %v3443 = vadd.f32 %v3402, %v3442
    %v3444 = vpop.f32.mrb[0].mxu0
    %v3445 = vpop.f32.mrb[0].mxu0
    %3446 = vdwg.mxu0
    %3447 = vmatprep.subr.bf16.mxu0 %v2774
    %3448 = vmatpush1.bf16.msra.mxu0 %v2773
    %3449 = vmatprep.subr.bf16.mxu0 %v2778
    %3450 = vmatpush1.bf16.msra.mxu0 %v2777
    %3451 = vmatprep.subr.bf16.mxu0 %v2782
    %3452 = vmatpush1.bf16.msra.mxu0 %v2781
    %3453 = vmatprep.subr.bf16.mxu0 %v2786
    %3454 = vmatpush1.bf16.msra.mxu0 %v2785
    %3455 = vmatprep.subr.bf16.mxu0 %v2790
    %3456 = vmatpush1.bf16.msra.mxu0 %v2789
    %3457 = vmatprep.subr.bf16.mxu0 %v2794
    %3458 = vmatpush1.bf16.msra.mxu0 %v2793
    %3459 = vmatprep.subr.bf16.mxu0 %v2798
    %3460 = vmatpush1.bf16.msra.mxu0 %v2797
    %3461 = vmatprep.subr.bf16.mxu0 %v2802
    %3462 = vmatpush1.bf16.msra.mxu0 %v2801
    %3463 = vmatprep.subr.bf16.mxu0 %v2806
    %3464 = vmatpush1.bf16.msra.mxu0 %v2805
    %3465 = vmatprep.subr.bf16.mxu0 %v2810
    %3466 = vmatpush1.bf16.msra.mxu0 %v2809
    %3467 = vmatprep.subr.bf16.mxu0 %v2814
    %3468 = vmatpush1.bf16.msra.mxu0 %v2813
    %3469 = vmatprep.subr.bf16.mxu0 %v2818
    %3470 = vmatpush1.bf16.msra.mxu0 %v2817
    %3471 = vmatprep.subr.bf16.mxu0 %v2822
    %3472 = vmatpush1.bf16.msra.mxu0 %v2821
    %3473 = vmatprep.subr.bf16.mxu0 %v2826
    %3474 = vmatpush1.bf16.msra.mxu0 %v2825
    %3475 = vmatprep.subr.bf16.mxu0 %v2830
    %3476 = vmatpush1.bf16.msra.mxu0 %v2829
    %3477 = vmatprep.subr.bf16.mxu0 %v2834
    %3478 = vmatpush1.bf16.msra.mxu0 %v2833
    %3479 = vmatprep.mubr.bf16.mxu0 %v1299
    %3480 = vmatmul.mubr.bf16.gmra.mrb[0].mxu0 %v1298
    %v3481 = vpop.f32.mrb[0].mxu0
    %v3482 = vadd.f32 %v3441, %v3481
    %v3483 = vpop.f32.mrb[0].mxu0
    %v3484 = vadd.f32 %v3443, %v3483
    %v3485 = vpop.f32.mrb[0].mxu0
    %v3486 = vpop.f32.mrb[0].mxu0
    %3487 = vdwg.mxu0
    %3488 = vmatprep.subr.bf16.mxu0 %v2456
    %3489 = vmatpush1.bf16.msra.mxu0 %v2455
    %3490 = vmatprep.subr.bf16.mxu0 %v2460
    %3491 = vmatpush1.bf16.msra.mxu0 %v2459
    %3492 = vmatprep.subr.bf16.mxu0 %v2464
    %3493 = vmatpush1.bf16.msra.mxu0 %v2463
    %3494 = vmatprep.subr.bf16.mxu0 %v2468
    %3495 = vmatpush1.bf16.msra.mxu0 %v2467
    %3496 = vmatprep.subr.bf16.mxu0 %v2472
    %3497 = vmatpush1.bf16.msra.mxu0 %v2471
    %3498 = vmatprep.subr.bf16.mxu0 %v2476
    %3499 = vmatpush1.bf16.msra.mxu0 %v2475
    %3500 = vmatprep.subr.bf16.mxu0 %v2480
    %3501 = vmatpush1.bf16.msra.mxu0 %v2479
    %3502 = vmatprep.subr.bf16.mxu0 %v2484
    %3503 = vmatpush1.bf16.msra.mxu0 %v2483
    %3504 = vmatprep.subr.bf16.mxu0 %v2488
    %3505 = vmatpush1.bf16.msra.mxu0 %v2487
    %3506 = vmatprep.subr.bf16.mxu0 %v2492
    %3507 = vmatpush1.bf16.msra.mxu0 %v2491
    %3508 = vmatprep.subr.bf16.mxu0 %v2496
    %3509 = vmatpush1.bf16.msra.mxu0 %v2495
    %3510 = vmatprep.subr.bf16.mxu0 %v2500
    %3511 = vmatpush1.bf16.msra.mxu0 %v2499
    %3512 = vmatprep.subr.bf16.mxu0 %v2504
    %3513 = vmatpush1.bf16.msra.mxu0 %v2503
    %3514 = vmatprep.subr.bf16.mxu0 %v2508
    %3515 = vmatpush1.bf16.msra.mxu0 %v2507
    %3516 = vmatprep.subr.bf16.mxu0 %v2512
    %3517 = vmatpush1.bf16.msra.mxu0 %v2511
    %3518 = vmatprep.subr.bf16.mxu0 %v2516
    %3519 = vmatpush1.bf16.msra.mxu0 %v2515
    %3520 = vmatprep.mubr.bf16.mxu0 %v1289
    %3521 = vmatmul.mubr.bf16.gmra.mrb[0].mxu0 %v1288
    %v3522 = vpop.f32.mrb[0].mxu0
    %v3523 = vadd.f32 %v3233, %v3522
    %v3524 = vpop.f32.mrb[0].mxu0
    %v3525 = vadd.f32 %v3237, %v3524
    %v3526 = vpop.f32.mrb[0].mxu0
    %v3527 = vpop.f32.mrb[0].mxu0
    %3528 = vdwg.mxu0
    %3529 = vmatprep.subr.bf16.mxu0 %v2520
    %3530 = vmatpush1.bf16.msra.mxu0 %v2519
    %3531 = vmatprep.subr.bf16.mxu0 %v2524
    %3532 = vmatpush1.bf16.msra.mxu0 %v2523
    %3533 = vmatprep.subr.bf16.mxu0 %v2528
    %3534 = vmatpush1.bf16.msra.mxu0 %v2527
    %3535 = vmatprep.subr.bf16.mxu0 %v2532
    %3536 = vmatpush1.bf16.msra.mxu0 %v2531
    %3537 = vmatprep.subr.bf16.mxu0 %v2536
    %3538 = vmatpush1.bf16.msra.mxu0 %v2535
    %3539 = vmatprep.subr.bf16.mxu0 %v2540
    %3540 = vmatpush1.bf16.msra.mxu0 %v2539
    %3541 = vmatprep.subr.bf16.mxu0 %v2544
    %3542 = vmatpush1.bf16.msra.mxu0 %v2543
    %3543 = vmatprep.subr.bf16.mxu0 %v2548
    %3544 = vmatpush1.bf16.msra.mxu0 %v2547
    %3545 = vmatprep.subr.bf16.mxu0 %v2552
    %3546 = vmatpush1.bf16.msra.mxu0 %v2551
    %3547 = vmatprep.subr.bf16.mxu0 %v2556
    %3548 = vmatpush1.bf16.msra.mxu0 %v2555
    %3549 = vmatprep.subr.bf16.mxu0 %v2560
    %3550 = vmatpush1.bf16.msra.mxu0 %v2559
    %3551 = vmatprep.subr.bf16.mxu0 %v2564
    %3552 = vmatpush1.bf16.msra.mxu0 %v2563
    %3553 = vmatprep.subr.bf16.mxu0 %v2568
    %3554 = vmatpush1.bf16.msra.mxu0 %v2567
    %3555 = vmatprep.subr.bf16.mxu0 %v2572
    %3556 = vmatpush1.bf16.msra.mxu0 %v2571
    %3557 = vmatprep.subr.bf16.mxu0 %v2576
    %3558 = vmatpush1.bf16.msra.mxu0 %v2575
    %3559 = vmatprep.subr.bf16.mxu0 %v2580
    %3560 = vmatpush1.bf16.msra.mxu0 %v2579
    %3561 = vmatprep.mubr.bf16.mxu0 %v1291
    %3562 = vmatmul.mubr.bf16.gmra.mrb[0].mxu0 %v1290
    %v3563 = vpop.f32.mrb[0].mxu0
    %v3564 = vadd.f32 %v3523, %v3563
    %v3565 = vpop.f32.mrb[0].mxu0
    %v3566 = vadd.f32 %v3525, %v3565
    %v3567 = vpop.f32.mrb[0].mxu0
    %v3568 = vpop.f32.mrb[0].mxu0
    %3569 = vdwg.mxu0
    %3570 = vmatprep.subr.bf16.mxu0 %v2584
    %3571 = vmatpush1.bf16.msra.mxu0 %v2583
    %3572 = vmatprep.subr.bf16.mxu0 %v2588
    %3573 = vmatpush1.bf16.msra.mxu0 %v2587
    %3574 = vmatprep.subr.bf16.mxu0 %v2592
    %3575 = vmatpush1.bf16.msra.mxu0 %v2591
    %3576 = vmatprep.subr.bf16.mxu0 %v2596
    %3577 = vmatpush1.bf16.msra.mxu0 %v2595
    %3578 = vmatprep.subr.bf16.mxu0 %v2600
    %3579 = vmatpush1.bf16.msra.mxu0 %v2599
    %3580 = vmatprep.subr.bf16.mxu0 %v2604
    %3581 = vmatpush1.bf16.msra.mxu0 %v2603
    %3582 = vmatprep.subr.bf16.mxu0 %v2608
    %3583 = vmatpush1.bf16.msra.mxu0 %v2607
    %3584 = vmatprep.subr.bf16.mxu0 %v2612
    %3585 = vmatpush1.bf16.msra.mxu0 %v2611
    %3586 = vmatprep.subr.bf16.mxu0 %v2616
    %3587 = vmatpush1.bf16.msra.mxu0 %v2615
    %3588 = vmatprep.subr.bf16.mxu0 %v2620
    %3589 = vmatpush1.bf16.msra.mxu0 %v2619
    %3590 = vmatprep.subr.bf16.mxu0 %v2624
    %3591 = vmatpush1.bf16.msra.mxu0 %v2623
    %3592 = vmatprep.subr.bf16.mxu0 %v2628
    %3593 = vmatpush1.bf16.msra.mxu0 %v2627
    %3594 = vmatprep.subr.bf16.mxu0 %v2632
    %3595 = vmatpush1.bf16.msra.mxu0 %v2631
    %3596 = vmatprep.subr.bf16.mxu0 %v2636
    %3597 = vmatpush1.bf16.msra.mxu0 %v2635
    %3598 = vmatprep.subr.bf16.mxu0 %v2640
    %3599 = vmatpush1.bf16.msra.mxu0 %v2639
    %3600 = vmatprep.subr.bf16.mxu0 %v2644
    %3601 = vmatpush1.bf16.msra.mxu0 %v2643
    %3602 = vmatprep.mubr.bf16.mxu0 %v1293
    %3603 = vmatmul.mubr.bf16.gmra.mrb[0].mxu0 %v1292
    %v3604 = vpop.f32.mrb[0].mxu0
    %v3605 = vadd.f32 %v3564, %v3604
    %v3606 = vpop.f32.mrb[0].mxu0
    %v3607 = vadd.f32 %v3566, %v3606
    %v3608 = vpop.f32.mrb[0].mxu0
    %v3609 = vpop.f32.mrb[0].mxu0
    %3610 = vdwg.mxu0
    %3611 = vmatprep.subr.bf16.mxu0 %v2648
    %3612 = vmatpush1.bf16.msra.mxu0 %v2647
    %3613 = vmatprep.subr.bf16.mxu0 %v2652
    %3614 = vmatpush1.bf16.msra.mxu0 %v2651
    %3615 = vmatprep.subr.bf16.mxu0 %v2656
    %3616 = vmatpush1.bf16.msra.mxu0 %v2655
    %3617 = vmatprep.subr.bf16.mxu0 %v2660
    %3618 = vmatpush1.bf16.msra.mxu0 %v2659
    %3619 = vmatprep.subr.bf16.mxu0 %v2664
    %3620 = vmatpush1.bf16.msra.mxu0 %v2663
    %3621 = vmatprep.subr.bf16.mxu0 %v2668
    %3622 = vmatpush1.bf16.msra.mxu0 %v2667
    %3623 = vmatprep.subr.bf16.mxu0 %v2672
    %3624 = vmatpush1.bf16.msra.mxu0 %v2671
    %3625 = vmatprep.subr.bf16.mxu0 %v2676
    %3626 = vmatpush1.bf16.msra.mxu0 %v2675
    %3627 = vmatprep.subr.bf16.mxu0 %v2680
    %3628 = vmatpush1.bf16.msra.mxu0 %v2679
    %3629 = vmatprep.subr.bf16.mxu0 %v2684
    %3630 = vmatpush1.bf16.msra.mxu0 %v2683
    %3631 = vmatprep.subr.bf16.mxu0 %v2688
    %3632 = vmatpush1.bf16.msra.mxu0 %v2687
    %3633 = vmatprep.subr.bf16.mxu0 %v2692
    %3634 = vmatpush1.bf16.msra.mxu0 %v2691
    %3635 = vmatprep.subr.bf16.mxu0 %v2696
    %3636 = vmatpush1.bf16.msra.mxu0 %v2695
    %3637 = vmatprep.subr.bf16.mxu0 %v2700
    %3638 = vmatpush1.bf16.msra.mxu0 %v2699
    %3639 = vmatprep.subr.bf16.mxu0 %v2704
    %3640 = vmatpush1.bf16.msra.mxu0 %v2703
    %3641 = vmatprep.subr.bf16.mxu0 %v2708
    %3642 = vmatpush1.bf16.msra.mxu0 %v2707
    %3643 = vmatprep.mubr.bf16.mxu0 %v1295
    %3644 = vmatmul.mubr.bf16.gmra.mrb[0].mxu0 %v1294
    %v3645 = vpop.f32.mrb[0].mxu0
    %v3646 = vadd.f32 %v3605, %v3645
    %v3647 = vpop.f32.mrb[0].mxu0
    %v3648 = vadd.f32 %v3607, %v3647
    %v3649 = vpop.f32.mrb[0].mxu0
    %v3650 = vpop.f32.mrb[0].mxu0
    %3651 = vdwg.mxu0
    %3652 = vmatprep.subr.bf16.mxu0 %v2712
    %3653 = vmatpush1.bf16.msra.mxu0 %v2711
    %3654 = vmatprep.subr.bf16.mxu0 %v2716
    %3655 = vmatpush1.bf16.msra.mxu0 %v2715
    %3656 = vmatprep.subr.bf16.mxu0 %v2720
    %3657 = vmatpush1.bf16.msra.mxu0 %v2719
    %3658 = vmatprep.subr.bf16.mxu0 %v2724
    %3659 = vmatpush1.bf16.msra.mxu0 %v2723
    %3660 = vmatprep.subr.bf16.mxu0 %v2728
    %3661 = vmatpush1.bf16.msra.mxu0 %v2727
    %3662 = vmatprep.subr.bf16.mxu0 %v2732
    %3663 = vmatpush1.bf16.msra.mxu0 %v2731
    %3664 = vmatprep.subr.bf16.mxu0 %v2736
    %3665 = vmatpush1.bf16.msra.mxu0 %v2735
    %3666 = vmatprep.subr.bf16.mxu0 %v2740
    %3667 = vmatpush1.bf16.msra.mxu0 %v2739
    %3668 = vmatprep.subr.bf16.mxu0 %v2744
    %3669 = vmatpush1.bf16.msra.mxu0 %v2743
    %3670 = vmatprep.subr.bf16.mxu0 %v2748
    %3671 = vmatpush1.bf16.msra.mxu0 %v2747
    %3672 = vmatprep.subr.bf16.mxu0 %v2752
    %3673 = vmatpush1.bf16.msra.mxu0 %v2751
    %3674 = vmatprep.subr.bf16.mxu0 %v2756
    %3675 = vmatpush1.bf16.msra.mxu0 %v2755
    %3676 = vmatprep.subr.bf16.mxu0 %v2760
    %3677 = vmatpush1.bf16.msra.mxu0 %v2759
    %3678 = vmatprep.subr.bf16.mxu0 %v2764
    %3679 = vmatpush1.bf16.msra.mxu0 %v2763
    %3680 = vmatprep.subr.bf16.mxu0 %v2768
    %3681 = vmatpush1.bf16.msra.mxu0 %v2767
    %3682 = vmatprep.subr.bf16.mxu0 %v2772
    %3683 = vmatpush1.bf16.msra.mxu0 %v2771
    %3684 = vmatprep.mubr.bf16.mxu0 %v1297
    %3685 = vmatmul.mubr.bf16.gmra.mrb[0].mxu0 %v1296
    %v3686 = vpop.f32.mrb[0].mxu0
    %v3687 = vadd.f32 %v3646, %v3686
    %v3688 = vpop.f32.mrb[0].mxu0
    %v3689 = vadd.f32 %v3648, %v3688
    %v3690 = vpop.f32.mrb[0].mxu0
    %v3691 = vpop.f32.mrb[0].mxu0
    %3692 = vdwg.mxu0
    %3693 = vmatprep.subr.bf16.mxu0 %v2776
    %3694 = vmatpush1.bf16.msra.mxu0 %v2775
    %3695 = vmatprep.subr.bf16.mxu0 %v2780
    %3696 = vmatpush1.bf16.msra.mxu0 %v2779
    %3697 = vmatprep.subr.bf16.mxu0 %v2784
    %3698 = vmatpush1.bf16.msra.mxu0 %v2783
    %3699 = vmatprep.subr.bf16.mxu0 %v2788
    %3700 = vmatpush1.bf16.msra.mxu0 %v2787
    %3701 = vmatprep.subr.bf16.mxu0 %v2792
    %3702 = vmatpush1.bf16.msra.mxu0 %v2791
    %3703 = vmatprep.subr.bf16.mxu0 %v2796
    %3704 = vmatpush1.bf16.msra.mxu0 %v2795
    %3705 = vmatprep.subr.bf16.mxu0 %v2800
    %3706 = vmatpush1.bf16.msra.mxu0 %v2799
    %3707 = vmatprep.subr.bf16.mxu0 %v2804
    %3708 = vmatpush1.bf16.msra.mxu0 %v2803
    %3709 = vmatprep.subr.bf16.mxu0 %v2808
    %3710 = vmatpush1.bf16.msra.mxu0 %v2807
    %3711 = vmatprep.subr.bf16.mxu0 %v2812
    %3712 = vmatpush1.bf16.msra.mxu0 %v2811
    %3713 = vmatprep.subr.bf16.mxu0 %v2816
    %3714 = vmatpush1.bf16.msra.mxu0 %v2815
    %3715 = vmatprep.subr.bf16.mxu0 %v2820
    %3716 = vmatpush1.bf16.msra.mxu0 %v2819
    %3717 = vmatprep.subr.bf16.mxu0 %v2824
    %3718 = vmatpush1.bf16.msra.mxu0 %v2823
    %3719 = vmatprep.subr.bf16.mxu0 %v2828
    %3720 = vmatpush1.bf16.msra.mxu0 %v2827
    %3721 = vmatprep.subr.bf16.mxu0 %v2832
    %3722 = vmatpush1.bf16.msra.mxu0 %v2831
    %3723 = vmatprep.subr.bf16.mxu0 %v2836
    %3724 = vmatpush1.bf16.msra.mxu0 %v2835
    %3725 = vmatprep.mubr.bf16.mxu0 %v1299
    %3726 = vmatmul.mubr.bf16.gmra.mrb[0].mxu0 %v1298
    %v3727 = vpop.f32.mrb[0].mxu0
    %v3728 = vadd.f32 %v3687, %v3727
    %v3729 = vpop.f32.mrb[0].mxu0
    %v3730 = vadd.f32 %v3689, %v3729
    %v3731 = vpop.f32.mrb[0].mxu0
    %v3732 = vpop.f32.mrb[0].mxu0
    %3733 = vdwg.mxu0
    %vm3734 = vcmp.ge.f32.partialorder %v3482, 0.0
    %vm3735 = vcmp.ge.f32.partialorder %v3484, 0.0
    %vm3736 = vcmp.ge.f32.partialorder %v3728, 0.0
    %vm3737 = vcmp.ge.f32.partialorder %v3730, 0.0
    %v3738 = vmul.f32 %v3482, 0.25
    %v3739 = vmul.f32 %v3484, 0.25
    %v3740 = vmul.f32 %v3728, 0.25
    %v3741 = vmul.f32 %v3730, 0.25
    %v3742 = vsel %vm3734, %v3482, %v3738
    %v3743 = vsel %vm3735, %v3484, %v3739
    %v3744 = vsel %vm3736, %v3728, %v3740
    %v3745 = vsel %vm3737, %v3730, %v3741
    %v3746 = vld [vmem:[#allocation10] sm:$0xff]
    %v3747 = vld [vmem:[#allocation10 + $0x8] sm:$0xff]
    %v3748 = vld [vmem:[#allocation10 + $0x10] sm:$0xff]
    %v3749 = vld [vmem:[#allocation10 + $0x18] sm:$0xff]
    %v3750 = vld [vmem:[#allocation10 + $0x20] sm:$0xff]
    %v3751 = vld [vmem:[#allocation10 + $0x28] sm:$0xff]
    %v3752 = vld [vmem:[#allocation10 + $0x30] sm:$0xff]
    %v3753 = vld [vmem:[#allocation10 + $0x38] sm:$0xff]
    %v3754 = vld [vmem:[#allocation10 + $0x40] sm:$0xff]
    %v3755 = vld [vmem:[#allocation10 + $0x48] sm:$0xff]
    %v3756 = vld [vmem:[#allocation10 + $0x50] sm:$0xff]
    %v3757 = vld [vmem:[#allocation10 + $0x58] sm:$0xff]
    %v3758 = vld [vmem:[#allocation10 + $0x60] sm:$0xff]
    %v3759 = vld [vmem:[#allocation10 + $0x68] sm:$0xff]
    %v3760 = vld [vmem:[#allocation10 + $0x70] sm:$0xff]
    %v3761 = vld [vmem:[#allocation10 + $0x78] sm:$0xff]
    %v3762 = vld [vmem:[#allocation10 + $0x80] sm:$0xff]
    %v3763 = vld [vmem:[#allocation10 + $0x88] sm:$0xff]
    %v3764 = vld [vmem:[#allocation10 + $0x90] sm:$0xff]
    %v3765 = vld [vmem:[#allocation10 + $0x98] sm:$0xff]
    %v3766 = vld [vmem:[#allocation10 + $0xa0] sm:$0xff]
    %v3767 = vld [vmem:[#allocation10 + $0xa8] sm:$0xff]
    %v3768 = vld [vmem:[#allocation10 + $0xb0] sm:$0xff]
    %v3769 = vld [vmem:[#allocation10 + $0xb8] sm:$0xff]
    %v3770 = vld [vmem:[#allocation10 + $0xc0] sm:$0xff]
    %v3771 = vld [vmem:[#allocation10 + $0xc8] sm:$0xff]
    %v3772 = vld [vmem:[#allocation10 + $0xd0] sm:$0xff]
    %v3773 = vld [vmem:[#allocation10 + $0xd8] sm:$0xff]
    %v3774 = vld [vmem:[#allocation10 + $0xe0] sm:$0xff]
    %v3775 = vld [vmem:[#allocation10 + $0xe8] sm:$0xff]
    %v3776 = vld [vmem:[#allocation10 + $0xf0] sm:$0xff]
    %v3777 = vld [vmem:[#allocation10 + $0xf8] sm:$0xff]
    %v3778 = vld [vmem:[#allocation10 + $0x100] sm:$0xff]
    %v3779 = vld [vmem:[#allocation10 + $0x108] sm:$0xff]
    %v3780 = vld [vmem:[#allocation10 + $0x110] sm:$0xff]
    %v3781 = vld [vmem:[#allocation10 + $0x118] sm:$0xff]
    %v3782 = vld [vmem:[#allocation10 + $0x120] sm:$0xff]
    %v3783 = vld [vmem:[#allocation10 + $0x128] sm:$0xff]
    %v3784 = vld [vmem:[#allocation10 + $0x130] sm:$0xff]
    %v3785 = vld [vmem:[#allocation10 + $0x138] sm:$0xff]
    %v3786 = vld [vmem:[#allocation10 + $0x140] sm:$0xff]
    %v3787 = vld [vmem:[#allocation10 + $0x148] sm:$0xff]
    %v3788 = vld [vmem:[#allocation10 + $0x150] sm:$0xff]
    %v3789 = vld [vmem:[#allocation10 + $0x158] sm:$0xff]
    %v3790 = vld [vmem:[#allocation10 + $0x160] sm:$0xff]
    %v3791 = vld [vmem:[#allocation10 + $0x168] sm:$0xff]
    %v3792 = vld [vmem:[#allocation10 + $0x170] sm:$0xff]
    %v3793 = vld [vmem:[#allocation10 + $0x178] sm:$0xff]
    %v3794 = vld [vmem:[#allocation10 + $0x180] sm:$0xff]
    %v3795 = vld [vmem:[#allocation10 + $0x188] sm:$0xff]
    %v3796 = vld [vmem:[#allocation10 + $0x190] sm:$0xff]
    %v3797 = vld [vmem:[#allocation10 + $0x198] sm:$0xff]
    %v3798 = vld [vmem:[#allocation10 + $0x1a0] sm:$0xff]
    %v3799 = vld [vmem:[#allocation10 + $0x1a8] sm:$0xff]
    %v3800 = vld [vmem:[#allocation10 + $0x1b0] sm:$0xff]
    %v3801 = vld [vmem:[#allocation10 + $0x1b8] sm:$0xff]
    %v3802 = vld [vmem:[#allocation10 + $0x1c0] sm:$0xff]
    %v3803 = vld [vmem:[#allocation10 + $0x1c8] sm:$0xff]
    %v3804 = vld [vmem:[#allocation10 + $0x1d0] sm:$0xff]
    %v3805 = vld [vmem:[#allocation10 + $0x1d8] sm:$0xff]
    %v3806 = vld [vmem:[#allocation10 + $0x1e0] sm:$0xff]
    %v3807 = vld [vmem:[#allocation10 + $0x1e8] sm:$0xff]
    %v3808 = vld [vmem:[#allocation10 + $0x1f0] sm:$0xff]
    %v3809 = vld [vmem:[#allocation10 + $0x1f8] sm:$0xff]
    %v3810 = vpack.c.bf16 %v3742, %v3742
    %v3811 = vpack.c.bf16 %v3743, %v3743
    %v3812 = vpack.c.bf16 %v3744, %v3744
    %v3813 = vpack.c.bf16 %v3745, %v3745
    %v3814 = vld [vmem:[#allocation11] sm:$0x3]
    %v3879 = vunpack.c.l.b16 %v3746
    %v3880 = vunpack.c.h.b16 %v3746
    %v3881 = vunpack.c.l.b16 %v3747
    %v3882 = vunpack.c.h.b16 %v3747
    %v3883 = vunpack.c.l.b16 %v3748
    %v3884 = vunpack.c.h.b16 %v3748
    %v3885 = vunpack.c.l.b16 %v3749
    %v3886 = vunpack.c.h.b16 %v3749
    %v3887 = vunpack.c.l.b16 %v3750
    %v3888 = vunpack.c.h.b16 %v3750
    %v3889 = vunpack.c.l.b16 %v3751
    %v3890 = vunpack.c.h.b16 %v3751
    %v3891 = vunpack.c.l.b16 %v3752
    %v3892 = vunpack.c.h.b16 %v3752
    %v3893 = vunpack.c.l.b16 %v3753
    %v3894 = vunpack.c.h.b16 %v3753
    %v3895 = vunpack.c.l.b16 %v3754
    %v3896 = vunpack.c.h.b16 %v3754
    %v3897 = vunpack.c.l.b16 %v3755
    %v3898 = vunpack.c.h.b16 %v3755
    %v3899 = vunpack.c.l.b16 %v3756
    %v3900 = vunpack.c.h.b16 %v3756
    %v3901 = vunpack.c.l.b16 %v3757
    %v3902 = vunpack.c.h.b16 %v3757
    %v3903 = vunpack.c.l.b16 %v3758
    %v3904 = vunpack.c.h.b16 %v3758
    %v3905 = vunpack.c.l.b16 %v3759
    %v3906 = vunpack.c.h.b16 %v3759
    %v3907 = vunpack.c.l.b16 %v3760
    %v3908 = vunpack.c.h.b16 %v3760
    %v3909 = vunpack.c.l.b16 %v3761
    %v3910 = vunpack.c.h.b16 %v3761
    %v3911 = vunpack.c.l.b16 %v3762
    %v3912 = vunpack.c.h.b16 %v3762
    %v3913 = vunpack.c.l.b16 %v3763
    %v3914 = vunpack.c.h.b16 %v3763
    %v3915 = vunpack.c.l.b16 %v3764
    %v3916 = vunpack.c.h.b16 %v3764
    %v3917 = vunpack.c.l.b16 %v3765
    %v3918 = vunpack.c.h.b16 %v3765
    %v3919 = vunpack.c.l.b16 %v3766
    %v3920 = vunpack.c.h.b16 %v3766
    %v3921 = vunpack.c.l.b16 %v3767
    %v3922 = vunpack.c.h.b16 %v3767
    %v3923 = vunpack.c.l.b16 %v3768
    %v3924 = vunpack.c.h.b16 %v3768
    %v3925 = vunpack.c.l.b16 %v3769
    %v3926 = vunpack.c.h.b16 %v3769
    %v3927 = vunpack.c.l.b16 %v3770
    %v3928 = vunpack.c.h.b16 %v3770
    %v3929 = vunpack.c.l.b16 %v3771
    %v3930 = vunpack.c.h.b16 %v3771
    %v3931 = vunpack.c.l.b16 %v3772
    %v3932 = vunpack.c.h.b16 %v3772
    %v3933 = vunpack.c.l.b16 %v3773
    %v3934 = vunpack.c.h.b16 %v3773
    %v3935 = vunpack.c.l.b16 %v3774
    %v3936 = vunpack.c.h.b16 %v3774
    %v3937 = vunpack.c.l.b16 %v3775
    %v3938 = vunpack.c.h.b16 %v3775
    %v3939 = vunpack.c.l.b16 %v3776
    %v3940 = vunpack.c.h.b16 %v3776
    %v3941 = vunpack.c.l.b16 %v3777
    %v3942 = vunpack.c.h.b16 %v3777
    %v3943 = vunpack.c.l.b16 %v3778
    %v3944 = vunpack.c.h.b16 %v3778
    %v3945 = vunpack.c.l.b16 %v3779
    %v3946 = vunpack.c.h.b16 %v3779
    %v3947 = vunpack.c.l.b16 %v3780
    %v3948 = vunpack.c.h.b16 %v3780
    %v3949 = vunpack.c.l.b16 %v3781
    %v3950 = vunpack.c.h.b16 %v3781
    %v3951 = vunpack.c.l.b16 %v3782
    %v3952 = vunpack.c.h.b16 %v3782
    %v3953 = vunpack.c.l.b16 %v3783
    %v3954 = vunpack.c.h.b16 %v3783
    %v3955 = vunpack.c.l.b16 %v3784
    %v3956 = vunpack.c.h.b16 %v3784
    %v3957 = vunpack.c.l.b16 %v3785
    %v3958 = vunpack.c.h.b16 %v3785
    %v3959 = vunpack.c.l.b16 %v3786
    %v3960 = vunpack.c.h.b16 %v3786
    %v3961 = vunpack.c.l.b16 %v3787
    %v3962 = vunpack.c.h.b16 %v3787
    %v3963 = vunpack.c.l.b16 %v3788
    %v3964 = vunpack.c.h.b16 %v3788
    %v3965 = vunpack.c.l.b16 %v3789
    %v3966 = vunpack.c.h.b16 %v3789
    %v3967 = vunpack.c.l.b16 %v3790
    %v3968 = vunpack.c.h.b16 %v3790
    %v3969 = vunpack.c.l.b16 %v3791
    %v3970 = vunpack.c.h.b16 %v3791
    %v3971 = vunpack.c.l.b16 %v3792
    %v3972 = vunpack.c.h.b16 %v3792
    %v3973 = vunpack.c.l.b16 %v3793
    %v3974 = vunpack.c.h.b16 %v3793
    %v3975 = vunpack.c.l.b16 %v3794
    %v3976 = vunpack.c.h.b16 %v3794
    %v3977 = vunpack.c.l.b16 %v3795
    %v3978 = vunpack.c.h.b16 %v3795
    %v3979 = vunpack.c.l.b16 %v3796
    %v3980 = vunpack.c.h.b16 %v3796
    %v3981 = vunpack.c.l.b16 %v3797
    %v3982 = vunpack.c.h.b16 %v3797
    %v3983 = vunpack.c.l.b16 %v3798
    %v3984 = vunpack.c.h.b16 %v3798
    %v3985 = vunpack.c.l.b16 %v3799
    %v3986 = vunpack.c.h.b16 %v3799
    %v3987 = vunpack.c.l.b16 %v3800
    %v3988 = vunpack.c.h.b16 %v3800
    %v3989 = vunpack.c.l.b16 %v3801
    %v3990 = vunpack.c.h.b16 %v3801
    %v3991 = vunpack.c.l.b16 %v3802
    %v3992 = vunpack.c.h.b16 %v3802
    %v3993 = vunpack.c.l.b16 %v3803
    %v3994 = vunpack.c.h.b16 %v3803
    %v3995 = vunpack.c.l.b16 %v3804
    %v3996 = vunpack.c.h.b16 %v3804
    %v3997 = vunpack.c.l.b16 %v3805
    %v3998 = vunpack.c.h.b16 %v3805
    %v3999 = vunpack.c.l.b16 %v3806
    %v4000 = vunpack.c.h.b16 %v3806
    %v4001 = vunpack.c.l.b16 %v3807
    %v4002 = vunpack.c.h.b16 %v3807
    %v4003 = vunpack.c.l.b16 %v3808
    %v4004 = vunpack.c.h.b16 %v3808
    %v4005 = vunpack.c.l.b16 %v3809
    %v4006 = vunpack.c.h.b16 %v3809
    %v4007 = vpack.c.b16 %v3881, %v3879
    %v4008 = vpack.c.b16 %v3882, %v3880
    %v4009 = vpack.c.b16 %v3885, %v3883
    %v4010 = vpack.c.b16 %v3886, %v3884
    %v4011 = vpack.c.b16 %v3889, %v3887
    %v4012 = vpack.c.b16 %v3890, %v3888
    %v4013 = vpack.c.b16 %v3893, %v3891
    %v4014 = vpack.c.b16 %v3894, %v3892
    %v4015 = vpack.c.b16 %v3897, %v3895
    %v4016 = vpack.c.b16 %v3898, %v3896
    %v4017 = vpack.c.b16 %v3901, %v3899
    %v4018 = vpack.c.b16 %v3902, %v3900
    %v4019 = vpack.c.b16 %v3905, %v3903
    %v4020 = vpack.c.b16 %v3906, %v3904
    %v4021 = vpack.c.b16 %v3909, %v3907
    %v4022 = vpack.c.b16 %v3910, %v3908
    %v4023 = vpack.c.b16 %v3913, %v3911
    %v4024 = vpack.c.b16 %v3914, %v3912
    %v4025 = vpack.c.b16 %v3917, %v3915
    %v4026 = vpack.c.b16 %v3918, %v3916
    %v4027 = vpack.c.b16 %v3921, %v3919
    %v4028 = vpack.c.b16 %v3922, %v3920
    %v4029 = vpack.c.b16 %v3925, %v3923
    %v4030 = vpack.c.b16 %v3926, %v3924
    %v4031 = vpack.c.b16 %v3929, %v3927
    %v4032 = vpack.c.b16 %v3930, %v3928
    %v4033 = vpack.c.b16 %v3933, %v3931
    %v4034 = vpack.c.b16 %v3934, %v3932
    %v4035 = vpack.c.b16 %v3937, %v3935
    %v4036 = vpack.c.b16 %v3938, %v3936
    %v4037 = vpack.c.b16 %v3941, %v3939
    %v4038 = vpack.c.b16 %v3942, %v3940
    %v4039 = vpack.c.b16 %v3945, %v3943
    %v4040 = vpack.c.b16 %v3946, %v3944
    %v4041 = vpack.c.b16 %v3949, %v3947
    %v4042 = vpack.c.b16 %v3950, %v3948
    %v4043 = vpack.c.b16 %v3953, %v3951
    %v4044 = vpack.c.b16 %v3954, %v3952
    %v4045 = vpack.c.b16 %v3957, %v3955
    %v4046 = vpack.c.b16 %v3958, %v3956
    %v4047 = vpack.c.b16 %v3961, %v3959
    %v4048 = vpack.c.b16 %v3962, %v3960
    %v4049 = vpack.c.b16 %v3965, %v3963
    %v4050 = vpack.c.b16 %v3966, %v3964
    %v4051 = vpack.c.b16 %v3969, %v3967
    %v4052 = vpack.c.b16 %v3970, %v3968
    %v4053 = vpack.c.b16 %v3973, %v3971
    %v4054 = vpack.c.b16 %v3974, %v3972
    %v4055 = vpack.c.b16 %v3977, %v3975
    %v4056 = vpack.c.b16 %v3978, %v3976
    %v4057 = vpack.c.b16 %v3981, %v3979
    %v4058 = vpack.c.b16 %v3982, %v3980
    %v4059 = vpack.c.b16 %v3985, %v3983
    %v4060 = vpack.c.b16 %v3986, %v3984
    %v4061 = vpack.c.b16 %v3989, %v3987
    %v4062 = vpack.c.b16 %v3990, %v3988
    %v4063 = vpack.c.b16 %v3993, %v3991
    %v4064 = vpack.c.b16 %v3994, %v3992
    %v4065 = vpack.c.b16 %v3997, %v3995
    %v4066 = vpack.c.b16 %v3998, %v3996
    %v4067 = vpack.c.b16 %v4001, %v3999
    %v4068 = vpack.c.b16 %v4002, %v4000
    %v4069 = vpack.c.b16 %v4005, %v4003
    %v4070 = vpack.c.b16 %v4006, %v4004
    %v4136 = vlaneseq
    %v4137 = vshrl.u32 %v4136, 7
    %v4138 = vsub.s32 0, %v4137
    %v4139 = vrot.slane %v3814, %v4138
    %v4140 = vlaneseq
    %v4141 = vshrl.u32 %v4140, 7
    %v4142 = vsub.s32 1, %v4141
    %v4143 = vrot.slane %v3814, %v4142
    %4146 = vmatprep.subr.bf16.mxu0 %v4008
    %4147 = vmatpush1.bf16.msra.mxu0 %v4007
    %4148 = vmatprep.subr.bf16.mxu0 %v4010
    %4149 = vmatpush1.bf16.msra.mxu0 %v4009
    %4150 = vmatprep.subr.bf16.mxu0 %v4012
    %4151 = vmatpush1.bf16.msra.mxu0 %v4011
    %4152 = vmatprep.subr.bf16.mxu0 %v4014
    %4153 = vmatpush1.bf16.msra.mxu0 %v4013
    %4154 = vmatprep.subr.bf16.mxu0 %v4016
    %4155 = vmatpush1.bf16.msra.mxu0 %v4015
    %4156 = vmatprep.subr.bf16.mxu0 %v4018
    %4157 = vmatpush1.bf16.msra.mxu0 %v4017
    %4158 = vmatprep.subr.bf16.mxu0 %v4020
    %4159 = vmatpush1.bf16.msra.mxu0 %v4019
    %4160 = vmatprep.subr.bf16.mxu0 %v4022
    %4161 = vmatpush1.bf16.msra.mxu0 %v4021
    %4162 = vmatprep.subr.bf16.mxu0 %v4024
    %4163 = vmatpush1.bf16.msra.mxu0 %v4023
    %4164 = vmatprep.subr.bf16.mxu0 %v4026
    %4165 = vmatpush1.bf16.msra.mxu0 %v4025
    %4166 = vmatprep.subr.bf16.mxu0 %v4028
    %4167 = vmatpush1.bf16.msra.mxu0 %v4027
    %4168 = vmatprep.subr.bf16.mxu0 %v4030
    %4169 = vmatpush1.bf16.msra.mxu0 %v4029
    %4170 = vmatprep.subr.bf16.mxu0 %v4032
    %4171 = vmatpush1.bf16.msra.mxu0 %v4031
    %4172 = vmatprep.subr.bf16.mxu0 %v4034
    %4173 = vmatpush1.bf16.msra.mxu0 %v4033
    %4174 = vmatprep.subr.bf16.mxu0 %v4036
    %4175 = vmatpush1.bf16.msra.mxu0 %v4035
    %4176 = vmatprep.subr.bf16.mxu0 %v4038
    %4177 = vmatpush1.bf16.msra.mxu0 %v4037
    %4178 = vmatprep.mubr.bf16.mxu0 %v3811
    %4179 = vmatmul.mubr.bf16.gmra.mrb[0].mxu0 %v3810
    %v4180 = vpop.f32.mrb[0].mxu0
    %v4181 = vadd.f32 %v4139, %v4180
    %v4182 = vpop.f32.mrb[0].mxu0
    %v4183 = vadd.f32 %v4143, %v4182
    %v4184 = vpop.f32.mrb[0].mxu0
    %v4185 = vpop.f32.mrb[0].mxu0
    %4186 = vdwg.mxu0
    %4187 = vmatprep.subr.bf16.mxu0 %v4040
    %4188 = vmatpush1.bf16.msra.mxu0 %v4039
    %4189 = vmatprep.subr.bf16.mxu0 %v4042
    %4190 = vmatpush1.bf16.msra.mxu0 %v4041
    %4191 = vmatprep.subr.bf16.mxu0 %v4044
    %4192 = vmatpush1.bf16.msra.mxu0 %v4043
    %4193 = vmatprep.subr.bf16.mxu0 %v4046
    %4194 = vmatpush1.bf16.msra.mxu0 %v4045
    %4195 = vmatprep.subr.bf16.mxu0 %v4048
    %4196 = vmatpush1.bf16.msra.mxu0 %v4047
    %4197 = vmatprep.subr.bf16.mxu0 %v4050
    %4198 = vmatpush1.bf16.msra.mxu0 %v4049
    %4199 = vmatprep.subr.bf16.mxu0 %v4052
    %4200 = vmatpush1.bf16.msra.mxu0 %v4051
    %4201 = vmatprep.subr.bf16.mxu0 %v4054
    %4202 = vmatpush1.bf16.msra.mxu0 %v4053
    %4203 = vmatprep.subr.bf16.mxu0 %v4056
    %4204 = vmatpush1.bf16.msra.mxu0 %v4055
    %4205 = vmatprep.subr.bf16.mxu0 %v4058
    %4206 = vmatpush1.bf16.msra.mxu0 %v4057
    %4207 = vmatprep.subr.bf16.mxu0 %v4060
    %4208 = vmatpush1.bf16.msra.mxu0 %v4059
    %4209 = vmatprep.subr.bf16.mxu0 %v4062
    %4210 = vmatpush1.bf16.msra.mxu0 %v4061
    %4211 = vmatprep.subr.bf16.mxu0 %v4064
    %4212 = vmatpush1.bf16.msra.mxu0 %v4063
    %4213 = vmatprep.subr.bf16.mxu0 %v4066
    %4214 = vmatpush1.bf16.msra.mxu0 %v4065
    %4215 = vmatprep.subr.bf16.mxu0 %v4068
    %4216 = vmatpush1.bf16.msra.mxu0 %v4067
    %4217 = vmatprep.subr.bf16.mxu0 %v4070
    %4218 = vmatpush1.bf16.msra.mxu0 %v4069
    %4219 = vmatprep.mubr.bf16.mxu0 %v3813
    %4220 = vmatmul.mubr.bf16.gmra.mrb[0].mxu0 %v3812
    %v4221 = vpop.f32.mrb[0].mxu0
    %v4222 = vadd.f32 %v4181, %v4221
    %v4223 = vpop.f32.mrb[0].mxu0
    %v4224 = vadd.f32 %v4183, %v4223
    %v4225 = vpop.f32.mrb[0].mxu0
    %v4226 = vpop.f32.mrb[0].mxu0
    %4227 = vdwg.mxu0
    %vm4228 = vcmp.ge.f32.partialorder %v4222, 0.0
    %vm4229 = vcmp.ge.f32.partialorder %v4224, 0.0
    %v4230 = vmul.f32 %v4222, 0.25
    %v4231 = vmul.f32 %v4224, 0.25
    %v4232 = vsel %vm4228, %v4222, %v4230
    %v4233 = vsel %vm4229, %v4224, %v4231
    %v4234 = vld [vmem:[%s7] sm:$0xf]
    %v4235 = vld [vmem:[%s7 + $0x4] sm:$0xf]
    %v4236 = vld [vmem:[%s7 + $0x8] sm:$0xf]
    %v4237 = vld [vmem:[%s7 + $0xc] sm:$0xf]
    %v4238 = vld [vmem:[%s7 + $0x10] sm:$0xf]
    %v4239 = vld [vmem:[%s7 + $0x14] sm:$0xf]
    %v4240 = vld [vmem:[%s7 + $0x18] sm:$0xf]
    %v4241 = vld [vmem:[%s7 + $0x1c] sm:$0xf]
    %v4242 = vld [vmem:[%s7 + $0x20] sm:$0xf]
    %v4243 = vld [vmem:[%s7 + $0x24] sm:$0xf]
    %v4244 = vld [vmem:[%s7 + $0x28] sm:$0xf]
    %v4245 = vld [vmem:[%s7 + $0x2c] sm:$0xf]
    %v4246 = vld [vmem:[%s7 + $0x30] sm:$0xf]
    %v4247 = vld [vmem:[%s7 + $0x34] sm:$0xf]
    %v4248 = vld [vmem:[%s7 + $0x38] sm:$0xf]
    %v4249 = vld [vmem:[%s7 + $0x3c] sm:$0xf]
    %v4250 = vld [vmem:[%s7 + $0x40] sm:$0xf]
    %v4251 = vld [vmem:[%s7 + $0x44] sm:$0xf]
    %v4252 = vld [vmem:[%s7 + $0x48] sm:$0xf]
    %v4253 = vld [vmem:[%s7 + $0x4c] sm:$0xf]
    %v4254 = vld [vmem:[%s7 + $0x50] sm:$0xf]
    %v4255 = vld [vmem:[%s7 + $0x54] sm:$0xf]
    %v4256 = vld [vmem:[%s7 + $0x58] sm:$0xf]
    %v4257 = vld [vmem:[%s7 + $0x5c] sm:$0xf]
    %v4258 = vld [vmem:[%s7 + $0x60] sm:$0xf]
    %v4259 = vld [vmem:[%s7 + $0x64] sm:$0xf]
    %v4260 = vld [vmem:[%s7 + $0x68] sm:$0xf]
    %v4261 = vld [vmem:[%s7 + $0x6c] sm:$0xf]
    %v4262 = vld [vmem:[%s7 + $0x70] sm:$0xf]
    %v4263 = vld [vmem:[%s7 + $0x74] sm:$0xf]
    %v4264 = vld [vmem:[%s7 + $0x78] sm:$0xf]
    %v4265 = vld [vmem:[%s7 + $0x7c] sm:$0xf]
    %v4266 = vpack.c.bf16 %v4232, %v4232
    %v4267 = vpack.c.bf16 %v4233, %v4233
    %v4268 = vld [vmem:[#allocation13] sm:$0x1]
    %v4301 = vunpack.c.l.b16 %v4234
    %v4302 = vunpack.c.l.b16 %v4235
    %v4303 = vunpack.c.l.b16 %v4236
    %v4304 = vunpack.c.l.b16 %v4237
    %v4305 = vunpack.c.l.b16 %v4238
    %v4306 = vunpack.c.l.b16 %v4239
    %v4307 = vunpack.c.l.b16 %v4240
    %v4308 = vunpack.c.l.b16 %v4241
    %v4309 = vunpack.c.l.b16 %v4242
    %v4310 = vunpack.c.l.b16 %v4243
    %v4311 = vunpack.c.l.b16 %v4244
    %v4312 = vunpack.c.l.b16 %v4245
    %v4313 = vunpack.c.l.b16 %v4246
    %v4314 = vunpack.c.l.b16 %v4247
    %v4315 = vunpack.c.l.b16 %v4248
    %v4316 = vunpack.c.l.b16 %v4249
    %v4317 = vunpack.c.l.b16 %v4250
    %v4318 = vunpack.c.l.b16 %v4251
    %v4319 = vunpack.c.l.b16 %v4252
    %v4320 = vunpack.c.l.b16 %v4253
    %v4321 = vunpack.c.l.b16 %v4254
    %v4322 = vunpack.c.l.b16 %v4255
    %v4323 = vunpack.c.l.b16 %v4256
    %v4324 = vunpack.c.l.b16 %v4257
    %v4325 = vunpack.c.l.b16 %v4258
    %v4326 = vunpack.c.l.b16 %v4259
    %v4327 = vunpack.c.l.b16 %v4260
    %v4328 = vunpack.c.l.b16 %v4261
    %v4329 = vunpack.c.l.b16 %v4262
    %v4330 = vunpack.c.l.b16 %v4263
    %v4331 = vunpack.c.l.b16 %v4264
    %v4332 = vunpack.c.l.b16 %v4265
    %v4333 = vpack.c.b16 %v4302, %v4301
    %v4334 = vpack.c.b16 %v4304, %v4303
    %v4335 = vpack.c.b16 %v4306, %v4305
    %v4336 = vpack.c.b16 %v4308, %v4307
    %v4337 = vpack.c.b16 %v4310, %v4309
    %v4338 = vpack.c.b16 %v4312, %v4311
    %v4339 = vpack.c.b16 %v4314, %v4313
    %v4340 = vpack.c.b16 %v4316, %v4315
    %v4341 = vpack.c.b16 %v4318, %v4317
    %v4342 = vpack.c.b16 %v4320, %v4319
    %v4343 = vpack.c.b16 %v4322, %v4321
    %v4344 = vpack.c.b16 %v4324, %v4323
    %v4345 = vpack.c.b16 %v4326, %v4325
    %v4346 = vpack.c.b16 %v4328, %v4327
    %v4347 = vpack.c.b16 %v4330, %v4329
    %v4348 = vpack.c.b16 %v4332, %v4331
    %4365 = vmatprep.subr.bf16.mxu0 0
    %4366 = vmatpush1.bf16.msra.mxu0 %v4333
    %4367 = vmatprep.subr.bf16.mxu0 0
    %4368 = vmatpush1.bf16.msra.mxu0 %v4334
    %4369 = vmatprep.subr.bf16.mxu0 0
    %4370 = vmatpush1.bf16.msra.mxu0 %v4335
    %4371 = vmatprep.subr.bf16.mxu0 0
    %4372 = vmatpush1.bf16.msra.mxu0 %v4336
    %4373 = vmatprep.subr.bf16.mxu0 0
    %4374 = vmatpush1.bf16.msra.mxu0 %v4337
    %4375 = vmatprep.subr.bf16.mxu0 0
    %4376 = vmatpush1.bf16.msra.mxu0 %v4338
    %4377 = vmatprep.subr.bf16.mxu0 0
    %4378 = vmatpush1.bf16.msra.mxu0 %v4339
    %4379 = vmatprep.subr.bf16.mxu0 0
    %4380 = vmatpush1.bf16.msra.mxu0 %v4340
    %4381 = vmatprep.subr.bf16.mxu0 0
    %4382 = vmatpush1.bf16.msra.mxu0 %v4341
    %4383 = vmatprep.subr.bf16.mxu0 0
    %4384 = vmatpush1.bf16.msra.mxu0 %v4342
    %4385 = vmatprep.subr.bf16.mxu0 0
    %4386 = vmatpush1.bf16.msra.mxu0 %v4343
    %4387 = vmatprep.subr.bf16.mxu0 0
    %4388 = vmatpush1.bf16.msra.mxu0 %v4344
    %4389 = vmatprep.subr.bf16.mxu0 0
    %4390 = vmatpush1.bf16.msra.mxu0 %v4345
    %4391 = vmatprep.subr.bf16.mxu0 0
    %4392 = vmatpush1.bf16.msra.mxu0 %v4346
    %4393 = vmatprep.subr.bf16.mxu0 0
    %4394 = vmatpush1.bf16.msra.mxu0 %v4347
    %4395 = vmatprep.subr.bf16.mxu0 0
    %4396 = vmatpush1.bf16.msra.mxu0 %v4348
    %4397 = vmatprep.mubr.bf16.mxu0 %v4267
    %4398 = vmatmul.mubr.bf16.gmra.mrb[0].mxu0 %v4266
    %v4399 = vpop.f32.mrb[0].mxu0
    %v4400 = vadd.f32 %v4268, %v4399
    %v4401 = vpop.f32.mrb[0].mxu0
    %v4402 = vpop.f32.mrb[0].mxu0
    %v4403 = vpop.f32.mrb[0].mxu0
    %4404 = vdwg.mxu0
    %vm4405 = vcmp.ge.f32.partialorder %v4400, 0.0
    %v4406 = vmul.f32 %v4400, 0.25
    %v4407 = vsel %vm4405, %v4400, %v4406
    %v4408 = vld [vmem:[#allocation14] sm:$0xf]
    %v4409 = vld [vmem:[#allocation14 + $0x4] sm:$0xf]
    %v4410 = vld [vmem:[#allocation14 + $0x8] sm:$0xf]
    %v4411 = vld [vmem:[#allocation14 + $0xc] sm:$0xf]
    %v4412 = vld [vmem:[#allocation14 + $0x10] sm:$0xf]
    %v4413 = vld [vmem:[#allocation14 + $0x14] sm:$0xf]
    %v4414 = vld [vmem:[#allocation14 + $0x18] sm:$0xf]
    %v4415 = vld [vmem:[#allocation14 + $0x1c] sm:$0xf]
    %v4416 = vpack.c.bf16 %v4407, %v4407
    %v4417 = vld [vmem:[#allocation16] sm:$0x1]
    %v4426 = vunpack.c.l.b16 %v4408
    %v4427 = vunpack.c.l.b16 %v4409
    %v4428 = vunpack.c.l.b16 %v4410
    %v4429 = vunpack.c.l.b16 %v4411
    %v4430 = vunpack.c.l.b16 %v4412
    %v4431 = vunpack.c.l.b16 %v4413
    %v4432 = vunpack.c.l.b16 %v4414
    %v4433 = vunpack.c.l.b16 %v4415
    %v4434 = vpack.c.b16 %v4427, %v4426
    %v4435 = vpack.c.b16 %v4429, %v4428
    %v4436 = vpack.c.b16 %v4431, %v4430
    %v4437 = vpack.c.b16 %v4433, %v4432
    %vm4442 = vcmask 523264
    %v4444 = vsel %vm4442, %v4416, 0
    %4446 = vmatprep.subr.bf16.mxu0 0
    %4447 = vmatpush1.bf16.msra.mxu0 %v4434
    %4448 = vmatprep.subr.bf16.mxu0 0
    %4449 = vmatpush1.bf16.msra.mxu0 %v4435
    %4450 = vmatprep.subr.bf16.mxu0 0
    %4451 = vmatpush1.bf16.msra.mxu0 %v4436
    %4452 = vmatprep.subr.bf16.mxu0 0
    %4453 = vmatpush1.bf16.msra.mxu0 %v4437
    %4454 = vmatprep.subr.bf16.mxu0 0
    %4455 = vmatpush1.bf16.msra.mxu0 0
    %4456 = vmatprep.subr.bf16.mxu0 0
    %4457 = vmatpush1.bf16.msra.mxu0 0
    %4458 = vmatprep.subr.bf16.mxu0 0
    %4459 = vmatpush1.bf16.msra.mxu0 0
    %4460 = vmatprep.subr.bf16.mxu0 0
    %4461 = vmatpush1.bf16.msra.mxu0 0
    %4462 = vmatprep.subr.bf16.mxu0 0
    %4463 = vmatpush1.bf16.msra.mxu0 0
    %4464 = vmatprep.subr.bf16.mxu0 0
    %4465 = vmatpush1.bf16.msra.mxu0 0
    %4466 = vmatprep.subr.bf16.mxu0 0
    %4467 = vmatpush1.bf16.msra.mxu0 0
    %4468 = vmatprep.subr.bf16.mxu0 0
    %4469 = vmatpush1.bf16.msra.mxu0 0
    %4470 = vmatprep.subr.bf16.mxu0 0
    %4471 = vmatpush1.bf16.msra.mxu0 0
    %4472 = vmatprep.subr.bf16.mxu0 0
    %4473 = vmatpush1.bf16.msra.mxu0 0
    %4474 = vmatprep.subr.bf16.mxu0 0
    %4475 = vmatpush1.bf16.msra.mxu0 0
    %4476 = vmatprep.subr.bf16.mxu0 0
    %4477 = vmatpush1.bf16.msra.mxu0 0
    %4478 = vmatprep.mubr.bf16.mxu0 0
    %4479 = vmatmul.mubr.bf16.gmra.mrb[0].mxu0 %v4444
    %v4480 = vpop.f32.mrb[0].mxu0
    %v4481 = vadd.f32 %v4417, %v4480
    %v4482 = vpop.f32.mrb[0].mxu0
    %v4483 = vpop.f32.mrb[0].mxu0
    %v4484 = vpop.f32.mrb[0].mxu0
    %4485 = vdwg.mxu0
    %v4486 = vrot.slane %v594, 7
    %v4487 = vrot.slane %v596, 7
    %v4488 = vrot.slane %v665, 7
    %v4489 = vrot.slane %v667, 7
    %v4494 = vrot.slane %v736, 6
    %v4495 = vrot.slane %v738, 6
    %v4496 = vrot.slane %v807, 6
    %v4497 = vrot.slane %v809, 6
    %vm4502 = vcmask 1040384
    %v4503 = vsel %vm4502, %v452, %v4486
    %v4504 = vsel %vm4502, %v454, %v4487
    %v4505 = vsel %vm4502, %v523, %v4488
    %v4506 = vsel %vm4502, %v525, %v4489
    %vm4507 = vcmask 1041408
    %v4508 = vsel %vm4507, %v4503, %v4494
    %v4509 = vsel %vm4507, %v4504, %v4495
    %v4510 = vsel %vm4507, %v4505, %v4496
    %v4511 = vsel %vm4507, %v4506, %v4497
    %v4512 = vld [vmem:[#allocation17] sm:$0xff]
    %v4513 = vld [vmem:[#allocation17 + $0x8] sm:$0xff]
    %v4514 = vld [vmem:[#allocation17 + $0x10] sm:$0xff]
    %v4515 = vld [vmem:[#allocation17 + $0x18] sm:$0xff]
    %v4516 = vld [vmem:[#allocation17 + $0x20] sm:$0xff]
    %v4517 = vld [vmem:[#allocation17 + $0x28] sm:$0xff]
    %v4518 = vld [vmem:[#allocation17 + $0x30] sm:$0xff]
    %v4519 = vld [vmem:[#allocation17 + $0x38] sm:$0xff]
    %v4520 = vld [vmem:[#allocation17 + $0x40] sm:$0xff]
    %v4521 = vld [vmem:[#allocation17 + $0x48] sm:$0xff]
    %v4522 = vld [vmem:[#allocation17 + $0x50] sm:$0xff]
    %v4523 = vld [vmem:[#allocation17 + $0x58] sm:$0xff]
    %v4524 = vld [vmem:[#allocation17 + $0x60] sm:$0xff]
    %v4525 = vld [vmem:[#allocation17 + $0x68] sm:$0xff]
    %v4526 = vld [vmem:[#allocation17 + $0x70] sm:$0xff]
    %v4527 = vld [vmem:[#allocation17 + $0x78] sm:$0xff]
    %v4528 = vld [vmem:[#allocation17 + $0x80] sm:$0xff]
    %v4529 = vld [vmem:[#allocation17 + $0x88] sm:$0xff]
    %v4530 = vld [vmem:[#allocation17 + $0x90] sm:$0xff]
    %v4531 = vld [vmem:[#allocation17 + $0x98] sm:$0xff]
    %v4532 = vld [vmem:[#allocation17 + $0xa0] sm:$0xff]
    %v4533 = vld [vmem:[#allocation17 + $0xa8] sm:$0xff]
    %v4534 = vld [vmem:[#allocation17 + $0xb0] sm:$0xff]
    %v4535 = vld [vmem:[#allocation17 + $0xb8] sm:$0xff]
    %v4536 = vld [vmem:[#allocation17 + $0xc0] sm:$0xff]
    %v4537 = vld [vmem:[#allocation17 + $0xc8] sm:$0xff]
    %v4538 = vld [vmem:[#allocation17 + $0xd0] sm:$0xff]
    %v4539 = vld [vmem:[#allocation17 + $0xd8] sm:$0xff]
    %v4540 = vld [vmem:[#allocation17 + $0xe0] sm:$0xff]
    %v4541 = vld [vmem:[#allocation17 + $0xe8] sm:$0xff]
    %v4542 = vld [vmem:[#allocation17 + $0xf0] sm:$0xff]
    %v4543 = vld [vmem:[#allocation17 + $0xf8] sm:$0xff]
    %v4544 = vld [vmem:[#allocation17 + $0x100] sm:$0xff]
    %v4545 = vld [vmem:[#allocation17 + $0x108] sm:$0xff]
    %v4546 = vld [vmem:[#allocation17 + $0x110] sm:$0xff]
    %v4547 = vld [vmem:[#allocation17 + $0x118] sm:$0xff]
    %v4548 = vld [vmem:[#allocation17 + $0x120] sm:$0xff]
    %v4549 = vld [vmem:[#allocation17 + $0x128] sm:$0xff]
    %v4550 = vld [vmem:[#allocation17 + $0x130] sm:$0xff]
    %v4551 = vld [vmem:[#allocation17 + $0x138] sm:$0xff]
    %v4552 = vld [vmem:[#allocation17 + $0x140] sm:$0xff]
    %v4553 = vld [vmem:[#allocation17 + $0x148] sm:$0xff]
    %v4554 = vld [vmem:[#allocation17 + $0x150] sm:$0xff]
    %v4555 = vld [vmem:[#allocation17 + $0x158] sm:$0xff]
    %v4556 = vld [vmem:[#allocation17 + $0x160] sm:$0xff]
    %v4557 = vld [vmem:[#allocation17 + $0x168] sm:$0xff]
    %v4558 = vld [vmem:[#allocation17 + $0x170] sm:$0xff]
    %v4559 = vld [vmem:[#allocation17 + $0x178] sm:$0xff]
    %v4560 = vld [vmem:[#allocation17 + $0x180] sm:$0xff]
    %v4561 = vld [vmem:[#allocation17 + $0x188] sm:$0xff]
    %v4562 = vld [vmem:[#allocation17 + $0x190] sm:$0xff]
    %v4563 = vld [vmem:[#allocation17 + $0x198] sm:$0xff]
    %v4564 = vld [vmem:[#allocation17 + $0x1a0] sm:$0xff]
    %v4565 = vld [vmem:[#allocation17 + $0x1a8] sm:$0xff]
    %v4566 = vld [vmem:[#allocation17 + $0x1b0] sm:$0xff]
    %v4567 = vld [vmem:[#allocation17 + $0x1b8] sm:$0xff]
    %v4568 = vld [vmem:[#allocation17 + $0x1c0] sm:$0xff]
    %v4569 = vld [vmem:[#allocation17 + $0x1c8] sm:$0xff]
    %v4570 = vld [vmem:[#allocation17 + $0x1d0] sm:$0xff]
    %v4571 = vld [vmem:[#allocation17 + $0x1d8] sm:$0xff]
    %v4572 = vld [vmem:[#allocation17 + $0x1e0] sm:$0xff]
    %v4573 = vld [vmem:[#allocation17 + $0x1e8] sm:$0xff]
    %v4574 = vld [vmem:[#allocation17 + $0x1f0] sm:$0xff]
    %v4575 = vld [vmem:[#allocation17 + $0x1f8] sm:$0xff]
    %v4576 = vpack.c.bf16 %v4508, %v4508
    %v4577 = vpack.c.bf16 %v4509, %v4509
    %v4578 = vpack.c.bf16 %v4510, %v4510
    %v4579 = vpack.c.bf16 %v4511, %v4511
    %v4580 = vld [vmem:[#allocation19] sm:$0x3]
    %v4582 = vlaneseq
    %v4583 = vshrl.u32 %v4582, 7
    %v4584 = vsub.s32 0, %v4583
    %v4585 = vrot.slane %v4580, %v4584
    %v4586 = vlaneseq
    %v4587 = vshrl.u32 %v4586, 7
    %v4588 = vsub.s32 1, %v4587
    %v4589 = vrot.slane %v4580, %v4588
    %v4656 = vunpack.c.l.b16 %v4512
    %v4657 = vunpack.c.h.b16 %v4512
    %v4658 = vunpack.c.l.b16 %v4513
    %v4659 = vunpack.c.h.b16 %v4513
    %v4660 = vunpack.c.l.b16 %v4514
    %v4661 = vunpack.c.h.b16 %v4514
    %v4662 = vunpack.c.l.b16 %v4515
    %v4663 = vunpack.c.h.b16 %v4515
    %v4664 = vunpack.c.l.b16 %v4516
    %v4665 = vunpack.c.h.b16 %v4516
    %v4666 = vunpack.c.l.b16 %v4517
    %v4667 = vunpack.c.h.b16 %v4517
    %v4668 = vunpack.c.l.b16 %v4518
    %v4669 = vunpack.c.h.b16 %v4518
    %v4670 = vunpack.c.l.b16 %v4519
    %v4671 = vunpack.c.h.b16 %v4519
    %v4672 = vunpack.c.l.b16 %v4520
    %v4673 = vunpack.c.h.b16 %v4520
    %v4674 = vunpack.c.l.b16 %v4521
    %v4675 = vunpack.c.h.b16 %v4521
    %v4676 = vunpack.c.l.b16 %v4522
    %v4677 = vunpack.c.h.b16 %v4522
    %v4678 = vunpack.c.l.b16 %v4523
    %v4679 = vunpack.c.h.b16 %v4523
    %v4680 = vunpack.c.l.b16 %v4524
    %v4681 = vunpack.c.h.b16 %v4524
    %v4682 = vunpack.c.l.b16 %v4525
    %v4683 = vunpack.c.h.b16 %v4525
    %v4684 = vunpack.c.l.b16 %v4526
    %v4685 = vunpack.c.h.b16 %v4526
    %v4686 = vunpack.c.l.b16 %v4527
    %v4687 = vunpack.c.h.b16 %v4527
    %v4688 = vunpack.c.l.b16 %v4528
    %v4689 = vunpack.c.h.b16 %v4528
    %v4690 = vunpack.c.l.b16 %v4529
    %v4691 = vunpack.c.h.b16 %v4529
    %v4692 = vunpack.c.l.b16 %v4530
    %v4693 = vunpack.c.h.b16 %v4530
    %v4694 = vunpack.c.l.b16 %v4531
    %v4695 = vunpack.c.h.b16 %v4531
    %v4696 = vunpack.c.l.b16 %v4532
    %v4697 = vunpack.c.h.b16 %v4532
    %v4698 = vunpack.c.l.b16 %v4533
    %v4699 = vunpack.c.h.b16 %v4533
    %v4700 = vunpack.c.l.b16 %v4534
    %v4701 = vunpack.c.h.b16 %v4534
    %v4702 = vunpack.c.l.b16 %v4535
    %v4703 = vunpack.c.h.b16 %v4535
    %v4704 = vunpack.c.l.b16 %v4536
    %v4705 = vunpack.c.h.b16 %v4536
    %v4706 = vunpack.c.l.b16 %v4537
    %v4707 = vunpack.c.h.b16 %v4537
    %v4708 = vunpack.c.l.b16 %v4538
    %v4709 = vunpack.c.h.b16 %v4538
    %v4710 = vunpack.c.l.b16 %v4539
    %v4711 = vunpack.c.h.b16 %v4539
    %v4712 = vunpack.c.l.b16 %v4540
    %v4713 = vunpack.c.h.b16 %v4540
    %v4714 = vunpack.c.l.b16 %v4541
    %v4715 = vunpack.c.h.b16 %v4541
    %v4716 = vunpack.c.l.b16 %v4542
    %v4717 = vunpack.c.h.b16 %v4542
    %v4718 = vunpack.c.l.b16 %v4543
    %v4719 = vunpack.c.h.b16 %v4543
    %v4720 = vunpack.c.l.b16 %v4544
    %v4721 = vunpack.c.h.b16 %v4544
    %v4722 = vunpack.c.l.b16 %v4545
    %v4723 = vunpack.c.h.b16 %v4545
    %v4724 = vunpack.c.l.b16 %v4546
    %v4725 = vunpack.c.h.b16 %v4546
    %v4726 = vunpack.c.l.b16 %v4547
    %v4727 = vunpack.c.h.b16 %v4547
    %v4728 = vunpack.c.l.b16 %v4548
    %v4729 = vunpack.c.h.b16 %v4548
    %v4730 = vunpack.c.l.b16 %v4549
    %v4731 = vunpack.c.h.b16 %v4549
    %v4732 = vunpack.c.l.b16 %v4550
    %v4733 = vunpack.c.h.b16 %v4550
    %v4734 = vunpack.c.l.b16 %v4551
    %v4735 = vunpack.c.h.b16 %v4551
    %v4736 = vunpack.c.l.b16 %v4552
    %v4737 = vunpack.c.h.b16 %v4552
    %v4738 = vunpack.c.l.b16 %v4553
    %v4739 = vunpack.c.h.b16 %v4553
    %v4740 = vunpack.c.l.b16 %v4554
    %v4741 = vunpack.c.h.b16 %v4554
    %v4742 = vunpack.c.l.b16 %v4555
    %v4743 = vunpack.c.h.b16 %v4555
    %v4744 = vunpack.c.l.b16 %v4556
    %v4745 = vunpack.c.h.b16 %v4556
    %v4746 = vunpack.c.l.b16 %v4557
    %v4747 = vunpack.c.h.b16 %v4557
    %v4748 = vunpack.c.l.b16 %v4558
    %v4749 = vunpack.c.h.b16 %v4558
    %v4750 = vunpack.c.l.b16 %v4559
    %v4751 = vunpack.c.h.b16 %v4559
    %v4752 = vunpack.c.l.b16 %v4560
    %v4753 = vunpack.c.h.b16 %v4560
    %v4754 = vunpack.c.l.b16 %v4561
    %v4755 = vunpack.c.h.b16 %v4561
    %v4756 = vunpack.c.l.b16 %v4562
    %v4757 = vunpack.c.h.b16 %v4562
    %v4758 = vunpack.c.l.b16 %v4563
    %v4759 = vunpack.c.h.b16 %v4563
    %v4760 = vunpack.c.l.b16 %v4564
    %v4761 = vunpack.c.h.b16 %v4564
    %v4762 = vunpack.c.l.b16 %v4565
    %v4763 = vunpack.c.h.b16 %v4565
    %v4764 = vunpack.c.l.b16 %v4566
    %v4765 = vunpack.c.h.b16 %v4566
    %v4766 = vunpack.c.l.b16 %v4567
    %v4767 = vunpack.c.h.b16 %v4567
    %v4768 = vunpack.c.l.b16 %v4568
    %v4769 = vunpack.c.h.b16 %v4568
    %v4770 = vunpack.c.l.b16 %v4569
    %v4771 = vunpack.c.h.b16 %v4569
    %v4772 = vunpack.c.l.b16 %v4570
    %v4773 = vunpack.c.h.b16 %v4570
    %v4774 = vunpack.c.l.b16 %v4571
    %v4775 = vunpack.c.h.b16 %v4571
    %v4776 = vunpack.c.l.b16 %v4572
    %v4777 = vunpack.c.h.b16 %v4572
    %v4778 = vunpack.c.l.b16 %v4573
    %v4779 = vunpack.c.h.b16 %v4573
    %v4780 = vunpack.c.l.b16 %v4574
    %v4781 = vunpack.c.h.b16 %v4574
    %v4782 = vunpack.c.l.b16 %v4575
    %v4783 = vunpack.c.h.b16 %v4575
    %v4784 = vpack.c.b16 %v4658, %v4656
    %v4785 = vpack.c.b16 %v4659, %v4657
    %v4786 = vpack.c.b16 %v4662, %v4660
    %v4787 = vpack.c.b16 %v4663, %v4661
    %v4788 = vpack.c.b16 %v4666, %v4664
    %v4789 = vpack.c.b16 %v4667, %v4665
    %v4790 = vpack.c.b16 %v4670, %v4668
    %v4791 = vpack.c.b16 %v4671, %v4669
    %v4792 = vpack.c.b16 %v4674, %v4672
    %v4793 = vpack.c.b16 %v4675, %v4673
    %v4794 = vpack.c.b16 %v4678, %v4676
    %v4795 = vpack.c.b16 %v4679, %v4677
    %v4796 = vpack.c.b16 %v4682, %v4680
    %v4797 = vpack.c.b16 %v4683, %v4681
    %v4798 = vpack.c.b16 %v4686, %v4684
    %v4799 = vpack.c.b16 %v4687, %v4685
    %v4800 = vpack.c.b16 %v4690, %v4688
    %v4801 = vpack.c.b16 %v4691, %v4689
    %v4802 = vpack.c.b16 %v4694, %v4692
    %v4803 = vpack.c.b16 %v4695, %v4693
    %v4804 = vpack.c.b16 %v4698, %v4696
    %v4805 = vpack.c.b16 %v4699, %v4697
    %v4806 = vpack.c.b16 %v4702, %v4700
    %v4807 = vpack.c.b16 %v4703, %v4701
    %v4808 = vpack.c.b16 %v4706, %v4704
    %v4809 = vpack.c.b16 %v4707, %v4705
    %v4810 = vpack.c.b16 %v4710, %v4708
    %v4811 = vpack.c.b16 %v4711, %v4709
    %v4812 = vpack.c.b16 %v4714, %v4712
    %v4813 = vpack.c.b16 %v4715, %v4713
    %v4814 = vpack.c.b16 %v4718, %v4716
    %v4815 = vpack.c.b16 %v4719, %v4717
    %v4816 = vpack.c.b16 %v4722, %v4720
    %v4817 = vpack.c.b16 %v4723, %v4721
    %v4818 = vpack.c.b16 %v4726, %v4724
    %v4819 = vpack.c.b16 %v4727, %v4725
    %v4820 = vpack.c.b16 %v4730, %v4728
    %v4821 = vpack.c.b16 %v4731, %v4729
    %v4822 = vpack.c.b16 %v4734, %v4732
    %v4823 = vpack.c.b16 %v4735, %v4733
    %v4824 = vpack.c.b16 %v4738, %v4736
    %v4825 = vpack.c.b16 %v4739, %v4737
    %v4826 = vpack.c.b16 %v4742, %v4740
    %v4827 = vpack.c.b16 %v4743, %v4741
    %v4828 = vpack.c.b16 %v4746, %v4744
    %v4829 = vpack.c.b16 %v4747, %v4745
    %v4830 = vpack.c.b16 %v4750, %v4748
    %v4831 = vpack.c.b16 %v4751, %v4749
    %v4832 = vpack.c.b16 %v4754, %v4752
    %v4833 = vpack.c.b16 %v4755, %v4753
    %v4834 = vpack.c.b16 %v4758, %v4756
    %v4835 = vpack.c.b16 %v4759, %v4757
    %v4836 = vpack.c.b16 %v4762, %v4760
    %v4837 = vpack.c.b16 %v4763, %v4761
    %v4838 = vpack.c.b16 %v4766, %v4764
    %v4839 = vpack.c.b16 %v4767, %v4765
    %v4840 = vpack.c.b16 %v4770, %v4768
    %v4841 = vpack.c.b16 %v4771, %v4769
    %v4842 = vpack.c.b16 %v4774, %v4772
    %v4843 = vpack.c.b16 %v4775, %v4773
    %v4844 = vpack.c.b16 %v4778, %v4776
    %v4845 = vpack.c.b16 %v4779, %v4777
    %v4846 = vpack.c.b16 %v4782, %v4780
    %v4847 = vpack.c.b16 %v4783, %v4781
    %4912 = vmatprep.subr.bf16.mxu0 %v4785
    %4913 = vmatpush1.bf16.msra.mxu0 %v4784
    %4914 = vmatprep.subr.bf16.mxu0 %v4787
    %4915 = vmatpush1.bf16.msra.mxu0 %v4786
    %4916 = vmatprep.subr.bf16.mxu0 %v4789
    %4917 = vmatpush1.bf16.msra.mxu0 %v4788
    %4918 = vmatprep.subr.bf16.mxu0 %v4791
    %4919 = vmatpush1.bf16.msra.mxu0 %v4790
    %4920 = vmatprep.subr.bf16.mxu0 %v4793
    %4921 = vmatpush1.bf16.msra.mxu0 %v4792
    %4922 = vmatprep.subr.bf16.mxu0 %v4795
    %4923 = vmatpush1.bf16.msra.mxu0 %v4794
    %4924 = vmatprep.subr.bf16.mxu0 %v4797
    %4925 = vmatpush1.bf16.msra.mxu0 %v4796
    %4926 = vmatprep.subr.bf16.mxu0 %v4799
    %4927 = vmatpush1.bf16.msra.mxu0 %v4798
    %4928 = vmatprep.subr.bf16.mxu0 %v4801
    %4929 = vmatpush1.bf16.msra.mxu0 %v4800
    %4930 = vmatprep.subr.bf16.mxu0 %v4803
    %4931 = vmatpush1.bf16.msra.mxu0 %v4802
    %4932 = vmatprep.subr.bf16.mxu0 %v4805
    %4933 = vmatpush1.bf16.msra.mxu0 %v4804
    %4934 = vmatprep.subr.bf16.mxu0 %v4807
    %4935 = vmatpush1.bf16.msra.mxu0 %v4806
    %4936 = vmatprep.subr.bf16.mxu0 %v4809
    %4937 = vmatpush1.bf16.msra.mxu0 %v4808
    %4938 = vmatprep.subr.bf16.mxu0 %v4811
    %4939 = vmatpush1.bf16.msra.mxu0 %v4810
    %4940 = vmatprep.subr.bf16.mxu0 %v4813
    %4941 = vmatpush1.bf16.msra.mxu0 %v4812
    %4942 = vmatprep.subr.bf16.mxu0 %v4815
    %4943 = vmatpush1.bf16.msra.mxu0 %v4814
    %4944 = vmatprep.mubr.bf16.mxu0 %v4577
    %4945 = vmatmul.mubr.bf16.gmra.mrb[0].mxu0 %v4576
    %v4946 = vpop.f32.mrb[0].mxu0
    %v4947 = vadd.f32 %v4585, %v4946
    %v4948 = vpop.f32.mrb[0].mxu0
    %v4949 = vadd.f32 %v4589, %v4948
    %v4950 = vpop.f32.mrb[0].mxu0
    %v4951 = vpop.f32.mrb[0].mxu0
    %4952 = vdwg.mxu0
    %4953 = vmatprep.subr.bf16.mxu0 %v4817
    %4954 = vmatpush1.bf16.msra.mxu0 %v4816
    %4955 = vmatprep.subr.bf16.mxu0 %v4819
    %4956 = vmatpush1.bf16.msra.mxu0 %v4818
    %4957 = vmatprep.subr.bf16.mxu0 %v4821
    %4958 = vmatpush1.bf16.msra.mxu0 %v4820
    %4959 = vmatprep.subr.bf16.mxu0 %v4823
    %4960 = vmatpush1.bf16.msra.mxu0 %v4822
    %4961 = vmatprep.subr.bf16.mxu0 %v4825
    %4962 = vmatpush1.bf16.msra.mxu0 %v4824
    %4963 = vmatprep.subr.bf16.mxu0 %v4827
    %4964 = vmatpush1.bf16.msra.mxu0 %v4826
    %4965 = vmatprep.subr.bf16.mxu0 %v4829
    %4966 = vmatpush1.bf16.msra.mxu0 %v4828
    %4967 = vmatprep.subr.bf16.mxu0 %v4831
    %4968 = vmatpush1.bf16.msra.mxu0 %v4830
    %4969 = vmatprep.subr.bf16.mxu0 %v4833
    %4970 = vmatpush1.bf16.msra.mxu0 %v4832
    %4971 = vmatprep.subr.bf16.mxu0 %v4835
    %4972 = vmatpush1.bf16.msra.mxu0 %v4834
    %4973 = vmatprep.subr.bf16.mxu0 %v4837
    %4974 = vmatpush1.bf16.msra.mxu0 %v4836
    %4975 = vmatprep.subr.bf16.mxu0 %v4839
    %4976 = vmatpush1.bf16.msra.mxu0 %v4838
    %4977 = vmatprep.subr.bf16.mxu0 %v4841
    %4978 = vmatpush1.bf16.msra.mxu0 %v4840
    %4979 = vmatprep.subr.bf16.mxu0 %v4843
    %4980 = vmatpush1.bf16.msra.mxu0 %v4842
    %4981 = vmatprep.subr.bf16.mxu0 %v4845
    %4982 = vmatpush1.bf16.msra.mxu0 %v4844
    %4983 = vmatprep.subr.bf16.mxu0 %v4847
    %4984 = vmatpush1.bf16.msra.mxu0 %v4846
    %4985 = vmatprep.mubr.bf16.mxu0 %v4579
    %4986 = vmatmul.mubr.bf16.gmra.mrb[0].mxu0 %v4578
    %v4987 = vpop.f32.mrb[0].mxu0
    %v4988 = vadd.f32 %v4947, %v4987
    %v4989 = vpop.f32.mrb[0].mxu0
    %v4990 = vadd.f32 %v4949, %v4989
    %v4991 = vpop.f32.mrb[0].mxu0
    %v4992 = vpop.f32.mrb[0].mxu0
    %4993 = vdwg.mxu0
    %vm4994 = vcmp.ge.f32.partialorder %v4988, 0.0
    %vm4995 = vcmp.ge.f32.partialorder %v4990, 0.0
    %v4996 = vmul.f32 %v4988, 0.25
    %v4997 = vmul.f32 %v4990, 0.25
    %v4998 = vsel %vm4994, %v4988, %v4996
    %v4999 = vsel %vm4995, %v4990, %v4997
    %v5000 = vld [vmem:[%s13] sm:$0xf]
    %v5001 = vld [vmem:[%s13 + $0x4] sm:$0xf]
    %v5002 = vld [vmem:[%s13 + $0x8] sm:$0xf]
    %v5003 = vld [vmem:[%s13 + $0xc] sm:$0xf]
    %v5004 = vld [vmem:[%s13 + $0x10] sm:$0xf]
    %v5005 = vld [vmem:[%s13 + $0x14] sm:$0xf]
    %v5006 = vld [vmem:[%s13 + $0x18] sm:$0xf]
    %v5007 = vld [vmem:[%s13 + $0x1c] sm:$0xf]
    %v5008 = vld [vmem:[%s13 + $0x20] sm:$0xf]
    %v5009 = vld [vmem:[%s13 + $0x24] sm:$0xf]
    %v5010 = vld [vmem:[%s13 + $0x28] sm:$0xf]
    %v5011 = vld [vmem:[%s13 + $0x2c] sm:$0xf]
    %v5012 = vld [vmem:[%s13 + $0x30] sm:$0xf]
    %v5013 = vld [vmem:[%s13 + $0x34] sm:$0xf]
    %v5014 = vld [vmem:[%s13 + $0x38] sm:$0xf]
    %v5015 = vld [vmem:[%s13 + $0x3c] sm:$0xf]
    %v5016 = vld [vmem:[%s13 + $0x40] sm:$0xf]
    %v5017 = vld [vmem:[%s13 + $0x44] sm:$0xf]
    %v5018 = vld [vmem:[%s13 + $0x48] sm:$0xf]
    %v5019 = vld [vmem:[%s13 + $0x4c] sm:$0xf]
    %v5020 = vld [vmem:[%s13 + $0x50] sm:$0xf]
    %v5021 = vld [vmem:[%s13 + $0x54] sm:$0xf]
    %v5022 = vld [vmem:[%s13 + $0x58] sm:$0xf]
    %v5023 = vld [vmem:[%s13 + $0x5c] sm:$0xf]
    %v5024 = vld [vmem:[%s13 + $0x60] sm:$0xf]
    %v5025 = vld [vmem:[%s13 + $0x64] sm:$0xf]
    %v5026 = vld [vmem:[%s13 + $0x68] sm:$0xf]
    %v5027 = vld [vmem:[%s13 + $0x6c] sm:$0xf]
    %v5028 = vld [vmem:[%s13 + $0x70] sm:$0xf]
    %v5029 = vld [vmem:[%s13 + $0x74] sm:$0xf]
    %v5030 = vld [vmem:[%s13 + $0x78] sm:$0xf]
    %v5031 = vld [vmem:[%s13 + $0x7c] sm:$0xf]
    %v5032 = vpack.c.bf16 %v4998, %v4998
    %v5033 = vpack.c.bf16 %v4999, %v4999
    %v5034 = vld [vmem:[#allocation20] sm:$0x1]
    %v5036 = vlaneseq
    %v5037 = vshrl.u32 %v5036, 7
    %v5038 = vsub.s32 0, %v5037
    %v5039 = vrot.slane %v5034, %v5038
    %v5073 = vunpack.c.l.b16 %v5000
    %v5074 = vunpack.c.l.b16 %v5001
    %v5075 = vunpack.c.l.b16 %v5002
    %v5076 = vunpack.c.l.b16 %v5003
    %v5077 = vunpack.c.l.b16 %v5004
    %v5078 = vunpack.c.l.b16 %v5005
    %v5079 = vunpack.c.l.b16 %v5006
    %v5080 = vunpack.c.l.b16 %v5007
    %v5081 = vunpack.c.l.b16 %v5008
    %v5082 = vunpack.c.l.b16 %v5009
    %v5083 = vunpack.c.l.b16 %v5010
    %v5084 = vunpack.c.l.b16 %v5011
    %v5085 = vunpack.c.l.b16 %v5012
    %v5086 = vunpack.c.l.b16 %v5013
    %v5087 = vunpack.c.l.b16 %v5014
    %v5088 = vunpack.c.l.b16 %v5015
    %v5089 = vunpack.c.l.b16 %v5016
    %v5090 = vunpack.c.l.b16 %v5017
    %v5091 = vunpack.c.l.b16 %v5018
    %v5092 = vunpack.c.l.b16 %v5019
    %v5093 = vunpack.c.l.b16 %v5020
    %v5094 = vunpack.c.l.b16 %v5021
    %v5095 = vunpack.c.l.b16 %v5022
    %v5096 = vunpack.c.l.b16 %v5023
    %v5097 = vunpack.c.l.b16 %v5024
    %v5098 = vunpack.c.l.b16 %v5025
    %v5099 = vunpack.c.l.b16 %v5026
    %v5100 = vunpack.c.l.b16 %v5027
    %v5101 = vunpack.c.l.b16 %v5028
    %v5102 = vunpack.c.l.b16 %v5029
    %v5103 = vunpack.c.l.b16 %v5030
    %v5104 = vunpack.c.l.b16 %v5031
    %v5105 = vpack.c.b16 %v5074, %v5073
    %v5106 = vpack.c.b16 %v5076, %v5075
    %v5107 = vpack.c.b16 %v5078, %v5077
    %v5108 = vpack.c.b16 %v5080, %v5079
    %v5109 = vpack.c.b16 %v5082, %v5081
    %v5110 = vpack.c.b16 %v5084, %v5083
    %v5111 = vpack.c.b16 %v5086, %v5085
    %v5112 = vpack.c.b16 %v5088, %v5087
    %v5113 = vpack.c.b16 %v5090, %v5089
    %v5114 = vpack.c.b16 %v5092, %v5091
    %v5115 = vpack.c.b16 %v5094, %v5093
    %v5116 = vpack.c.b16 %v5096, %v5095
    %v5117 = vpack.c.b16 %v5098, %v5097
    %v5118 = vpack.c.b16 %v5100, %v5099
    %v5119 = vpack.c.b16 %v5102, %v5101
    %v5120 = vpack.c.b16 %v5104, %v5103
    %5137 = vmatprep.subr.bf16.mxu0 0
    %5138 = vmatpush1.bf16.msra.mxu0 %v5105
    %5139 = vmatprep.subr.bf16.mxu0 0
    %5140 = vmatpush1.bf16.msra.mxu0 %v5106
    %5141 = vmatprep.subr.bf16.mxu0 0
    %5142 = vmatpush1.bf16.msra.mxu0 %v5107
    %5143 = vmatprep.subr.bf16.mxu0 0
    %5144 = vmatpush1.bf16.msra.mxu0 %v5108
    %5145 = vmatprep.subr.bf16.mxu0 0
    %5146 = vmatpush1.bf16.msra.mxu0 %v5109
    %5147 = vmatprep.subr.bf16.mxu0 0
    %5148 = vmatpush1.bf16.msra.mxu0 %v5110
    %5149 = vmatprep.subr.bf16.mxu0 0
    %5150 = vmatpush1.bf16.msra.mxu0 %v5111
    %5151 = vmatprep.subr.bf16.mxu0 0
    %5152 = vmatpush1.bf16.msra.mxu0 %v5112
    %5153 = vmatprep.subr.bf16.mxu0 0
    %5154 = vmatpush1.bf16.msra.mxu0 %v5113
    %5155 = vmatprep.subr.bf16.mxu0 0
    %5156 = vmatpush1.bf16.msra.mxu0 %v5114
    %5157 = vmatprep.subr.bf16.mxu0 0
    %5158 = vmatpush1.bf16.msra.mxu0 %v5115
    %5159 = vmatprep.subr.bf16.mxu0 0
    %5160 = vmatpush1.bf16.msra.mxu0 %v5116
    %5161 = vmatprep.subr.bf16.mxu0 0
    %5162 = vmatpush1.bf16.msra.mxu0 %v5117
    %5163 = vmatprep.subr.bf16.mxu0 0
    %5164 = vmatpush1.bf16.msra.mxu0 %v5118
    %5165 = vmatprep.subr.bf16.mxu0 0
    %5166 = vmatpush1.bf16.msra.mxu0 %v5119
    %5167 = vmatprep.subr.bf16.mxu0 0
    %5168 = vmatpush1.bf16.msra.mxu0 %v5120
    %5169 = vmatprep.mubr.bf16.mxu0 %v5033
    %5170 = vmatmul.mubr.bf16.gmra.mrb[0].mxu0 %v5032
    %v5171 = vpop.f32.mrb[0].mxu0
    %v5172 = vadd.f32 %v5039, %v5171
    %v5173 = vpop.f32.mrb[0].mxu0
    %v5174 = vpop.f32.mrb[0].mxu0
    %v5175 = vpop.f32.mrb[0].mxu0
    %5176 = vdwg.mxu0
    %vm5177 = vcmp.ge.f32.partialorder %v5172, 0.0
    %v5178 = vmul.f32 %v5172, 0.25
    %v5179 = vsel %vm5177, %v5172, %v5178
    %v5180 = vld [vmem:[#allocation22] sm:$0xf]
    %v5181 = vld [vmem:[#allocation22 + $0x4] sm:$0xf]
    %v5182 = vld [vmem:[#allocation22 + $0x8] sm:$0xf]
    %v5183 = vld [vmem:[#allocation22 + $0xc] sm:$0xf]
    %v5184 = vld [vmem:[#allocation22 + $0x10] sm:$0xf]
    %v5185 = vld [vmem:[#allocation22 + $0x14] sm:$0xf]
    %v5186 = vld [vmem:[#allocation22 + $0x18] sm:$0xf]
    %v5187 = vld [vmem:[#allocation22 + $0x1c] sm:$0xf]
    %v5188 = vpack.c.bf16 %v5179, %v5179
    %v5189 = vld [vmem:[#allocation23] sm:$0x1]
    %v5191 = vlaneseq
    %v5192 = vshrl.u32 %v5191, 7
    %v5193 = vsub.s32 0, %v5192
    %v5194 = vrot.slane %v5189, %v5193
    %v5204 = vunpack.c.l.b16 %v5180
    %v5205 = vunpack.c.l.b16 %v5181
    %v5206 = vunpack.c.l.b16 %v5182
    %v5207 = vunpack.c.l.b16 %v5183
    %v5208 = vunpack.c.l.b16 %v5184
    %v5209 = vunpack.c.l.b16 %v5185
    %v5210 = vunpack.c.l.b16 %v5186
    %v5211 = vunpack.c.l.b16 %v5187
    %v5212 = vpack.c.b16 %v5205, %v5204
    %v5213 = vpack.c.b16 %v5207, %v5206
    %v5214 = vpack.c.b16 %v5209, %v5208
    %v5215 = vpack.c.b16 %v5211, %v5210
    %v5221 = vsel %vm4442, %v5188, 0
    %5223 = vmatprep.subr.bf16.mxu0 0
    %5224 = vmatpush1.bf16.msra.mxu0 %v5212
    %5225 = vmatprep.subr.bf16.mxu0 0
    %5226 = vmatpush1.bf16.msra.mxu0 %v5213
    %5227 = vmatprep.subr.bf16.mxu0 0
    %5228 = vmatpush1.bf16.msra.mxu0 %v5214
    %5229 = vmatprep.subr.bf16.mxu0 0
    %5230 = vmatpush1.bf16.msra.mxu0 %v5215
    %5231 = vmatprep.subr.bf16.mxu0 0
    %5232 = vmatpush1.bf16.msra.mxu0 0
    %5233 = vmatprep.subr.bf16.mxu0 0
    %5234 = vmatpush1.bf16.msra.mxu0 0
    %5235 = vmatprep.subr.bf16.mxu0 0
    %5236 = vmatpush1.bf16.msra.mxu0 0
    %5237 = vmatprep.subr.bf16.mxu0 0
    %5238 = vmatpush1.bf16.msra.mxu0 0
    %5239 = vmatprep.subr.bf16.mxu0 0
    %5240 = vmatpush1.bf16.msra.mxu0 0
    %5241 = vmatprep.subr.bf16.mxu0 0
    %5242 = vmatpush1.bf16.msra.mxu0 0
    %5243 = vmatprep.subr.bf16.mxu0 0
    %5244 = vmatpush1.bf16.msra.mxu0 0
    %5245 = vmatprep.subr.bf16.mxu0 0
    %5246 = vmatpush1.bf16.msra.mxu0 0
    %5247 = vmatprep.subr.bf16.mxu0 0
    %5248 = vmatpush1.bf16.msra.mxu0 0
    %5249 = vmatprep.subr.bf16.mxu0 0
    %5250 = vmatpush1.bf16.msra.mxu0 0
    %5251 = vmatprep.subr.bf16.mxu0 0
    %5252 = vmatpush1.bf16.msra.mxu0 0
    %5253 = vmatprep.subr.bf16.mxu0 0
    %5254 = vmatpush1.bf16.msra.mxu0 0
    %5255 = vmatprep.mubr.bf16.mxu0 0
    %5256 = vmatmul.mubr.bf16.gmra.mrb[0].mxu0 %v5221
    %v5257 = vpop.f32.mrb[0].mxu0
    %v5258 = vadd.f32 %v5194, %v5257
    %v5259 = vpop.f32.mrb[0].mxu0
    %v5260 = vpop.f32.mrb[0].mxu0
    %v5261 = vpop.f32.mrb[0].mxu0
    %5262 = vdwg.mxu0
    %v5264 = vrot.slane %v5258, 1
    %v5265 = vrot.slane %v5258, 2
    %v5267 = vcombine.low %v4481, %v5258
    %v5268 = vcombine.low %v5264, %v5265
    %v5270 = vunpack.c.l.s4 1966171168
    %v5271 = vunpack.c.0.s8 %v5270
    %v5272 = vlaneseq
    %v5273 = vshrl.u32 %v5272, 7
    %v5274 = vsub.s32 %v5271, %v5273
    %v5275 = vrot.slane %v5267, %v5274
    %v5277 = vunpack.c.l.s4 1966171168
    %v5278 = vunpack.c.0.s8 %v5277
    %v5279 = vlaneseq
    %v5280 = vshrl.u32 %v5279, 7
    %v5281 = vsub.s32 %v5278, %v5280
    %v5282 = vrot.slane %v5268, %v5281
    %v5283 = vcombine.low %v5275, %v5282
    %v5285 = vunpack.c.l.s4 1966171168
    %v5286 = vunpack.c.0.s8 %v5285
    %v5287 = vlaneseq
    %v5288 = vshrl.u32 %v5287, 7
    %v5289 = vsub.s32 %v5286, %v5288
    %v5290 = vrot.slane %v5283, %v5289
    %5292 = vst.msk [vmem:[#allocation26] sm:$0xf] %vm902, %v5290
    // Predicated region
    $region126: #{tpu_custom_call.1} parent=1 // pred_check
      _
    $region127: #{tpu_custom_call.1} parent=1 // pred_check_branch
      %5294 = sbr.rel (0) target = $region129
    $region128: #{tpu_custom_call.1} parent=1 // pred_region
      %s5296 = ssub.s32 192, 192
      %5297 = vsyncadd [#allocation4], %s5296
      %s5299 = sshll.u32 [#allocation25], 4
      %s5300 = int_to_ptr.vmem [resolvable:$true] %s5299
      %5302 = dma.vmem_to_hbm [thread:$0]  %s5300, 192, %s17, [#allocation4]
    $region129: #{tpu_custom_call.1} parent=1 // pred_fallthru
      _
    // Predicated region
    $region130: #{tpu_custom_call.1} parent=1 // pred_check
      _
    $region131: #{tpu_custom_call.1} parent=1 // pred_check_branch
      %5304 = sbr.rel (0) target = $region133
    $region132: #{tpu_custom_call.1} parent=1 // pred_region
      %s5306 = ssub.s32 64, 64
      %5307 = vsyncadd [#allocation27], %s5306
      %s5309 = sshll.u32 [#allocation26], 4
      %s5310 = int_to_ptr.vmem [resolvable:$true] %s5309
      %5312 = dma.vmem_to_hbm [thread:$0]  %s5310, 64, %s18, [#allocation27]
    $region133: #{tpu_custom_call.1} parent=1 // pred_fallthru
      _
    // Predicated region
    $region134: #{tpu_custom_call.1} parent=1 // pred_check
      _
    $region135: #{tpu_custom_call.1} parent=1 // pred_check_branch
      %5314 = sbr.rel (0) target = $region137
    $region136: #{tpu_custom_call.1} parent=1 // pred_region
      %5315 = dma.done [#allocation4], 192
    $region137: #{tpu_custom_call.1} parent=1 // pred_fallthru
      _
    // Predicated region
    $region138: #{tpu_custom_call.1} parent=1 // pred_check
      _
    $region139: #{tpu_custom_call.1} parent=1 // pred_check_branch
      %5317 = sbr.rel (0) target = $region141
    $region140: #{tpu_custom_call.1} parent=1 // pred_region
      %5318 = dma.done [#allocation27], 64
    $region141: #{tpu_custom_call.1} parent=1 // pred_fallthru
      _
    %5319 = vsyncpa [#allocation3], 1
    %5320 = vsyncpa [#allocation6], 1
    %5321 = vsyncpa [#allocation9], 1
    %5322 = vsyncpa [#allocation12], 1
    %5323 = vsyncpa [#allocation15], 1
    %5324 = vsyncpa [#allocation18], 1
    %5325 = vsyncpa [#allocation21], 1
    %5326 = vsyncpa [#allocation24], 1
    %5327 = vsyncpa [#allocation4], 1
    %5328 = vsyncpa [#allocation27], 1

</llo_original>
